<compile_context>
chip_gen: v5e
topology: v5e:2x2
jax: 0.10.0
libtpu: 0.0.40
codegen_flags: <defaults>
</compile_context>

<pallas_src>
import functools

import jax
import jax.numpy as jnp
from jax.experimental import pallas as pl
from jax.experimental.pallas import tpu as pltpu

LANE = 128


# --------------------------------------------------------------------------- #
# Kernels
# --------------------------------------------------------------------------- #
def _conv2d_kernel_deep(x_ref, w_ref, b_ref, o_ref, xk_ref, *, K, H, W, nb, Cin):
    """Deep path (Cin % 128 == 0): width-im2col slab + K deep MXU matmuls.

    x_ref : (nb, Hp, Wp, Cin)   bf16  (same block across the Cout grid axis)
    w_ref : (K, K*Cin, tc)      bf16  (pre-scaled by w_lrmul)
    b_ref : (1, tc)             f32   (pre-scaled by b_lrmul)
    o_ref : (nb*H*W, tc)        dense rows x lanes output slab
    xk_ref: (nb, Hp, W, K*Cin)  bf16  VMEM scratch, persists across Cout tiles
    """
    # Build the width-im2col slab once per batch tile; reuse for every Cout tile.
    @pl.when(pl.program_id(1) == 0)
    def _build_slab():
        for kw in range(K):  # Cin % 128 == 0 -> lane-aligned plain copies
            xk_ref[:, :, :, kw * Cin:(kw + 1) * Cin] = x_ref[:, :, kw:kw + W, :]

    rows = nb * H * W
    acc = None
    for kh in range(K):
        # Static H-slice of the slab + contiguous reshape (free when W % 8 == 0).
        lhs = xk_ref[:, kh:kh + H].reshape(rows, K * Cin)       # bf16
        part = jnp.dot(lhs, w_ref[kh], preferred_element_type=jnp.float32)
        acc = part if acc is None else acc + part
    o_ref[...] = (acc + b_ref[...]).astype(o_ref.dtype)


def _conv2d_kernel_taps(x_ref, w_ref, b_ref, o_ref, *, K, H, W, nb, Cin):
    """Small-Cin path: K*K per-tap matmuls with Cin-only contraction.

    x_ref : (nb, Hp, Wp, Cin) bf16
    w_ref : (K*K, Cin, tc)    bf16
    b_ref : (1, tc)           f32
    o_ref : (nb*H*W, tc)
    """
    x = x_ref[...]
    rows = nb * H * W
    acc = None
    for kh in range(K):
        for kw in range(K):
            lhs = x[:, kh:kh + H, kw:kw + W, :].reshape(rows, Cin)
            part = jnp.dot(lhs, w_ref[kh * K + kw],
                           preferred_element_type=jnp.float32)
            acc = part if acc is None else acc + part
    o_ref[...] = (acc + b_ref[...]).astype(o_ref.dtype)


# --------------------------------------------------------------------------- #
# Wrapper
# --------------------------------------------------------------------------- #
def _round_up(x, m):
    return -(-x // m) * m


def _vmem_limit_bytes():
    cap = None
    try:
        info = pltpu.get_tpu_info()
        cap = getattr(info, "vmem_capacity_bytes", None)
    except Exception:
        cap = None
    if not cap:
        cap = 64 * 1024 * 1024                    # conservative: v7x physical VMEM
    # Leave headroom for double-buffering / compiler scratch; cap at 100 MiB.
    return int(min(cap * 5 // 8, 100 * 1024 * 1024))


def _preferred_cout_tile():
    try:
        kind = jax.devices()[0].device_kind.lower()
    except Exception:
        kind = ""
    # v5e / v4: 128x128 MXU tiles -> 128-wide Cout tiles.  v6e/v7x: 256.
    if "v5 lite" in kind or "v5e" in kind or "v5lite" in kind or "v4" in kind:
        return 128
    return 256


def conv2d_forward(x_nchw, weight_oihw, bias=None, *, w_lrmul=1.0, b_lrmul=1.0):
    """Equivalent of F.conv2d(x, weight*w_lrmul, bias*b_lrmul, padding=K//2)."""
    N, Cin, H, W = x_nchw.shape
    Cout, Cin_w, K, K2 = weight_oihw.shape
    assert Cin == Cin_w and K == K2
    # F.conv2d with padding=K//2 only preserves H x W for odd K.
    assert K % 2 == 1, "only odd kernel sizes keep the PyTorch output shape"
    pad = K // 2
    Hp, Wp = H + 2 * pad, W + 2 * pad
    out_dtype = x_nchw.dtype
    out_isz = jnp.dtype(out_dtype).itemsize

    # --- layout glue (outside the kernel) ------------------------------------
    # NCHW -> NHWC, cast to bf16 *before* padding so the padded HBM copy and
    # every HBM->VMEM DMA is half-width.
    x = jnp.transpose(x_nchw, (0, 2, 3, 1)).astype(jnp.bfloat16)
    x = jnp.pad(x, ((0, 0), (pad, pad), (pad, pad), (0, 0)))

    # Pad Cout to a lane-aligned multiple of 128 (unmasked output stores).  The
    # padding lives only in the tiny weight/bias; the output is sliced back.
    Cout_p = _round_up(Cout, LANE)
    w_t = jnp.transpose(weight_oihw, (2, 3, 1, 0)) * w_lrmul       # (K,K,Cin,Cout)
    w_t = jnp.pad(w_t, ((0, 0), (0, 0), (0, 0), (0, Cout_p - Cout)))
    if bias is None:
        b = jnp.zeros((1, Cout_p), jnp.float32)
    else:
        b = jnp.pad((bias * b_lrmul).astype(jnp.float32), (0, Cout_p - Cout))
        b = b.reshape(1, Cout_p)

    # Cout tile: lane-aligned; per-generation preference.
    tc_pref = _preferred_cout_tile()
    tc = tc_pref if Cout_p % tc_pref == 0 else 128

    # Deep path folds kw into the contraction only when the concat lane offsets
    # (kw*Cin) are 128-aligned; otherwise K*K per-tap Cin contractions.
    deep = (Cin % LANE == 0)
    if deep:
        w = w_t.reshape(K, K * Cin, Cout_p).astype(jnp.bfloat16)
    else:
        w = w_t.reshape(K * K, Cin, Cout_p).astype(jnp.bfloat16)

    # --- batch packing under a per-generation VMEM budget ---------------------
    vmem_limit = _vmem_limit_bytes()
    rows_per_img = H * W

    def step_bytes(nb_):
        xb = nb_ * Hp * Wp * Cin * 2 * 2                  # bf16 x, double-buffered
        xkb = nb_ * Hp * W * K * Cin * 2 if deep else 0   # scratch slab
        ob = nb_ * rows_per_img * tc * out_isz * 2        # out, double-buffered
        wb = K * K * Cin * tc * 2 * 2                     # bf16 weights
        accb = nb_ * rows_per_img * tc * 4                # f32 accumulator
        return xb + xkb + ob + wb + accb

    target_rows = 2048                                    # deep MXU M dimension
    nb = max(1, min(N, target_rows // max(1, rows_per_img)))
    while N % nb != 0:
        nb -= 1
    while nb > 1 and step_bytes(nb) > vmem_limit:
        nb -= 1
        while N % nb != 0:
            nb -= 1
    if (nb * rows_per_img) % 8 != 0:                      # keep row blocks sublane-aligned
        nb = N

    rows_blk = nb * rows_per_img
    grid = (N // nb, Cout_p // tc)

    if deep:
        kernel = functools.partial(_conv2d_kernel_deep, K=K, H=H, W=W, nb=nb, Cin=Cin)
        w_spec = pl.BlockSpec((K, K * Cin, tc), lambda bi, ci: (0, 0, ci))
        scratch = [pltpu.VMEM((nb, Hp, W, K * Cin), jnp.bfloat16)]
        semantics = ("parallel", "arbitrary")             # slab carried across ci
    else:
        kernel = functools.partial(_conv2d_kernel_taps, K=K, H=H, W=W, nb=nb, Cin=Cin)
        w_spec = pl.BlockSpec((K * K, Cin, tc), lambda bi, ci: (0, 0, ci))
        scratch = []
        semantics = ("parallel", "parallel")

    cost = pl.CostEstimate(
        flops=2 * N * rows_per_img * Cout_p * K * K * Cin,
        transcendentals=0,
        bytes_accessed=(x.size * 2 + w.size * 2 + b.size * 4
                        + N * rows_per_img * Cout_p * out_isz),
    )

    out2d = pl.pallas_call(
        kernel,
        out_shape=jax.ShapeDtypeStruct((N * rows_per_img, Cout_p), out_dtype),
        grid_spec=pltpu.PrefetchScalarGridSpec(
            num_scalar_prefetch=0,
            grid=grid,
            in_specs=[
                pl.BlockSpec((nb, Hp, Wp, Cin), lambda bi, ci: (bi, 0, 0, 0)),
                w_spec,
                pl.BlockSpec((1, tc), lambda bi, ci: (0, ci)),
            ],
            out_specs=pl.BlockSpec((rows_blk, tc), lambda bi, ci: (bi, ci)),
            scratch_shapes=scratch,
        ),
        compiler_params=pltpu.CompilerParams(
            dimension_semantics=semantics,
            vmem_limit_bytes=vmem_limit,
        ),
        cost_estimate=cost,
    )(x, w, b)

    out_nhwc = out2d[:, :Cout].reshape(N, H, W, Cout)
    return jnp.transpose(out_nhwc, (0, 3, 1, 2))          # back to NCHW


# --------------------------------------------------------------------------- #
# Self-test
# --------------------------------------------------------------------------- #
def _reference(x, weight, bias, w_lrmul, b_lrmul, K):
    """bf16-rounded-operand reference of F.conv2d(..., padding=K//2)."""
    pad = K // 2
    x_eff = x.astype(jnp.bfloat16).astype(jnp.float32)
    w_eff = (weight * w_lrmul).astype(jnp.bfloat16).astype(jnp.float32)
    out = jax.lax.conv_general_dilated(
        x_eff, w_eff, window_strides=(1, 1),
        padding=((pad, pad), (pad, pad)),
        dimension_numbers=("NCHW", "OIHW", "NCHW"),
        precision=jax.lax.Precision.HIGHEST,
    )
    if bias is not None:
        out = out + (bias * b_lrmul)[None, :, None, None]
    return out


def _run_case(key, N, Cin, H, W, Cout, K, use_wscale):
    gain = 2.0 ** 0.5
    lrmul = 1.0
    he_std = gain * (Cin * K ** 2) ** (-0.5)
    if use_wscale:
        init_std = 1.0 / lrmul
        w_lrmul = he_std * lrmul
    else:
        init_std = he_std / lrmul
        w_lrmul = lrmul
    b_lrmul = lrmul

    kx, kw, kb = jax.random.split(key, 3)
    x = jax.random.normal(kx, (N, Cin, H, W), dtype=jnp.float32)
    weight = jax.random.normal(kw, (Cout, Cin, K, K), dtype=jnp.float32) * init_std
    bias = jax.random.normal(kb, (Cout,), dtype=jnp.float32) * 0.1

    out = conv2d_forward(x, weight, bias, w_lrmul=w_lrmul, b_lrmul=b_lrmul)
    out = jax.block_until_ready(out)
    assert out.shape == (N, Cout, H, W)

    ref = _reference(x, weight, bias, w_lrmul, b_lrmul, K)
    assert jnp.allclose(out, ref, atol=2e-3, rtol=2e-3)


if __name__ == "__main__":
    key = jax.random.PRNGKey(0)
    k1, k2 = jax.random.split(key)

    # Small-Cin layer (taps path): batch=2, channels=4, spatial=16, K=3.
    _run_case(k1, N=2, Cin=4, H=16, W=16, Cout=8, K=3, use_wscale=False)

    # Aligned-Cin layer (deep path, im2col slab cached across Cout tiles).
    _run_case(k2, N=2, Cin=128, H=8, W=8, Cout=512, K=3, use_wscale=True)

    print("KERNEL_OK")
</pallas_src>

<mosaic_0001>
module attributes {stable_mosaic.version = 11 : i64} {
  func.func @_conv2d_kernel_taps(%arg0: i32, %arg1: i32, %arg2: memref<2x18x18x4xbf16, #tpu.memory_space<vmem>>, %arg3: memref<9x4x128xbf16, #tpu.memory_space<vmem>>, %arg4: memref<1x128xf32, #tpu.memory_space<vmem>>, %arg5: memref<512x128xf32, #tpu.memory_space<vmem>>) attributes {dimension_semantics = [#tpu.dimension_semantics<parallel>, #tpu.dimension_semantics<parallel>], iteration_bounds = array<i64: 1, 1>, scalar_prefetch = 0 : i64, scratch_operands = 0 : i64, tpu.core_type = #tpu.core_type<tc>, window_params = [{transform_indices = @transform_0, window_bounds = array<i64: 2, 18, 18, 4>}, {transform_indices = @transform_1, window_bounds = array<i64: 9, 4, 128>}, {transform_indices = @transform_2, window_bounds = array<i64: 1, 128>}, {transform_indices = @transform_3, window_bounds = array<i64: 512, 128>}]} {
    %c0 = arith.constant 0 : index
    %c0_0 = arith.constant 0 : index
    %c0_1 = arith.constant 0 : index
    %c0_2 = arith.constant 0 : index
    %0 = vector.load %arg2[%c0, %c0_0, %c0_1, %c0_2] : memref<2x18x18x4xbf16, #tpu.memory_space<vmem>>, vector<2x18x18x4xbf16>
    %1 = vector.extract_strided_slice %0 {offsets = [0, 0, 0, 0], sizes = [2, 16, 16, 4], strides = [1, 1, 1, 1]} : vector<2x18x18x4xbf16> to vector<2x16x16x4xbf16>
    %2 = vector.shape_cast %1 : vector<2x16x16x4xbf16> to vector<512x4xbf16>
    %c0_3 = arith.constant 0 : index
    %c0_4 = arith.constant 0 : index
    %c0_5 = arith.constant 0 : index
    %3 = vector.load %arg3[%c0_3, %c0_4, %c0_5] : memref<9x4x128xbf16, #tpu.memory_space<vmem>>, vector<1x4x128xbf16>
    %4 = vector.shape_cast %3 : vector<1x4x128xbf16> to vector<4x128xbf16>
    %cst = arith.constant dense<0.000000e+00> : vector<512x128xf32>
    %5 = tpu.matmul %2, %4, %cst {dimension_numbers = #tpu.dot_dimension_numbers<[1], [0], [0], [1], [0, 0, 1, 1], [], []>} : vector<512x4xbf16>, vector<4x128xbf16>, vector<512x128xf32> -> vector<512x128xf32>
    %6 = vector.extract_strided_slice %0 {offsets = [0, 0, 1, 0], sizes = [2, 16, 16, 4], strides = [1, 1, 1, 1]} : vector<2x18x18x4xbf16> to vector<2x16x16x4xbf16>
    %7 = vector.shape_cast %6 : vector<2x16x16x4xbf16> to vector<512x4xbf16>
    %c1 = arith.constant 1 : index
    %c0_6 = arith.constant 0 : index
    %c0_7 = arith.constant 0 : index
    %8 = vector.load %arg3[%c1, %c0_6, %c0_7] : memref<9x4x128xbf16, #tpu.memory_space<vmem>>, vector<1x4x128xbf16>
    %9 = vector.shape_cast %8 : vector<1x4x128xbf16> to vector<4x128xbf16>
    %cst_8 = arith.constant dense<0.000000e+00> : vector<512x128xf32>
    %10 = tpu.matmul %7, %9, %cst_8 {dimension_numbers = #tpu.dot_dimension_numbers<[1], [0], [0], [1], [0, 0, 1, 1], [], []>} : vector<512x4xbf16>, vector<4x128xbf16>, vector<512x128xf32> -> vector<512x128xf32>
    %11 = arith.addf %5, %10 : vector<512x128xf32>
    %12 = vector.extract_strided_slice %0 {offsets = [0, 0, 2, 0], sizes = [2, 16, 16, 4], strides = [1, 1, 1, 1]} : vector<2x18x18x4xbf16> to vector<2x16x16x4xbf16>
    %13 = vector.shape_cast %12 : vector<2x16x16x4xbf16> to vector<512x4xbf16>
    %c2 = arith.constant 2 : index
    %c0_9 = arith.constant 0 : index
    %c0_10 = arith.constant 0 : index
    %14 = vector.load %arg3[%c2, %c0_9, %c0_10] : memref<9x4x128xbf16, #tpu.memory_space<vmem>>, vector<1x4x128xbf16>
    %15 = vector.shape_cast %14 : vector<1x4x128xbf16> to vector<4x128xbf16>
    %cst_11 = arith.constant dense<0.000000e+00> : vector<512x128xf32>
    %16 = tpu.matmul %13, %15, %cst_11 {dimension_numbers = #tpu.dot_dimension_numbers<[1], [0], [0], [1], [0, 0, 1, 1], [], []>} : vector<512x4xbf16>, vector<4x128xbf16>, vector<512x128xf32> -> vector<512x128xf32>
    %17 = arith.addf %11, %16 : vector<512x128xf32>
    %18 = vector.extract_strided_slice %0 {offsets = [0, 1, 0, 0], sizes = [2, 16, 16, 4], strides = [1, 1, 1, 1]} : vector<2x18x18x4xbf16> to vector<2x16x16x4xbf16>
    %19 = vector.shape_cast %18 : vector<2x16x16x4xbf16> to vector<512x4xbf16>
    %c3 = arith.constant 3 : index
    %c0_12 = arith.constant 0 : index
    %c0_13 = arith.constant 0 : index
    %20 = vector.load %arg3[%c3, %c0_12, %c0_13] : memref<9x4x128xbf16, #tpu.memory_space<vmem>>, vector<1x4x128xbf16>
    %21 = vector.shape_cast %20 : vector<1x4x128xbf16> to vector<4x128xbf16>
    %cst_14 = arith.constant dense<0.000000e+00> : vector<512x128xf32>
    %22 = tpu.matmul %19, %21, %cst_14 {dimension_numbers = #tpu.dot_dimension_numbers<[1], [0], [0], [1], [0, 0, 1, 1], [], []>} : vector<512x4xbf16>, vector<4x128xbf16>, vector<512x128xf32> -> vector<512x128xf32>
    %23 = arith.addf %17, %22 : vector<512x128xf32>
    %24 = vector.extract_strided_slice %0 {offsets = [0, 1, 1, 0], sizes = [2, 16, 16, 4], strides = [1, 1, 1, 1]} : vector<2x18x18x4xbf16> to vector<2x16x16x4xbf16>
    %25 = vector.shape_cast %24 : vector<2x16x16x4xbf16> to vector<512x4xbf16>
    %c4 = arith.constant 4 : index
    %c0_15 = arith.constant 0 : index
    %c0_16 = arith.constant 0 : index
    %26 = vector.load %arg3[%c4, %c0_15, %c0_16] : memref<9x4x128xbf16, #tpu.memory_space<vmem>>, vector<1x4x128xbf16>
    %27 = vector.shape_cast %26 : vector<1x4x128xbf16> to vector<4x128xbf16>
    %cst_17 = arith.constant dense<0.000000e+00> : vector<512x128xf32>
    %28 = tpu.matmul %25, %27, %cst_17 {dimension_numbers = #tpu.dot_dimension_numbers<[1], [0], [0], [1], [0, 0, 1, 1], [], []>} : vector<512x4xbf16>, vector<4x128xbf16>, vector<512x128xf32> -> vector<512x128xf32>
    %29 = arith.addf %23, %28 : vector<512x128xf32>
    %30 = vector.extract_strided_slice %0 {offsets = [0, 1, 2, 0], sizes = [2, 16, 16, 4], strides = [1, 1, 1, 1]} : vector<2x18x18x4xbf16> to vector<2x16x16x4xbf16>
    %31 = vector.shape_cast %30 : vector<2x16x16x4xbf16> to vector<512x4xbf16>
    %c5 = arith.constant 5 : index
    %c0_18 = arith.constant 0 : index
    %c0_19 = arith.constant 0 : index
    %32 = vector.load %arg3[%c5, %c0_18, %c0_19] : memref<9x4x128xbf16, #tpu.memory_space<vmem>>, vector<1x4x128xbf16>
    %33 = vector.shape_cast %32 : vector<1x4x128xbf16> to vector<4x128xbf16>
    %cst_20 = arith.constant dense<0.000000e+00> : vector<512x128xf32>
    %34 = tpu.matmul %31, %33, %cst_20 {dimension_numbers = #tpu.dot_dimension_numbers<[1], [0], [0], [1], [0, 0, 1, 1], [], []>} : vector<512x4xbf16>, vector<4x128xbf16>, vector<512x128xf32> -> vector<512x128xf32>
    %35 = arith.addf %29, %34 : vector<512x128xf32>
    %36 = vector.extract_strided_slice %0 {offsets = [0, 2, 0, 0], sizes = [2, 16, 16, 4], strides = [1, 1, 1, 1]} : vector<2x18x18x4xbf16> to vector<2x16x16x4xbf16>
    %37 = vector.shape_cast %36 : vector<2x16x16x4xbf16> to vector<512x4xbf16>
    %c6 = arith.constant 6 : index
    %c0_21 = arith.constant 0 : index
    %c0_22 = arith.constant 0 : index
    %38 = vector.load %arg3[%c6, %c0_21, %c0_22] : memref<9x4x128xbf16, #tpu.memory_space<vmem>>, vector<1x4x128xbf16>
    %39 = vector.shape_cast %38 : vector<1x4x128xbf16> to vector<4x128xbf16>
    %cst_23 = arith.constant dense<0.000000e+00> : vector<512x128xf32>
    %40 = tpu.matmul %37, %39, %cst_23 {dimension_numbers = #tpu.dot_dimension_numbers<[1], [0], [0], [1], [0, 0, 1, 1], [], []>} : vector<512x4xbf16>, vector<4x128xbf16>, vector<512x128xf32> -> vector<512x128xf32>
    %41 = arith.addf %35, %40 : vector<512x128xf32>
    %42 = vector.extract_strided_slice %0 {offsets = [0, 2, 1, 0], sizes = [2, 16, 16, 4], strides = [1, 1, 1, 1]} : vector<2x18x18x4xbf16> to vector<2x16x16x4xbf16>
    %43 = vector.shape_cast %42 : vector<2x16x16x4xbf16> to vector<512x4xbf16>
    %c7 = arith.constant 7 : index
    %c0_24 = arith.constant 0 : index
    %c0_25 = arith.constant 0 : index
    %44 = vector.load %arg3[%c7, %c0_24, %c0_25] : memref<9x4x128xbf16, #tpu.memory_space<vmem>>, vector<1x4x128xbf16>
    %45 = vector.shape_cast %44 : vector<1x4x128xbf16> to vector<4x128xbf16>
    %cst_26 = arith.constant dense<0.000000e+00> : vector<512x128xf32>
    %46 = tpu.matmul %43, %45, %cst_26 {dimension_numbers = #tpu.dot_dimension_numbers<[1], [0], [0], [1], [0, 0, 1, 1], [], []>} : vector<512x4xbf16>, vector<4x128xbf16>, vector<512x128xf32> -> vector<512x128xf32>
    %47 = arith.addf %41, %46 : vector<512x128xf32>
    %48 = vector.extract_strided_slice %0 {offsets = [0, 2, 2, 0], sizes = [2, 16, 16, 4], strides = [1, 1, 1, 1]} : vector<2x18x18x4xbf16> to vector<2x16x16x4xbf16>
    %49 = vector.shape_cast %48 : vector<2x16x16x4xbf16> to vector<512x4xbf16>
    %c8 = arith.constant 8 : index
    %c0_27 = arith.constant 0 : index
    %c0_28 = arith.constant 0 : index
    %50 = vector.load %arg3[%c8, %c0_27, %c0_28] : memref<9x4x128xbf16, #tpu.memory_space<vmem>>, vector<1x4x128xbf16>
    %51 = vector.shape_cast %50 : vector<1x4x128xbf16> to vector<4x128xbf16>
    %cst_29 = arith.constant dense<0.000000e+00> : vector<512x128xf32>
    %52 = tpu.matmul %49, %51, %cst_29 {dimension_numbers = #tpu.dot_dimension_numbers<[1], [0], [0], [1], [0, 0, 1, 1], [], []>} : vector<512x4xbf16>, vector<4x128xbf16>, vector<512x128xf32> -> vector<512x128xf32>
    %53 = arith.addf %47, %52 : vector<512x128xf32>
    %c0_30 = arith.constant 0 : index
    %c0_31 = arith.constant 0 : index
    %54 = vector.load %arg4[%c0_30, %c0_31] : memref<1x128xf32, #tpu.memory_space<vmem>>, vector<1x128xf32>
    %55 = vector.broadcast %54 : vector<1x128xf32> to vector<512x128xf32>
    %56 = arith.addf %53, %55 : vector<512x128xf32>
    %c0_32 = arith.constant 0 : index
    %c0_33 = arith.constant 0 : index
    %57 = vector.load %arg5[%c0_32, %c0_33] : memref<512x128xf32, #tpu.memory_space<vmem>>, vector<512x128xf32>
    tpu.vector_store %arg5[%c0_32, %c0_33], %56 {strides = array<i32>} : memref<512x128xf32, #tpu.memory_space<vmem>>, vector<512x128xf32>,
    return
  }
  func.func @transform_0(%arg0: i32, %arg1: i32) -> (i32, i32, i32, i32) {
    %c0_i32 = arith.constant 0 : i32
    %c0_i32_0 = arith.constant 0 : i32
    %c0_i32_1 = arith.constant 0 : i32
    %c0_i32_2 = arith.constant 0 : i32
    return %arg0, %c0_i32, %c0_i32_0, %c0_i32_1 : i32, i32, i32, i32
  }
  func.func @transform_1(%arg0: i32, %arg1: i32) -> (i32, i32, i32) {
    %c0_i32 = arith.constant 0 : i32
    %c0_i32_0 = arith.constant 0 : i32
    %c0_i32_1 = arith.constant 0 : i32
    return %c0_i32, %c0_i32_0, %arg1 : i32, i32, i32
  }
  func.func @transform_2(%arg0: i32, %arg1: i32) -> (i32, i32) {
    %c0_i32 = arith.constant 0 : i32
    %c0_i32_0 = arith.constant 0 : i32
    return %c0_i32, %arg1 : i32, i32
  }
  func.func @transform_3(%arg0: i32, %arg1: i32) -> (i32, i32) {
    %c0_i32 = arith.constant 0 : i32
    return %arg0, %arg1 : i32, i32
  }
}

</mosaic_0001>

<llo_original>
// kernel: tpu_custom_call.1
$region0: #{tpu_custom_call.1}
  #allocation0 [shape = 'u32[]', space=smem, size = 0x4, offset = 0x4, fixed_abs, tag = 'smem constant byte address 0x4 - core index']
  #allocation1 [shape = 'u32[72,128]{1,0:T(1,128)}', space=vmem, size = 0x9000, scoped, tag = 'internal scratch']
  %s0 = inlined_call_operand.vmem [shape: bf16[2,18,18,4], index: 0, kind: input, shape index: {}]
  %s1 = inlined_call_operand.vmem [shape: bf16[9,4,128], index: 1, kind: input, shape index: {}]
  %s2 = inlined_call_operand.vmem [shape: f32[1,128], index: 2, kind: input, shape index: {}]
  %s3 = inlined_call_operand.hbm [shape: f32[512,128], index: 3, kind: output, shape index: {}]
  %s4 = sld [smem:[#allocation0]]
  $region22: #{tpu_custom_call.1} parent=0
    _
  %s6 = ssub.s32 1, %s4
  %s7 = scalar_select 0, %s6, %s4
  $region1: #{tpu_custom_call.1} parent=0
    #allocation2 [shape = 'u8[262144]{0}', space=vmem, size = 0x40000, scoped, tag = 'output window, operand 0, single buffered']
    #allocation3 [shape = 's32[1]{0}', space=sflag, size = 0x4, scoped, tag = 'scoped memory for tpu_custom_call.1']
    %8 = vsyncpa [#allocation3], 0
    // Predicated region
    $region2: #{tpu_custom_call.1} parent=1 // pred_check
      _
    $region3: #{tpu_custom_call.1} parent=1 // pred_check_branch
      %10 = sbr.rel (0) target = $region5
    $region4: #{tpu_custom_call.1} parent=1 // pred_region
      _
    $region5: #{tpu_custom_call.1} parent=1 // pred_fallthru
      _
    // Predicated region
    $region6: #{tpu_custom_call.1} parent=1 // pred_check
      _
    $region7: #{tpu_custom_call.1} parent=1 // pred_check_branch
      %12 = sbr.rel (0) target = $region9
    $region8: #{tpu_custom_call.1} parent=1 // pred_region
      _
    $region9: #{tpu_custom_call.1} parent=1 // pred_fallthru
      _
    // Predicated region
    $region10: #{tpu_custom_call.1} parent=1 // pred_check
      _
    $region11: #{tpu_custom_call.1} parent=1 // pred_check_branch
      %14 = sbr.rel (0) target = $region13
    $region12: #{tpu_custom_call.1} parent=1 // pred_region
      _
    $region13: #{tpu_custom_call.1} parent=1 // pred_fallthru
      _
    %v16 = vld [vmem:[%s0] sm:$0xf]
    %v17 = vld [vmem:[%s0 + $0x4] sm:$0xf]
    %v18 = vld [vmem:[%s0 + $0x8] sm:$0x1]
    %v19 = vld [vmem:[%s0 + $0xc] sm:$0xf]
    %v20 = vld [vmem:[%s0 + $0x10] sm:$0xf]
    %v21 = vld [vmem:[%s0 + $0x14] sm:$0x1]
    %v22 = vld [vmem:[%s0 + $0x18] sm:$0xf]
    %v23 = vld [vmem:[%s0 + $0x1c] sm:$0xf]
    %v24 = vld [vmem:[%s0 + $0x20] sm:$0x1]
    %v25 = vld [vmem:[%s0 + $0x24] sm:$0xf]
    %v26 = vld [vmem:[%s0 + $0x28] sm:$0xf]
    %v27 = vld [vmem:[%s0 + $0x2c] sm:$0x1]
    %v28 = vld [vmem:[%s0 + $0x30] sm:$0xf]
    %v29 = vld [vmem:[%s0 + $0x34] sm:$0xf]
    %v30 = vld [vmem:[%s0 + $0x38] sm:$0x1]
    %v31 = vld [vmem:[%s0 + $0x3c] sm:$0xf]
    %v32 = vld [vmem:[%s0 + $0x40] sm:$0xf]
    %v33 = vld [vmem:[%s0 + $0x44] sm:$0x1]
    %v34 = vld [vmem:[%s0 + $0x48] sm:$0xf]
    %v35 = vld [vmem:[%s0 + $0x4c] sm:$0xf]
    %v36 = vld [vmem:[%s0 + $0x50] sm:$0x1]
    %v37 = vld [vmem:[%s0 + $0x54] sm:$0xf]
    %v38 = vld [vmem:[%s0 + $0x58] sm:$0xf]
    %v39 = vld [vmem:[%s0 + $0x5c] sm:$0x1]
    %v40 = vld [vmem:[%s0 + $0x60] sm:$0xf]
    %v41 = vld [vmem:[%s0 + $0x64] sm:$0xf]
    %v42 = vld [vmem:[%s0 + $0x68] sm:$0x1]
    %v43 = vld [vmem:[%s0 + $0x6c] sm:$0xf]
    %v44 = vld [vmem:[%s0 + $0x70] sm:$0xf]
    %v45 = vld [vmem:[%s0 + $0x74] sm:$0x1]
    %v46 = vld [vmem:[%s0 + $0x78] sm:$0xf]
    %v47 = vld [vmem:[%s0 + $0x7c] sm:$0xf]
    %v48 = vld [vmem:[%s0 + $0x80] sm:$0x1]
    %v49 = vld [vmem:[%s0 + $0x84] sm:$0xf]
    %v50 = vld [vmem:[%s0 + $0x88] sm:$0xf]
    %v51 = vld [vmem:[%s0 + $0x8c] sm:$0x1]
    %v52 = vld [vmem:[%s0 + $0x90] sm:$0xf]
    %v53 = vld [vmem:[%s0 + $0x94] sm:$0xf]
    %v54 = vld [vmem:[%s0 + $0x98] sm:$0x1]
    %v55 = vld [vmem:[%s0 + $0x9c] sm:$0xf]
    %v56 = vld [vmem:[%s0 + $0xa0] sm:$0xf]
    %v57 = vld [vmem:[%s0 + $0xa4] sm:$0x1]
    %v58 = vld [vmem:[%s0 + $0xa8] sm:$0xf]
    %v59 = vld [vmem:[%s0 + $0xac] sm:$0xf]
    %v60 = vld [vmem:[%s0 + $0xb0] sm:$0x1]
    %v61 = vld [vmem:[%s0 + $0xb4] sm:$0xf]
    %v62 = vld [vmem:[%s0 + $0xb8] sm:$0xf]
    %v63 = vld [vmem:[%s0 + $0xbc] sm:$0x1]
    %v64 = vld [vmem:[%s0 + $0xc0] sm:$0xf]
    %v65 = vld [vmem:[%s0 + $0xc4] sm:$0xf]
    %v66 = vld [vmem:[%s0 + $0xc8] sm:$0x1]
    %v67 = vld [vmem:[%s0 + $0xcc] sm:$0xf]
    %v68 = vld [vmem:[%s0 + $0xd0] sm:$0xf]
    %v69 = vld [vmem:[%s0 + $0xd4] sm:$0x1]
    %v70 = vld [vmem:[%s0 + $0xd8] sm:$0xf]
    %v71 = vld [vmem:[%s0 + $0xdc] sm:$0xf]
    %v72 = vld [vmem:[%s0 + $0xe0] sm:$0x1]
    %v73 = vld [vmem:[%s0 + $0xe4] sm:$0xf]
    %v74 = vld [vmem:[%s0 + $0xe8] sm:$0xf]
    %v75 = vld [vmem:[%s0 + $0xec] sm:$0x1]
    %v76 = vld [vmem:[%s0 + $0xf0] sm:$0xf]
    %v77 = vld [vmem:[%s0 + $0xf4] sm:$0xf]
    %v78 = vld [vmem:[%s0 + $0xf8] sm:$0x1]
    %v79 = vld [vmem:[%s0 + $0xfc] sm:$0xf]
    %v80 = vld [vmem:[%s0 + $0x100] sm:$0xf]
    %v81 = vld [vmem:[%s0 + $0x104] sm:$0x1]
    %v82 = vld [vmem:[%s0 + $0x108] sm:$0xf]
    %v83 = vld [vmem:[%s0 + $0x10c] sm:$0xf]
    %v84 = vld [vmem:[%s0 + $0x110] sm:$0x1]
    %v85 = vld [vmem:[%s0 + $0x114] sm:$0xf]
    %v86 = vld [vmem:[%s0 + $0x118] sm:$0xf]
    %v87 = vld [vmem:[%s0 + $0x11c] sm:$0x1]
    %v88 = vld [vmem:[%s0 + $0x120] sm:$0xf]
    %v89 = vld [vmem:[%s0 + $0x124] sm:$0xf]
    %v90 = vld [vmem:[%s0 + $0x128] sm:$0x1]
    %v91 = vld [vmem:[%s0 + $0x12c] sm:$0xf]
    %v92 = vld [vmem:[%s0 + $0x130] sm:$0xf]
    %v93 = vld [vmem:[%s0 + $0x134] sm:$0x1]
    %v94 = vld [vmem:[%s0 + $0x138] sm:$0xf]
    %v95 = vld [vmem:[%s0 + $0x13c] sm:$0xf]
    %v96 = vld [vmem:[%s0 + $0x140] sm:$0x1]
    %v97 = vld [vmem:[%s0 + $0x144] sm:$0xf]
    %v98 = vld [vmem:[%s0 + $0x148] sm:$0xf]
    %v99 = vld [vmem:[%s0 + $0x14c] sm:$0x1]
    %v100 = vld [vmem:[%s0 + $0x150] sm:$0xf]
    %v101 = vld [vmem:[%s0 + $0x154] sm:$0xf]
    %v102 = vld [vmem:[%s0 + $0x158] sm:$0x1]
    %v103 = vld [vmem:[%s0 + $0x15c] sm:$0xf]
    %v104 = vld [vmem:[%s0 + $0x160] sm:$0xf]
    %v105 = vld [vmem:[%s0 + $0x164] sm:$0x1]
    %v106 = vld [vmem:[%s0 + $0x168] sm:$0xf]
    %v107 = vld [vmem:[%s0 + $0x16c] sm:$0xf]
    %v108 = vld [vmem:[%s0 + $0x170] sm:$0x1]
    %v109 = vld [vmem:[%s0 + $0x174] sm:$0xf]
    %v110 = vld [vmem:[%s0 + $0x178] sm:$0xf]
    %v111 = vld [vmem:[%s0 + $0x17c] sm:$0x1]
    %v112 = vld [vmem:[%s0 + $0x180] sm:$0xf]
    %v113 = vld [vmem:[%s0 + $0x184] sm:$0xf]
    %v114 = vld [vmem:[%s0 + $0x188] sm:$0x1]
    %v115 = vld [vmem:[%s0 + $0x18c] sm:$0xf]
    %v116 = vld [vmem:[%s0 + $0x190] sm:$0xf]
    %v117 = vld [vmem:[%s0 + $0x194] sm:$0x1]
    %v118 = vld [vmem:[%s0 + $0x198] sm:$0xf]
    %v119 = vld [vmem:[%s0 + $0x19c] sm:$0xf]
    %v120 = vld [vmem:[%s0 + $0x1a0] sm:$0x1]
    %v121 = vld [vmem:[%s0 + $0x1a4] sm:$0xf]
    %v122 = vld [vmem:[%s0 + $0x1a8] sm:$0xf]
    %v123 = vld [vmem:[%s0 + $0x1ac] sm:$0x1]
    %v124 = vld [vmem:[%s1] sm:$0x3]
    %vm125 = vsmask.f32 3328
    %vm126 = vsmask.f32 7440
    %vm127 = vmor %vm125, %vm126
    %v129 = vshrl.u32 %v16, 16
    %v131 = vrot.slane %v129, 4
    %v132 = vshll.u32 %v16, 16
    %v134 = vrot.slane %v132, 5
    %v135 = vor.u32 %v131, %v134
    %v136 = vrot.slane %v135, 4
    %v138 = vshll.u32 %v17, 16
    %v140 = vrot.slane %v138, 5
    %v141 = vsel %vm127, %v136, %v140
    %v142 = vshrl.u32 %v17, 16
    %v144 = vrot.slane %v142, 4
    %v145 = vor.u32 %v144, %v140
    %v146 = vrot.slane %v145, 4
    %v148 = vshll.u32 %v18, 16
    %v150 = vrot.slane %v148, 5
    %v151 = vsel %vm127, %v146, %v150
    %v153 = vshrl.u32 %v19, 16
    %v155 = vrot.slane %v153, 4
    %v156 = vshll.u32 %v19, 16
    %v158 = vrot.slane %v156, 5
    %v159 = vor.u32 %v155, %v158
    %v160 = vrot.slane %v159, 4
    %v162 = vshll.u32 %v20, 16
    %v164 = vrot.slane %v162, 5
    %v165 = vsel %vm127, %v160, %v164
    %v166 = vshrl.u32 %v20, 16
    %v168 = vrot.slane %v166, 4
    %v169 = vor.u32 %v168, %v164
    %v170 = vrot.slane %v169, 4
    %v172 = vshll.u32 %v21, 16
    %v174 = vrot.slane %v172, 5
    %v175 = vsel %vm127, %v170, %v174
    %v177 = vshrl.u32 %v22, 16
    %v179 = vrot.slane %v177, 4
    %v180 = vshll.u32 %v22, 16
    %v182 = vrot.slane %v180, 5
    %v183 = vor.u32 %v179, %v182
    %v184 = vrot.slane %v183, 4
    %v186 = vshll.u32 %v23, 16
    %v188 = vrot.slane %v186, 5
    %v189 = vsel %vm127, %v184, %v188
    %v190 = vshrl.u32 %v23, 16
    %v192 = vrot.slane %v190, 4
    %v193 = vor.u32 %v192, %v188
    %v194 = vrot.slane %v193, 4
    %v196 = vshll.u32 %v24, 16
    %v198 = vrot.slane %v196, 5
    %v199 = vsel %vm127, %v194, %v198
    %v201 = vshrl.u32 %v25, 16
    %v203 = vrot.slane %v201, 4
    %v204 = vshll.u32 %v25, 16
    %v206 = vrot.slane %v204, 5
    %v207 = vor.u32 %v203, %v206
    %v208 = vrot.slane %v207, 4
    %v210 = vshll.u32 %v26, 16
    %v212 = vrot.slane %v210, 5
    %v213 = vsel %vm127, %v208, %v212
    %v214 = vshrl.u32 %v26, 16
    %v216 = vrot.slane %v214, 4
    %v217 = vor.u32 %v216, %v212
    %v218 = vrot.slane %v217, 4
    %v220 = vshll.u32 %v27, 16
    %v222 = vrot.slane %v220, 5
    %v223 = vsel %vm127, %v218, %v222
    %v225 = vshrl.u32 %v28, 16
    %v227 = vrot.slane %v225, 4
    %v228 = vshll.u32 %v28, 16
    %v230 = vrot.slane %v228, 5
    %v231 = vor.u32 %v227, %v230
    %v232 = vrot.slane %v231, 4
    %v234 = vshll.u32 %v29, 16
    %v236 = vrot.slane %v234, 5
    %v237 = vsel %vm127, %v232, %v236
    %v238 = vshrl.u32 %v29, 16
    %v240 = vrot.slane %v238, 4
    %v241 = vor.u32 %v240, %v236
    %v242 = vrot.slane %v241, 4
    %v244 = vshll.u32 %v30, 16
    %v246 = vrot.slane %v244, 5
    %v247 = vsel %vm127, %v242, %v246
    %v249 = vshrl.u32 %v31, 16
    %v251 = vrot.slane %v249, 4
    %v252 = vshll.u32 %v31, 16
    %v254 = vrot.slane %v252, 5
    %v255 = vor.u32 %v251, %v254
    %v256 = vrot.slane %v255, 4
    %v258 = vshll.u32 %v32, 16
    %v260 = vrot.slane %v258, 5
    %v261 = vsel %vm127, %v256, %v260
    %v262 = vshrl.u32 %v32, 16
    %v264 = vrot.slane %v262, 4
    %v265 = vor.u32 %v264, %v260
    %v266 = vrot.slane %v265, 4
    %v268 = vshll.u32 %v33, 16
    %v270 = vrot.slane %v268, 5
    %v271 = vsel %vm127, %v266, %v270
    %v273 = vshrl.u32 %v34, 16
    %v275 = vrot.slane %v273, 4
    %v276 = vshll.u32 %v34, 16
    %v278 = vrot.slane %v276, 5
    %v279 = vor.u32 %v275, %v278
    %v280 = vrot.slane %v279, 4
    %v282 = vshll.u32 %v35, 16
    %v284 = vrot.slane %v282, 5
    %v285 = vsel %vm127, %v280, %v284
    %v286 = vshrl.u32 %v35, 16
    %v288 = vrot.slane %v286, 4
    %v289 = vor.u32 %v288, %v284
    %v290 = vrot.slane %v289, 4
    %v292 = vshll.u32 %v36, 16
    %v294 = vrot.slane %v292, 5
    %v295 = vsel %vm127, %v290, %v294
    %v297 = vshrl.u32 %v37, 16
    %v299 = vrot.slane %v297, 4
    %v300 = vshll.u32 %v37, 16
    %v302 = vrot.slane %v300, 5
    %v303 = vor.u32 %v299, %v302
    %v304 = vrot.slane %v303, 4
    %v306 = vshll.u32 %v38, 16
    %v308 = vrot.slane %v306, 5
    %v309 = vsel %vm127, %v304, %v308
    %v310 = vshrl.u32 %v38, 16
    %v312 = vrot.slane %v310, 4
    %v313 = vor.u32 %v312, %v308
    %v314 = vrot.slane %v313, 4
    %v316 = vshll.u32 %v39, 16
    %v318 = vrot.slane %v316, 5
    %v319 = vsel %vm127, %v314, %v318
    %v321 = vshrl.u32 %v40, 16
    %v323 = vrot.slane %v321, 4
    %v324 = vshll.u32 %v40, 16
    %v326 = vrot.slane %v324, 5
    %v327 = vor.u32 %v323, %v326
    %v328 = vrot.slane %v327, 4
    %v330 = vshll.u32 %v41, 16
    %v332 = vrot.slane %v330, 5
    %v333 = vsel %vm127, %v328, %v332
    %v334 = vshrl.u32 %v41, 16
    %v336 = vrot.slane %v334, 4
    %v337 = vor.u32 %v336, %v332
    %v338 = vrot.slane %v337, 4
    %v340 = vshll.u32 %v42, 16
    %v342 = vrot.slane %v340, 5
    %v343 = vsel %vm127, %v338, %v342
    %v345 = vshrl.u32 %v43, 16
    %v347 = vrot.slane %v345, 4
    %v348 = vshll.u32 %v43, 16
    %v350 = vrot.slane %v348, 5
    %v351 = vor.u32 %v347, %v350
    %v352 = vrot.slane %v351, 4
    %v354 = vshll.u32 %v44, 16
    %v356 = vrot.slane %v354, 5
    %v357 = vsel %vm127, %v352, %v356
    %v358 = vshrl.u32 %v44, 16
    %v360 = vrot.slane %v358, 4
    %v361 = vor.u32 %v360, %v356
    %v362 = vrot.slane %v361, 4
    %v364 = vshll.u32 %v45, 16
    %v366 = vrot.slane %v364, 5
    %v367 = vsel %vm127, %v362, %v366
    %v369 = vshrl.u32 %v46, 16
    %v371 = vrot.slane %v369, 4
    %v372 = vshll.u32 %v46, 16
    %v374 = vrot.slane %v372, 5
    %v375 = vor.u32 %v371, %v374
    %v376 = vrot.slane %v375, 4
    %v378 = vshll.u32 %v47, 16
    %v380 = vrot.slane %v378, 5
    %v381 = vsel %vm127, %v376, %v380
    %v382 = vshrl.u32 %v47, 16
    %v384 = vrot.slane %v382, 4
    %v385 = vor.u32 %v384, %v380
    %v386 = vrot.slane %v385, 4
    %v388 = vshll.u32 %v48, 16
    %v390 = vrot.slane %v388, 5
    %v391 = vsel %vm127, %v386, %v390
    %v393 = vshrl.u32 %v49, 16
    %v395 = vrot.slane %v393, 4
    %v396 = vshll.u32 %v49, 16
    %v398 = vrot.slane %v396, 5
    %v399 = vor.u32 %v395, %v398
    %v400 = vrot.slane %v399, 4
    %v402 = vshll.u32 %v50, 16
    %v404 = vrot.slane %v402, 5
    %v405 = vsel %vm127, %v400, %v404
    %v406 = vshrl.u32 %v50, 16
    %v408 = vrot.slane %v406, 4
    %v409 = vor.u32 %v408, %v404
    %v410 = vrot.slane %v409, 4
    %v412 = vshll.u32 %v51, 16
    %v414 = vrot.slane %v412, 5
    %v415 = vsel %vm127, %v410, %v414
    %v417 = vshrl.u32 %v52, 16
    %v419 = vrot.slane %v417, 4
    %v420 = vshll.u32 %v52, 16
    %v422 = vrot.slane %v420, 5
    %v423 = vor.u32 %v419, %v422
    %v424 = vrot.slane %v423, 4
    %v426 = vshll.u32 %v53, 16
    %v428 = vrot.slane %v426, 5
    %v429 = vsel %vm127, %v424, %v428
    %v430 = vshrl.u32 %v53, 16
    %v432 = vrot.slane %v430, 4
    %v433 = vor.u32 %v432, %v428
    %v434 = vrot.slane %v433, 4
    %v436 = vshll.u32 %v54, 16
    %v438 = vrot.slane %v436, 5
    %v439 = vsel %vm127, %v434, %v438
    %v441 = vshrl.u32 %v55, 16
    %v443 = vrot.slane %v441, 4
    %v444 = vshll.u32 %v55, 16
    %v446 = vrot.slane %v444, 5
    %v447 = vor.u32 %v443, %v446
    %v448 = vrot.slane %v447, 4
    %v450 = vshll.u32 %v56, 16
    %v452 = vrot.slane %v450, 5
    %v453 = vsel %vm127, %v448, %v452
    %v454 = vshrl.u32 %v56, 16
    %v456 = vrot.slane %v454, 4
    %v457 = vor.u32 %v456, %v452
    %v458 = vrot.slane %v457, 4
    %v460 = vshll.u32 %v57, 16
    %v462 = vrot.slane %v460, 5
    %v463 = vsel %vm127, %v458, %v462
    %v465 = vshrl.u32 %v58, 16
    %v467 = vrot.slane %v465, 4
    %v468 = vshll.u32 %v58, 16
    %v470 = vrot.slane %v468, 5
    %v471 = vor.u32 %v467, %v470
    %v472 = vrot.slane %v471, 4
    %v474 = vshll.u32 %v59, 16
    %v476 = vrot.slane %v474, 5
    %v477 = vsel %vm127, %v472, %v476
    %v478 = vshrl.u32 %v59, 16
    %v480 = vrot.slane %v478, 4
    %v481 = vor.u32 %v480, %v476
    %v482 = vrot.slane %v481, 4
    %v484 = vshll.u32 %v60, 16
    %v486 = vrot.slane %v484, 5
    %v487 = vsel %vm127, %v482, %v486
    %v489 = vshrl.u32 %v61, 16
    %v491 = vrot.slane %v489, 4
    %v492 = vshll.u32 %v61, 16
    %v494 = vrot.slane %v492, 5
    %v495 = vor.u32 %v491, %v494
    %v496 = vrot.slane %v495, 4
    %v498 = vshll.u32 %v62, 16
    %v500 = vrot.slane %v498, 5
    %v501 = vsel %vm127, %v496, %v500
    %v502 = vshrl.u32 %v62, 16
    %v504 = vrot.slane %v502, 4
    %v505 = vor.u32 %v504, %v500
    %v506 = vrot.slane %v505, 4
    %v508 = vshll.u32 %v63, 16
    %v510 = vrot.slane %v508, 5
    %v511 = vsel %vm127, %v506, %v510
    %v513 = vshrl.u32 %v70, 16
    %v515 = vrot.slane %v513, 4
    %v516 = vshll.u32 %v70, 16
    %v518 = vrot.slane %v516, 5
    %v519 = vor.u32 %v515, %v518
    %v520 = vrot.slane %v519, 4
    %v522 = vshll.u32 %v71, 16
    %v524 = vrot.slane %v522, 5
    %v525 = vsel %vm127, %v520, %v524
    %v526 = vshrl.u32 %v71, 16
    %v528 = vrot.slane %v526, 4
    %v529 = vor.u32 %v528, %v524
    %v530 = vrot.slane %v529, 4
    %v532 = vshll.u32 %v72, 16
    %v534 = vrot.slane %v532, 5
    %v535 = vsel %vm127, %v530, %v534
    %v537 = vshrl.u32 %v73, 16
    %v539 = vrot.slane %v537, 4
    %v540 = vshll.u32 %v73, 16
    %v542 = vrot.slane %v540, 5
    %v543 = vor.u32 %v539, %v542
    %v544 = vrot.slane %v543, 4
    %v546 = vshll.u32 %v74, 16
    %v548 = vrot.slane %v546, 5
    %v549 = vsel %vm127, %v544, %v548
    %v550 = vshrl.u32 %v74, 16
    %v552 = vrot.slane %v550, 4
    %v553 = vor.u32 %v552, %v548
    %v554 = vrot.slane %v553, 4
    %v556 = vshll.u32 %v75, 16
    %v558 = vrot.slane %v556, 5
    %v559 = vsel %vm127, %v554, %v558
    %v561 = vshrl.u32 %v76, 16
    %v563 = vrot.slane %v561, 4
    %v564 = vshll.u32 %v76, 16
    %v566 = vrot.slane %v564, 5
    %v567 = vor.u32 %v563, %v566
    %v568 = vrot.slane %v567, 4
    %v570 = vshll.u32 %v77, 16
    %v572 = vrot.slane %v570, 5
    %v573 = vsel %vm127, %v568, %v572
    %v574 = vshrl.u32 %v77, 16
    %v576 = vrot.slane %v574, 4
    %v577 = vor.u32 %v576, %v572
    %v578 = vrot.slane %v577, 4
    %v580 = vshll.u32 %v78, 16
    %v582 = vrot.slane %v580, 5
    %v583 = vsel %vm127, %v578, %v582
    %v585 = vshrl.u32 %v79, 16
    %v587 = vrot.slane %v585, 4
    %v588 = vshll.u32 %v79, 16
    %v590 = vrot.slane %v588, 5
    %v591 = vor.u32 %v587, %v590
    %v592 = vrot.slane %v591, 4
    %v594 = vshll.u32 %v80, 16
    %v596 = vrot.slane %v594, 5
    %v597 = vsel %vm127, %v592, %v596
    %v598 = vshrl.u32 %v80, 16
    %v600 = vrot.slane %v598, 4
    %v601 = vor.u32 %v600, %v596
    %v602 = vrot.slane %v601, 4
    %v604 = vshll.u32 %v81, 16
    %v606 = vrot.slane %v604, 5
    %v607 = vsel %vm127, %v602, %v606
    %v609 = vshrl.u32 %v82, 16
    %v611 = vrot.slane %v609, 4
    %v612 = vshll.u32 %v82, 16
    %v614 = vrot.slane %v612, 5
    %v615 = vor.u32 %v611, %v614
    %v616 = vrot.slane %v615, 4
    %v618 = vshll.u32 %v83, 16
    %v620 = vrot.slane %v618, 5
    %v621 = vsel %vm127, %v616, %v620
    %v622 = vshrl.u32 %v83, 16
    %v624 = vrot.slane %v622, 4
    %v625 = vor.u32 %v624, %v620
    %v626 = vrot.slane %v625, 4
    %v628 = vshll.u32 %v84, 16
    %v630 = vrot.slane %v628, 5
    %v631 = vsel %vm127, %v626, %v630
    %v633 = vshrl.u32 %v85, 16
    %v635 = vrot.slane %v633, 4
    %v636 = vshll.u32 %v85, 16
    %v638 = vrot.slane %v636, 5
    %v639 = vor.u32 %v635, %v638
    %v640 = vrot.slane %v639, 4
    %v642 = vshll.u32 %v86, 16
    %v644 = vrot.slane %v642, 5
    %v645 = vsel %vm127, %v640, %v644
    %v646 = vshrl.u32 %v86, 16
    %v648 = vrot.slane %v646, 4
    %v649 = vor.u32 %v648, %v644
    %v650 = vrot.slane %v649, 4
    %v652 = vshll.u32 %v87, 16
    %v654 = vrot.slane %v652, 5
    %v655 = vsel %vm127, %v650, %v654
    %v657 = vshrl.u32 %v88, 16
    %v659 = vrot.slane %v657, 4
    %v660 = vshll.u32 %v88, 16
    %v662 = vrot.slane %v660, 5
    %v663 = vor.u32 %v659, %v662
    %v664 = vrot.slane %v663, 4
    %v666 = vshll.u32 %v89, 16
    %v668 = vrot.slane %v666, 5
    %v669 = vsel %vm127, %v664, %v668
    %v670 = vshrl.u32 %v89, 16
    %v672 = vrot.slane %v670, 4
    %v673 = vor.u32 %v672, %v668
    %v674 = vrot.slane %v673, 4
    %v676 = vshll.u32 %v90, 16
    %v678 = vrot.slane %v676, 5
    %v679 = vsel %vm127, %v674, %v678
    %v681 = vshrl.u32 %v91, 16
    %v683 = vrot.slane %v681, 4
    %v684 = vshll.u32 %v91, 16
    %v686 = vrot.slane %v684, 5
    %v687 = vor.u32 %v683, %v686
    %v688 = vrot.slane %v687, 4
    %v690 = vshll.u32 %v92, 16
    %v692 = vrot.slane %v690, 5
    %v693 = vsel %vm127, %v688, %v692
    %v694 = vshrl.u32 %v92, 16
    %v696 = vrot.slane %v694, 4
    %v697 = vor.u32 %v696, %v692
    %v698 = vrot.slane %v697, 4
    %v700 = vshll.u32 %v93, 16
    %v702 = vrot.slane %v700, 5
    %v703 = vsel %vm127, %v698, %v702
    %v705 = vshrl.u32 %v94, 16
    %v707 = vrot.slane %v705, 4
    %v708 = vshll.u32 %v94, 16
    %v710 = vrot.slane %v708, 5
    %v711 = vor.u32 %v707, %v710
    %v712 = vrot.slane %v711, 4
    %v714 = vshll.u32 %v95, 16
    %v716 = vrot.slane %v714, 5
    %v717 = vsel %vm127, %v712, %v716
    %v718 = vshrl.u32 %v95, 16
    %v720 = vrot.slane %v718, 4
    %v721 = vor.u32 %v720, %v716
    %v722 = vrot.slane %v721, 4
    %v724 = vshll.u32 %v96, 16
    %v726 = vrot.slane %v724, 5
    %v727 = vsel %vm127, %v722, %v726
    %v729 = vshrl.u32 %v97, 16
    %v731 = vrot.slane %v729, 4
    %v732 = vshll.u32 %v97, 16
    %v734 = vrot.slane %v732, 5
    %v735 = vor.u32 %v731, %v734
    %v736 = vrot.slane %v735, 4
    %v738 = vshll.u32 %v98, 16
    %v740 = vrot.slane %v738, 5
    %v741 = vsel %vm127, %v736, %v740
    %v742 = vshrl.u32 %v98, 16
    %v744 = vrot.slane %v742, 4
    %v745 = vor.u32 %v744, %v740
    %v746 = vrot.slane %v745, 4
    %v748 = vshll.u32 %v99, 16
    %v750 = vrot.slane %v748, 5
    %v751 = vsel %vm127, %v746, %v750
    %v753 = vshrl.u32 %v100, 16
    %v755 = vrot.slane %v753, 4
    %v756 = vshll.u32 %v100, 16
    %v758 = vrot.slane %v756, 5
    %v759 = vor.u32 %v755, %v758
    %v760 = vrot.slane %v759, 4
    %v762 = vshll.u32 %v101, 16
    %v764 = vrot.slane %v762, 5
    %v765 = vsel %vm127, %v760, %v764
    %v766 = vshrl.u32 %v101, 16
    %v768 = vrot.slane %v766, 4
    %v769 = vor.u32 %v768, %v764
    %v770 = vrot.slane %v769, 4
    %v772 = vshll.u32 %v102, 16
    %v774 = vrot.slane %v772, 5
    %v775 = vsel %vm127, %v770, %v774
    %v777 = vshrl.u32 %v103, 16
    %v779 = vrot.slane %v777, 4
    %v780 = vshll.u32 %v103, 16
    %v782 = vrot.slane %v780, 5
    %v783 = vor.u32 %v779, %v782
    %v784 = vrot.slane %v783, 4
    %v786 = vshll.u32 %v104, 16
    %v788 = vrot.slane %v786, 5
    %v789 = vsel %vm127, %v784, %v788
    %v790 = vshrl.u32 %v104, 16
    %v792 = vrot.slane %v790, 4
    %v793 = vor.u32 %v792, %v788
    %v794 = vrot.slane %v793, 4
    %v796 = vshll.u32 %v105, 16
    %v798 = vrot.slane %v796, 5
    %v799 = vsel %vm127, %v794, %v798
    %v801 = vshrl.u32 %v106, 16
    %v803 = vrot.slane %v801, 4
    %v804 = vshll.u32 %v106, 16
    %v806 = vrot.slane %v804, 5
    %v807 = vor.u32 %v803, %v806
    %v808 = vrot.slane %v807, 4
    %v810 = vshll.u32 %v107, 16
    %v812 = vrot.slane %v810, 5
    %v813 = vsel %vm127, %v808, %v812
    %v814 = vshrl.u32 %v107, 16
    %v816 = vrot.slane %v814, 4
    %v817 = vor.u32 %v816, %v812
    %v818 = vrot.slane %v817, 4
    %v820 = vshll.u32 %v108, 16
    %v822 = vrot.slane %v820, 5
    %v823 = vsel %vm127, %v818, %v822
    %v825 = vshrl.u32 %v109, 16
    %v827 = vrot.slane %v825, 4
    %v828 = vshll.u32 %v109, 16
    %v830 = vrot.slane %v828, 5
    %v831 = vor.u32 %v827, %v830
    %v832 = vrot.slane %v831, 4
    %v834 = vshll.u32 %v110, 16
    %v836 = vrot.slane %v834, 5
    %v837 = vsel %vm127, %v832, %v836
    %v838 = vshrl.u32 %v110, 16
    %v840 = vrot.slane %v838, 4
    %v841 = vor.u32 %v840, %v836
    %v842 = vrot.slane %v841, 4
    %v844 = vshll.u32 %v111, 16
    %v846 = vrot.slane %v844, 5
    %v847 = vsel %vm127, %v842, %v846
    %v849 = vshrl.u32 %v112, 16
    %v851 = vrot.slane %v849, 4
    %v852 = vshll.u32 %v112, 16
    %v854 = vrot.slane %v852, 5
    %v855 = vor.u32 %v851, %v854
    %v856 = vrot.slane %v855, 4
    %v858 = vshll.u32 %v113, 16
    %v860 = vrot.slane %v858, 5
    %v861 = vsel %vm127, %v856, %v860
    %v862 = vshrl.u32 %v113, 16
    %v864 = vrot.slane %v862, 4
    %v865 = vor.u32 %v864, %v860
    %v866 = vrot.slane %v865, 4
    %v868 = vshll.u32 %v114, 16
    %v870 = vrot.slane %v868, 5
    %v871 = vsel %vm127, %v866, %v870
    %v873 = vshrl.u32 %v115, 16
    %v875 = vrot.slane %v873, 4
    %v876 = vshll.u32 %v115, 16
    %v878 = vrot.slane %v876, 5
    %v879 = vor.u32 %v875, %v878
    %v880 = vrot.slane %v879, 4
    %v882 = vshll.u32 %v116, 16
    %v884 = vrot.slane %v882, 5
    %v885 = vsel %vm127, %v880, %v884
    %v886 = vshrl.u32 %v116, 16
    %v888 = vrot.slane %v886, 4
    %v889 = vor.u32 %v888, %v884
    %v890 = vrot.slane %v889, 4
    %v892 = vshll.u32 %v117, 16
    %v894 = vrot.slane %v892, 5
    %v895 = vsel %vm127, %v890, %v894
    %s896 = scalar_lea.vmem %s1, 2
    %v897 = vld [vmem:[%s896] sm:$0x3]
    %v898 = vunpack.c.l.b16 %v141
    %v899 = vunpack.c.l.b16 %v151
    %v900 = vunpack.c.l.b16 %v165
    %v901 = vunpack.c.l.b16 %v175
    %v902 = vunpack.c.l.b16 %v189
    %v903 = vunpack.c.l.b16 %v199
    %v904 = vunpack.c.l.b16 %v213
    %v905 = vunpack.c.l.b16 %v223
    %v906 = vunpack.c.l.b16 %v237
    %v907 = vunpack.c.l.b16 %v247
    %v908 = vunpack.c.l.b16 %v261
    %v909 = vunpack.c.l.b16 %v271
    %v910 = vunpack.c.l.b16 %v285
    %v911 = vunpack.c.l.b16 %v295
    %v912 = vunpack.c.l.b16 %v309
    %v913 = vunpack.c.l.b16 %v319
    %v914 = vunpack.c.l.b16 %v333
    %v915 = vunpack.c.l.b16 %v343
    %v916 = vunpack.c.l.b16 %v357
    %v917 = vunpack.c.l.b16 %v367
    %v918 = vunpack.c.l.b16 %v381
    %v919 = vunpack.c.l.b16 %v391
    %v920 = vunpack.c.l.b16 %v405
    %v921 = vunpack.c.l.b16 %v415
    %v922 = vunpack.c.l.b16 %v429
    %v923 = vunpack.c.l.b16 %v439
    %v924 = vunpack.c.l.b16 %v453
    %v925 = vunpack.c.l.b16 %v463
    %v926 = vunpack.c.l.b16 %v477
    %v927 = vunpack.c.l.b16 %v487
    %v928 = vunpack.c.l.b16 %v501
    %v929 = vunpack.c.l.b16 %v511
    %v930 = vunpack.c.l.b16 %v525
    %v931 = vunpack.c.l.b16 %v535
    %v932 = vunpack.c.l.b16 %v549
    %v933 = vunpack.c.l.b16 %v559
    %v934 = vunpack.c.l.b16 %v573
    %v935 = vunpack.c.l.b16 %v583
    %v936 = vunpack.c.l.b16 %v597
    %v937 = vunpack.c.l.b16 %v607
    %v938 = vunpack.c.l.b16 %v621
    %v939 = vunpack.c.l.b16 %v631
    %v940 = vunpack.c.l.b16 %v645
    %v941 = vunpack.c.l.b16 %v655
    %v942 = vunpack.c.l.b16 %v669
    %v943 = vunpack.c.l.b16 %v679
    %v944 = vunpack.c.l.b16 %v693
    %v945 = vunpack.c.l.b16 %v703
    %v946 = vunpack.c.l.b16 %v717
    %v947 = vunpack.c.l.b16 %v727
    %v948 = vunpack.c.l.b16 %v741
    %v949 = vunpack.c.l.b16 %v751
    %v950 = vunpack.c.l.b16 %v765
    %v951 = vunpack.c.l.b16 %v775
    %v952 = vunpack.c.l.b16 %v789
    %v953 = vunpack.c.l.b16 %v799
    %v954 = vunpack.c.l.b16 %v813
    %v955 = vunpack.c.l.b16 %v823
    %v956 = vunpack.c.l.b16 %v837
    %v957 = vunpack.c.l.b16 %v847
    %v958 = vunpack.c.l.b16 %v861
    %v959 = vunpack.c.l.b16 %v871
    %v960 = vunpack.c.l.b16 %v885
    %v961 = vunpack.c.l.b16 %v895
    %v962 = vpack.c.b16 %v899, %v898
    %v963 = vpack.c.b16 %v901, %v900
    %v964 = vpack.c.b16 %v903, %v902
    %v965 = vpack.c.b16 %v905, %v904
    %v966 = vpack.c.b16 %v907, %v906
    %v967 = vpack.c.b16 %v909, %v908
    %v968 = vpack.c.b16 %v911, %v910
    %v969 = vpack.c.b16 %v913, %v912
    %v970 = vpack.c.b16 %v915, %v914
    %v971 = vpack.c.b16 %v917, %v916
    %v972 = vpack.c.b16 %v919, %v918
    %v973 = vpack.c.b16 %v921, %v920
    %v974 = vpack.c.b16 %v923, %v922
    %v975 = vpack.c.b16 %v925, %v924
    %v976 = vpack.c.b16 %v927, %v926
    %v977 = vpack.c.b16 %v929, %v928
    %v978 = vpack.c.b16 %v931, %v930
    %v979 = vpack.c.b16 %v933, %v932
    %v980 = vpack.c.b16 %v935, %v934
    %v981 = vpack.c.b16 %v937, %v936
    %v982 = vpack.c.b16 %v939, %v938
    %v983 = vpack.c.b16 %v941, %v940
    %v984 = vpack.c.b16 %v943, %v942
    %v985 = vpack.c.b16 %v945, %v944
    %v986 = vpack.c.b16 %v947, %v946
    %v987 = vpack.c.b16 %v949, %v948
    %v988 = vpack.c.b16 %v951, %v950
    %v989 = vpack.c.b16 %v953, %v952
    %v990 = vpack.c.b16 %v955, %v954
    %v991 = vpack.c.b16 %v957, %v956
    %v992 = vpack.c.b16 %v959, %v958
    %v993 = vpack.c.b16 %v961, %v960
    %vm994 = vcmask 31744
    %v996 = vsel %vm994, %v962, 0
    %v999 = vsel %vm994, %v963, 0
    %v1002 = vsel %vm994, %v964, 0
    %v1005 = vsel %vm994, %v965, 0
    %v1008 = vsel %vm994, %v966, 0
    %v1011 = vsel %vm994, %v967, 0
    %v1014 = vsel %vm994, %v968, 0
    %v1017 = vsel %vm994, %v969, 0
    %v1020 = vsel %vm994, %v970, 0
    %v1023 = vsel %vm994, %v971, 0
    %v1026 = vsel %vm994, %v972, 0
    %v1029 = vsel %vm994, %v973, 0
    %v1032 = vsel %vm994, %v974, 0
    %v1035 = vsel %vm994, %v975, 0
    %v1038 = vsel %vm994, %v976, 0
    %v1041 = vsel %vm994, %v977, 0
    %v1044 = vsel %vm994, %v978, 0
    %v1047 = vsel %vm994, %v979, 0
    %v1050 = vsel %vm994, %v980, 0
    %v1053 = vsel %vm994, %v981, 0
    %v1056 = vsel %vm994, %v982, 0
    %v1059 = vsel %vm994, %v983, 0
    %v1062 = vsel %vm994, %v984, 0
    %v1065 = vsel %vm994, %v985, 0
    %v1068 = vsel %vm994, %v986, 0
    %v1071 = vsel %vm994, %v987, 0
    %v1074 = vsel %vm994, %v988, 0
    %v1077 = vsel %vm994, %v989, 0
    %v1080 = vsel %vm994, %v990, 0
    %v1083 = vsel %vm994, %v991, 0
    %v1086 = vsel %vm994, %v992, 0
    %v1089 = vsel %vm994, %v993, 0
    %vm1091 = vcmask 1041408
    %v1093 = vsel %vm1091, %v897, 0
    %1095 = vmatpush.bf16.msra.mxu0 0
    %1096 = vmatpush.bf16.msra.mxu0 0
    %1097 = vmatpush.bf16.msra.mxu0 0
    %1098 = vmatpush.bf16.msra.mxu0 0
    %1099 = vmatpush.bf16.msra.mxu0 0
    %1100 = vmatpush.bf16.msra.mxu0 0
    %1101 = vmatpush.bf16.msra.mxu0 0
    %1102 = vmatpush.bf16.msra.mxu0 %v1093
    %1103 = vmatmul.bf16.gmra.mxu0 %v996
    %v1104 = vpop.f32.mrf.mxu0
    %v1105 = vadd.f32 0.0, %v1104
    %v1106 = vpop.f32.mrf.mxu0
    %v1107 = vadd.f32 0.0, %v1106
    %1108 = vmatmul.bf16.gmra.mxu0 %v999
    %v1109 = vpop.f32.mrf.mxu0
    %v1110 = vadd.f32 0.0, %v1109
    %v1111 = vpop.f32.mrf.mxu0
    %v1112 = vadd.f32 0.0, %v1111
    %1113 = vmatmul.bf16.gmra.mxu0 %v1002
    %v1114 = vpop.f32.mrf.mxu0
    %v1115 = vadd.f32 0.0, %v1114
    %v1116 = vpop.f32.mrf.mxu0
    %v1117 = vadd.f32 0.0, %v1116
    %1118 = vmatmul.bf16.gmra.mxu0 %v1005
    %v1119 = vpop.f32.mrf.mxu0
    %v1120 = vadd.f32 0.0, %v1119
    %v1121 = vpop.f32.mrf.mxu0
    %v1122 = vadd.f32 0.0, %v1121
    %1123 = vmatmul.bf16.gmra.mxu0 %v1008
    %v1124 = vpop.f32.mrf.mxu0
    %v1125 = vadd.f32 0.0, %v1124
    %v1126 = vpop.f32.mrf.mxu0
    %v1127 = vadd.f32 0.0, %v1126
    %1128 = vmatmul.bf16.gmra.mxu0 %v1011
    %v1129 = vpop.f32.mrf.mxu0
    %v1130 = vadd.f32 0.0, %v1129
    %v1131 = vpop.f32.mrf.mxu0
    %v1132 = vadd.f32 0.0, %v1131
    %1133 = vmatmul.bf16.gmra.mxu0 %v1014
    %v1134 = vpop.f32.mrf.mxu0
    %v1135 = vadd.f32 0.0, %v1134
    %v1136 = vpop.f32.mrf.mxu0
    %v1137 = vadd.f32 0.0, %v1136
    %1138 = vmatmul.bf16.gmra.mxu0 %v1017
    %v1139 = vpop.f32.mrf.mxu0
    %v1140 = vadd.f32 0.0, %v1139
    %v1141 = vpop.f32.mrf.mxu0
    %v1142 = vadd.f32 0.0, %v1141
    %1143 = vmatmul.bf16.gmra.mxu0 %v1020
    %v1144 = vpop.f32.mrf.mxu0
    %v1145 = vadd.f32 0.0, %v1144
    %v1146 = vpop.f32.mrf.mxu0
    %v1147 = vadd.f32 0.0, %v1146
    %1148 = vmatmul.bf16.gmra.mxu0 %v1023
    %v1149 = vpop.f32.mrf.mxu0
    %v1150 = vadd.f32 0.0, %v1149
    %v1151 = vpop.f32.mrf.mxu0
    %v1152 = vadd.f32 0.0, %v1151
    %1153 = vmatmul.bf16.gmra.mxu0 %v1026
    %v1154 = vpop.f32.mrf.mxu0
    %v1155 = vadd.f32 0.0, %v1154
    %v1156 = vpop.f32.mrf.mxu0
    %v1157 = vadd.f32 0.0, %v1156
    %1158 = vmatmul.bf16.gmra.mxu0 %v1029
    %v1159 = vpop.f32.mrf.mxu0
    %v1160 = vadd.f32 0.0, %v1159
    %v1161 = vpop.f32.mrf.mxu0
    %v1162 = vadd.f32 0.0, %v1161
    %1163 = vmatmul.bf16.gmra.mxu0 %v1032
    %v1164 = vpop.f32.mrf.mxu0
    %v1165 = vadd.f32 0.0, %v1164
    %v1166 = vpop.f32.mrf.mxu0
    %v1167 = vadd.f32 0.0, %v1166
    %1168 = vmatmul.bf16.gmra.mxu0 %v1035
    %v1169 = vpop.f32.mrf.mxu0
    %v1170 = vadd.f32 0.0, %v1169
    %v1171 = vpop.f32.mrf.mxu0
    %v1172 = vadd.f32 0.0, %v1171
    %1173 = vmatmul.bf16.gmra.mxu0 %v1038
    %v1174 = vpop.f32.mrf.mxu0
    %v1175 = vadd.f32 0.0, %v1174
    %v1176 = vpop.f32.mrf.mxu0
    %v1177 = vadd.f32 0.0, %v1176
    %1178 = vmatmul.bf16.gmra.mxu0 %v1041
    %v1179 = vpop.f32.mrf.mxu0
    %v1180 = vadd.f32 0.0, %v1179
    %v1181 = vpop.f32.mrf.mxu0
    %v1182 = vadd.f32 0.0, %v1181
    %1183 = vmatmul.bf16.gmra.mxu0 %v1044
    %v1184 = vpop.f32.mrf.mxu0
    %v1185 = vadd.f32 0.0, %v1184
    %v1186 = vpop.f32.mrf.mxu0
    %v1187 = vadd.f32 0.0, %v1186
    %1188 = vmatmul.bf16.gmra.mxu0 %v1047
    %v1189 = vpop.f32.mrf.mxu0
    %v1190 = vadd.f32 0.0, %v1189
    %v1191 = vpop.f32.mrf.mxu0
    %v1192 = vadd.f32 0.0, %v1191
    %1193 = vmatmul.bf16.gmra.mxu0 %v1050
    %v1194 = vpop.f32.mrf.mxu0
    %v1195 = vadd.f32 0.0, %v1194
    %v1196 = vpop.f32.mrf.mxu0
    %v1197 = vadd.f32 0.0, %v1196
    %1198 = vmatmul.bf16.gmra.mxu0 %v1053
    %v1199 = vpop.f32.mrf.mxu0
    %v1200 = vadd.f32 0.0, %v1199
    %v1201 = vpop.f32.mrf.mxu0
    %v1202 = vadd.f32 0.0, %v1201
    %1203 = vmatmul.bf16.gmra.mxu0 %v1056
    %v1204 = vpop.f32.mrf.mxu0
    %v1205 = vadd.f32 0.0, %v1204
    %v1206 = vpop.f32.mrf.mxu0
    %v1207 = vadd.f32 0.0, %v1206
    %1208 = vmatmul.bf16.gmra.mxu0 %v1059
    %v1209 = vpop.f32.mrf.mxu0
    %v1210 = vadd.f32 0.0, %v1209
    %v1211 = vpop.f32.mrf.mxu0
    %v1212 = vadd.f32 0.0, %v1211
    %1213 = vmatmul.bf16.gmra.mxu0 %v1062
    %v1214 = vpop.f32.mrf.mxu0
    %v1215 = vadd.f32 0.0, %v1214
    %v1216 = vpop.f32.mrf.mxu0
    %v1217 = vadd.f32 0.0, %v1216
    %1218 = vmatmul.bf16.gmra.mxu0 %v1065
    %v1219 = vpop.f32.mrf.mxu0
    %v1220 = vadd.f32 0.0, %v1219
    %v1221 = vpop.f32.mrf.mxu0
    %v1222 = vadd.f32 0.0, %v1221
    %1223 = vmatmul.bf16.gmra.mxu0 %v1068
    %v1224 = vpop.f32.mrf.mxu0
    %v1225 = vadd.f32 0.0, %v1224
    %v1226 = vpop.f32.mrf.mxu0
    %v1227 = vadd.f32 0.0, %v1226
    %1228 = vmatmul.bf16.gmra.mxu0 %v1071
    %v1229 = vpop.f32.mrf.mxu0
    %v1230 = vadd.f32 0.0, %v1229
    %v1231 = vpop.f32.mrf.mxu0
    %v1232 = vadd.f32 0.0, %v1231
    %1233 = vmatmul.bf16.gmra.mxu0 %v1074
    %v1234 = vpop.f32.mrf.mxu0
    %v1235 = vadd.f32 0.0, %v1234
    %v1236 = vpop.f32.mrf.mxu0
    %v1237 = vadd.f32 0.0, %v1236
    %1238 = vmatmul.bf16.gmra.mxu0 %v1077
    %v1239 = vpop.f32.mrf.mxu0
    %v1240 = vadd.f32 0.0, %v1239
    %v1241 = vpop.f32.mrf.mxu0
    %v1242 = vadd.f32 0.0, %v1241
    %1243 = vmatmul.bf16.gmra.mxu0 %v1080
    %v1244 = vpop.f32.mrf.mxu0
    %v1245 = vadd.f32 0.0, %v1244
    %v1246 = vpop.f32.mrf.mxu0
    %v1247 = vadd.f32 0.0, %v1246
    %1248 = vmatmul.bf16.gmra.mxu0 %v1083
    %v1249 = vpop.f32.mrf.mxu0
    %v1250 = vadd.f32 0.0, %v1249
    %v1251 = vpop.f32.mrf.mxu0
    %v1252 = vadd.f32 0.0, %v1251
    %1253 = vmatmul.bf16.gmra.mxu0 %v1086
    %v1254 = vpop.f32.mrf.mxu0
    %v1255 = vadd.f32 0.0, %v1254
    %v1256 = vpop.f32.mrf.mxu0
    %v1257 = vadd.f32 0.0, %v1256
    %1258 = vmatmul.bf16.gmra.mxu0 %v1089
    %v1259 = vpop.f32.mrf.mxu0
    %v1260 = vadd.f32 0.0, %v1259
    %v1261 = vpop.f32.mrf.mxu0
    %v1262 = vadd.f32 0.0, %v1261
    %1263 = vdwg.mxu0
    %v1328 = vunpack.c.l.b16 %v16
    %v1329 = vunpack.c.l.b16 %v17
    %v1330 = vunpack.c.l.b16 %v19
    %v1331 = vunpack.c.l.b16 %v20
    %v1332 = vunpack.c.l.b16 %v22
    %v1333 = vunpack.c.l.b16 %v23
    %v1334 = vunpack.c.l.b16 %v25
    %v1335 = vunpack.c.l.b16 %v26
    %v1336 = vunpack.c.l.b16 %v28
    %v1337 = vunpack.c.l.b16 %v29
    %v1338 = vunpack.c.l.b16 %v31
    %v1339 = vunpack.c.l.b16 %v32
    %v1340 = vunpack.c.l.b16 %v34
    %v1341 = vunpack.c.l.b16 %v35
    %v1342 = vunpack.c.l.b16 %v37
    %v1343 = vunpack.c.l.b16 %v38
    %v1344 = vunpack.c.l.b16 %v40
    %v1345 = vunpack.c.l.b16 %v41
    %v1346 = vunpack.c.l.b16 %v43
    %v1347 = vunpack.c.l.b16 %v44
    %v1348 = vunpack.c.l.b16 %v46
    %v1349 = vunpack.c.l.b16 %v47
    %v1350 = vunpack.c.l.b16 %v49
    %v1351 = vunpack.c.l.b16 %v50
    %v1352 = vunpack.c.l.b16 %v52
    %v1353 = vunpack.c.l.b16 %v53
    %v1354 = vunpack.c.l.b16 %v55
    %v1355 = vunpack.c.l.b16 %v56
    %v1356 = vunpack.c.l.b16 %v58
    %v1357 = vunpack.c.l.b16 %v59
    %v1358 = vunpack.c.l.b16 %v61
    %v1359 = vunpack.c.l.b16 %v62
    %v1360 = vunpack.c.l.b16 %v70
    %v1361 = vunpack.c.l.b16 %v71
    %v1362 = vunpack.c.l.b16 %v73
    %v1363 = vunpack.c.l.b16 %v74
    %v1364 = vunpack.c.l.b16 %v76
    %v1365 = vunpack.c.l.b16 %v77
    %v1366 = vunpack.c.l.b16 %v79
    %v1367 = vunpack.c.l.b16 %v80
    %v1368 = vunpack.c.l.b16 %v82
    %v1369 = vunpack.c.l.b16 %v83
    %v1370 = vunpack.c.l.b16 %v85
    %v1371 = vunpack.c.l.b16 %v86
    %v1372 = vunpack.c.l.b16 %v88
    %v1373 = vunpack.c.l.b16 %v89
    %v1374 = vunpack.c.l.b16 %v91
    %v1375 = vunpack.c.l.b16 %v92
    %v1376 = vunpack.c.l.b16 %v94
    %v1377 = vunpack.c.l.b16 %v95
    %v1378 = vunpack.c.l.b16 %v97
    %v1379 = vunpack.c.l.b16 %v98
    %v1380 = vunpack.c.l.b16 %v100
    %v1381 = vunpack.c.l.b16 %v101
    %v1382 = vunpack.c.l.b16 %v103
    %v1383 = vunpack.c.l.b16 %v104
    %v1384 = vunpack.c.l.b16 %v106
    %v1385 = vunpack.c.l.b16 %v107
    %v1386 = vunpack.c.l.b16 %v109
    %v1387 = vunpack.c.l.b16 %v110
    %v1388 = vunpack.c.l.b16 %v112
    %v1389 = vunpack.c.l.b16 %v113
    %v1390 = vunpack.c.l.b16 %v115
    %v1391 = vunpack.c.l.b16 %v116
    %v1392 = vpack.c.b16 %v1329, %v1328
    %v1393 = vpack.c.b16 %v1331, %v1330
    %v1394 = vpack.c.b16 %v1333, %v1332
    %v1395 = vpack.c.b16 %v1335, %v1334
    %v1396 = vpack.c.b16 %v1337, %v1336
    %v1397 = vpack.c.b16 %v1339, %v1338
    %v1398 = vpack.c.b16 %v1341, %v1340
    %v1399 = vpack.c.b16 %v1343, %v1342
    %v1400 = vpack.c.b16 %v1345, %v1344
    %v1401 = vpack.c.b16 %v1347, %v1346
    %v1402 = vpack.c.b16 %v1349, %v1348
    %v1403 = vpack.c.b16 %v1351, %v1350
    %v1404 = vpack.c.b16 %v1353, %v1352
    %v1405 = vpack.c.b16 %v1355, %v1354
    %v1406 = vpack.c.b16 %v1357, %v1356
    %v1407 = vpack.c.b16 %v1359, %v1358
    %v1408 = vpack.c.b16 %v1361, %v1360
    %v1409 = vpack.c.b16 %v1363, %v1362
    %v1410 = vpack.c.b16 %v1365, %v1364
    %v1411 = vpack.c.b16 %v1367, %v1366
    %v1412 = vpack.c.b16 %v1369, %v1368
    %v1413 = vpack.c.b16 %v1371, %v1370
    %v1414 = vpack.c.b16 %v1373, %v1372
    %v1415 = vpack.c.b16 %v1375, %v1374
    %v1416 = vpack.c.b16 %v1377, %v1376
    %v1417 = vpack.c.b16 %v1379, %v1378
    %v1418 = vpack.c.b16 %v1381, %v1380
    %v1419 = vpack.c.b16 %v1383, %v1382
    %v1420 = vpack.c.b16 %v1385, %v1384
    %v1421 = vpack.c.b16 %v1387, %v1386
    %v1422 = vpack.c.b16 %v1389, %v1388
    %v1423 = vpack.c.b16 %v1391, %v1390
    %v1425 = vsel %vm994, %v1392, 0
    %v1428 = vsel %vm994, %v1393, 0
    %v1431 = vsel %vm994, %v1394, 0
    %v1434 = vsel %vm994, %v1395, 0
    %v1437 = vsel %vm994, %v1396, 0
    %v1440 = vsel %vm994, %v1397, 0
    %v1443 = vsel %vm994, %v1398, 0
    %v1446 = vsel %vm994, %v1399, 0
    %v1449 = vsel %vm994, %v1400, 0
    %v1452 = vsel %vm994, %v1401, 0
    %v1455 = vsel %vm994, %v1402, 0
    %v1458 = vsel %vm994, %v1403, 0
    %v1461 = vsel %vm994, %v1404, 0
    %v1464 = vsel %vm994, %v1405, 0
    %v1467 = vsel %vm994, %v1406, 0
    %v1470 = vsel %vm994, %v1407, 0
    %v1473 = vsel %vm994, %v1408, 0
    %v1476 = vsel %vm994, %v1409, 0
    %v1479 = vsel %vm994, %v1410, 0
    %v1482 = vsel %vm994, %v1411, 0
    %v1485 = vsel %vm994, %v1412, 0
    %v1488 = vsel %vm994, %v1413, 0
    %v1491 = vsel %vm994, %v1414, 0
    %v1494 = vsel %vm994, %v1415, 0
    %v1497 = vsel %vm994, %v1416, 0
    %v1500 = vsel %vm994, %v1417, 0
    %v1503 = vsel %vm994, %v1418, 0
    %v1506 = vsel %vm994, %v1419, 0
    %v1509 = vsel %vm994, %v1420, 0
    %v1512 = vsel %vm994, %v1421, 0
    %v1515 = vsel %vm994, %v1422, 0
    %v1518 = vsel %vm994, %v1423, 0
    %v1521 = vsel %vm1091, %v124, 0
    %1523 = vmatpush.bf16.msra.mxu0 0
    %1524 = vmatpush.bf16.msra.mxu0 0
    %1525 = vmatpush.bf16.msra.mxu0 0
    %1526 = vmatpush.bf16.msra.mxu0 0
    %1527 = vmatpush.bf16.msra.mxu0 0
    %1528 = vmatpush.bf16.msra.mxu0 0
    %1529 = vmatpush.bf16.msra.mxu0 0
    %1530 = vmatpush.bf16.msra.mxu0 %v1521
    %1531 = vmatmul.bf16.gmra.mxu0 %v1425
    %v1532 = vpop.f32.mrf.mxu0
    %v1533 = vadd.f32 %v1105, %v1532
    %v1534 = vpop.f32.mrf.mxu0
    %v1535 = vadd.f32 %v1107, %v1534
    %1536 = vmatmul.bf16.gmra.mxu0 %v1428
    %v1537 = vpop.f32.mrf.mxu0
    %v1538 = vadd.f32 %v1110, %v1537
    %v1539 = vpop.f32.mrf.mxu0
    %v1540 = vadd.f32 %v1112, %v1539
    %1541 = vmatmul.bf16.gmra.mxu0 %v1431
    %v1542 = vpop.f32.mrf.mxu0
    %v1543 = vadd.f32 %v1115, %v1542
    %v1544 = vpop.f32.mrf.mxu0
    %v1545 = vadd.f32 %v1117, %v1544
    %1546 = vmatmul.bf16.gmra.mxu0 %v1434
    %v1547 = vpop.f32.mrf.mxu0
    %v1548 = vadd.f32 %v1120, %v1547
    %v1549 = vpop.f32.mrf.mxu0
    %v1550 = vadd.f32 %v1122, %v1549
    %1551 = vmatmul.bf16.gmra.mxu0 %v1437
    %v1552 = vpop.f32.mrf.mxu0
    %v1553 = vadd.f32 %v1125, %v1552
    %v1554 = vpop.f32.mrf.mxu0
    %v1555 = vadd.f32 %v1127, %v1554
    %1556 = vmatmul.bf16.gmra.mxu0 %v1440
    %v1557 = vpop.f32.mrf.mxu0
    %v1558 = vadd.f32 %v1130, %v1557
    %v1559 = vpop.f32.mrf.mxu0
    %v1560 = vadd.f32 %v1132, %v1559
    %1561 = vmatmul.bf16.gmra.mxu0 %v1443
    %v1562 = vpop.f32.mrf.mxu0
    %v1563 = vadd.f32 %v1135, %v1562
    %v1564 = vpop.f32.mrf.mxu0
    %v1565 = vadd.f32 %v1137, %v1564
    %1566 = vmatmul.bf16.gmra.mxu0 %v1446
    %v1567 = vpop.f32.mrf.mxu0
    %v1568 = vadd.f32 %v1140, %v1567
    %v1569 = vpop.f32.mrf.mxu0
    %v1570 = vadd.f32 %v1142, %v1569
    %1571 = vmatmul.bf16.gmra.mxu0 %v1449
    %v1572 = vpop.f32.mrf.mxu0
    %v1573 = vadd.f32 %v1145, %v1572
    %v1574 = vpop.f32.mrf.mxu0
    %v1575 = vadd.f32 %v1147, %v1574
    %1576 = vmatmul.bf16.gmra.mxu0 %v1452
    %v1577 = vpop.f32.mrf.mxu0
    %v1578 = vadd.f32 %v1150, %v1577
    %v1579 = vpop.f32.mrf.mxu0
    %v1580 = vadd.f32 %v1152, %v1579
    %1581 = vmatmul.bf16.gmra.mxu0 %v1455
    %v1582 = vpop.f32.mrf.mxu0
    %v1583 = vadd.f32 %v1155, %v1582
    %v1584 = vpop.f32.mrf.mxu0
    %v1585 = vadd.f32 %v1157, %v1584
    %1586 = vmatmul.bf16.gmra.mxu0 %v1458
    %v1587 = vpop.f32.mrf.mxu0
    %v1588 = vadd.f32 %v1160, %v1587
    %v1589 = vpop.f32.mrf.mxu0
    %v1590 = vadd.f32 %v1162, %v1589
    %1591 = vmatmul.bf16.gmra.mxu0 %v1461
    %v1592 = vpop.f32.mrf.mxu0
    %v1593 = vadd.f32 %v1165, %v1592
    %v1594 = vpop.f32.mrf.mxu0
    %v1595 = vadd.f32 %v1167, %v1594
    %1596 = vmatmul.bf16.gmra.mxu0 %v1464
    %v1597 = vpop.f32.mrf.mxu0
    %v1598 = vadd.f32 %v1170, %v1597
    %v1599 = vpop.f32.mrf.mxu0
    %v1600 = vadd.f32 %v1172, %v1599
    %1601 = vmatmul.bf16.gmra.mxu0 %v1467
    %v1602 = vpop.f32.mrf.mxu0
    %v1603 = vadd.f32 %v1175, %v1602
    %v1604 = vpop.f32.mrf.mxu0
    %v1605 = vadd.f32 %v1177, %v1604
    %1606 = vmatmul.bf16.gmra.mxu0 %v1470
    %v1607 = vpop.f32.mrf.mxu0
    %v1608 = vadd.f32 %v1180, %v1607
    %v1609 = vpop.f32.mrf.mxu0
    %v1610 = vadd.f32 %v1182, %v1609
    %1611 = vmatmul.bf16.gmra.mxu0 %v1473
    %v1612 = vpop.f32.mrf.mxu0
    %v1613 = vadd.f32 %v1185, %v1612
    %v1614 = vpop.f32.mrf.mxu0
    %v1615 = vadd.f32 %v1187, %v1614
    %1616 = vmatmul.bf16.gmra.mxu0 %v1476
    %v1617 = vpop.f32.mrf.mxu0
    %v1618 = vadd.f32 %v1190, %v1617
    %v1619 = vpop.f32.mrf.mxu0
    %v1620 = vadd.f32 %v1192, %v1619
    %1621 = vmatmul.bf16.gmra.mxu0 %v1479
    %v1622 = vpop.f32.mrf.mxu0
    %v1623 = vadd.f32 %v1195, %v1622
    %v1624 = vpop.f32.mrf.mxu0
    %v1625 = vadd.f32 %v1197, %v1624
    %1626 = vmatmul.bf16.gmra.mxu0 %v1482
    %v1627 = vpop.f32.mrf.mxu0
    %v1628 = vadd.f32 %v1200, %v1627
    %v1629 = vpop.f32.mrf.mxu0
    %v1630 = vadd.f32 %v1202, %v1629
    %1631 = vmatmul.bf16.gmra.mxu0 %v1485
    %v1632 = vpop.f32.mrf.mxu0
    %v1633 = vadd.f32 %v1205, %v1632
    %v1634 = vpop.f32.mrf.mxu0
    %v1635 = vadd.f32 %v1207, %v1634
    %1636 = vmatmul.bf16.gmra.mxu0 %v1488
    %v1637 = vpop.f32.mrf.mxu0
    %v1638 = vadd.f32 %v1210, %v1637
    %v1639 = vpop.f32.mrf.mxu0
    %v1640 = vadd.f32 %v1212, %v1639
    %1641 = vmatmul.bf16.gmra.mxu0 %v1491
    %v1642 = vpop.f32.mrf.mxu0
    %v1643 = vadd.f32 %v1215, %v1642
    %v1644 = vpop.f32.mrf.mxu0
    %v1645 = vadd.f32 %v1217, %v1644
    %1646 = vmatmul.bf16.gmra.mxu0 %v1494
    %v1647 = vpop.f32.mrf.mxu0
    %v1648 = vadd.f32 %v1220, %v1647
    %v1649 = vpop.f32.mrf.mxu0
    %v1650 = vadd.f32 %v1222, %v1649
    %1651 = vmatmul.bf16.gmra.mxu0 %v1497
    %v1652 = vpop.f32.mrf.mxu0
    %v1653 = vadd.f32 %v1225, %v1652
    %v1654 = vpop.f32.mrf.mxu0
    %v1655 = vadd.f32 %v1227, %v1654
    %1656 = vmatmul.bf16.gmra.mxu0 %v1500
    %v1657 = vpop.f32.mrf.mxu0
    %v1658 = vadd.f32 %v1230, %v1657
    %v1659 = vpop.f32.mrf.mxu0
    %v1660 = vadd.f32 %v1232, %v1659
    %1661 = vmatmul.bf16.gmra.mxu0 %v1503
    %v1662 = vpop.f32.mrf.mxu0
    %v1663 = vadd.f32 %v1235, %v1662
    %v1664 = vpop.f32.mrf.mxu0
    %v1665 = vadd.f32 %v1237, %v1664
    %1666 = vmatmul.bf16.gmra.mxu0 %v1506
    %v1667 = vpop.f32.mrf.mxu0
    %v1668 = vadd.f32 %v1240, %v1667
    %v1669 = vpop.f32.mrf.mxu0
    %v1670 = vadd.f32 %v1242, %v1669
    %1671 = vmatmul.bf16.gmra.mxu0 %v1509
    %v1672 = vpop.f32.mrf.mxu0
    %v1673 = vadd.f32 %v1245, %v1672
    %v1674 = vpop.f32.mrf.mxu0
    %v1675 = vadd.f32 %v1247, %v1674
    %1676 = vmatmul.bf16.gmra.mxu0 %v1512
    %v1677 = vpop.f32.mrf.mxu0
    %v1678 = vadd.f32 %v1250, %v1677
    %v1679 = vpop.f32.mrf.mxu0
    %v1680 = vadd.f32 %v1252, %v1679
    %1681 = vmatmul.bf16.gmra.mxu0 %v1515
    %v1682 = vpop.f32.mrf.mxu0
    %v1683 = vadd.f32 %v1255, %v1682
    %v1684 = vpop.f32.mrf.mxu0
    %v1685 = vadd.f32 %v1257, %v1684
    %1686 = vmatmul.bf16.gmra.mxu0 %v1518
    %v1687 = vpop.f32.mrf.mxu0
    %v1688 = vadd.f32 %v1260, %v1687
    %v1689 = vpop.f32.mrf.mxu0
    %v1690 = vadd.f32 %v1262, %v1689
    %1691 = vdwg.mxu0
    %vm1724 = vcmask 1042432
    %vm1725 = vcmask 1046532
    %vm1726 = vmor %vm1724, %vm1725
    %v1727 = vrot.slane %v16, 5
    %v1728 = vrot.slane %v1727, 4
    %v1729 = vrot.slane %v17, 5
    %v1730 = vsel %vm1726, %v1728, %v1729
    %v1731 = vrot.slane %v1729, 4
    %v1732 = vrot.slane %v18, 5
    %v1733 = vsel %vm1726, %v1731, %v1732
    %v1734 = vrot.slane %v19, 5
    %v1735 = vrot.slane %v1734, 4
    %v1736 = vrot.slane %v20, 5
    %v1737 = vsel %vm1726, %v1735, %v1736
    %v1738 = vrot.slane %v1736, 4
    %v1739 = vrot.slane %v21, 5
    %v1740 = vsel %vm1726, %v1738, %v1739
    %v1741 = vrot.slane %v22, 5
    %v1742 = vrot.slane %v1741, 4
    %v1743 = vrot.slane %v23, 5
    %v1744 = vsel %vm1726, %v1742, %v1743
    %v1745 = vrot.slane %v1743, 4
    %v1746 = vrot.slane %v24, 5
    %v1747 = vsel %vm1726, %v1745, %v1746
    %v1748 = vrot.slane %v25, 5
    %v1749 = vrot.slane %v1748, 4
    %v1750 = vrot.slane %v26, 5
    %v1751 = vsel %vm1726, %v1749, %v1750
    %v1752 = vrot.slane %v1750, 4
    %v1753 = vrot.slane %v27, 5
    %v1754 = vsel %vm1726, %v1752, %v1753
    %v1755 = vrot.slane %v28, 5
    %v1756 = vrot.slane %v1755, 4
    %v1757 = vrot.slane %v29, 5
    %v1758 = vsel %vm1726, %v1756, %v1757
    %v1759 = vrot.slane %v1757, 4
    %v1760 = vrot.slane %v30, 5
    %v1761 = vsel %vm1726, %v1759, %v1760
    %v1762 = vrot.slane %v31, 5
    %v1763 = vrot.slane %v1762, 4
    %v1764 = vrot.slane %v32, 5
    %v1765 = vsel %vm1726, %v1763, %v1764
    %v1766 = vrot.slane %v1764, 4
    %v1767 = vrot.slane %v33, 5
    %v1768 = vsel %vm1726, %v1766, %v1767
    %v1769 = vrot.slane %v34, 5
    %v1770 = vrot.slane %v1769, 4
    %v1771 = vrot.slane %v35, 5
    %v1772 = vsel %vm1726, %v1770, %v1771
    %v1773 = vrot.slane %v1771, 4
    %v1774 = vrot.slane %v36, 5
    %v1775 = vsel %vm1726, %v1773, %v1774
    %v1776 = vrot.slane %v37, 5
    %v1777 = vrot.slane %v1776, 4
    %v1778 = vrot.slane %v38, 5
    %v1779 = vsel %vm1726, %v1777, %v1778
    %v1780 = vrot.slane %v1778, 4
    %v1781 = vrot.slane %v39, 5
    %v1782 = vsel %vm1726, %v1780, %v1781
    %v1783 = vrot.slane %v40, 5
    %v1784 = vrot.slane %v1783, 4
    %v1785 = vrot.slane %v41, 5
    %v1786 = vsel %vm1726, %v1784, %v1785
    %v1787 = vrot.slane %v1785, 4
    %v1788 = vrot.slane %v42, 5
    %v1789 = vsel %vm1726, %v1787, %v1788
    %v1790 = vrot.slane %v43, 5
    %v1791 = vrot.slane %v1790, 4
    %v1792 = vrot.slane %v44, 5
    %v1793 = vsel %vm1726, %v1791, %v1792
    %v1794 = vrot.slane %v1792, 4
    %v1795 = vrot.slane %v45, 5
    %v1796 = vsel %vm1726, %v1794, %v1795
    %v1797 = vrot.slane %v46, 5
    %v1798 = vrot.slane %v1797, 4
    %v1799 = vrot.slane %v47, 5
    %v1800 = vsel %vm1726, %v1798, %v1799
    %v1801 = vrot.slane %v1799, 4
    %v1802 = vrot.slane %v48, 5
    %v1803 = vsel %vm1726, %v1801, %v1802
    %v1804 = vrot.slane %v49, 5
    %v1805 = vrot.slane %v1804, 4
    %v1806 = vrot.slane %v50, 5
    %v1807 = vsel %vm1726, %v1805, %v1806
    %v1808 = vrot.slane %v1806, 4
    %v1809 = vrot.slane %v51, 5
    %v1810 = vsel %vm1726, %v1808, %v1809
    %v1811 = vrot.slane %v52, 5
    %v1812 = vrot.slane %v1811, 4
    %v1813 = vrot.slane %v53, 5
    %v1814 = vsel %vm1726, %v1812, %v1813
    %v1815 = vrot.slane %v1813, 4
    %v1816 = vrot.slane %v54, 5
    %v1817 = vsel %vm1726, %v1815, %v1816
    %v1818 = vrot.slane %v55, 5
    %v1819 = vrot.slane %v1818, 4
    %v1820 = vrot.slane %v56, 5
    %v1821 = vsel %vm1726, %v1819, %v1820
    %v1822 = vrot.slane %v1820, 4
    %v1823 = vrot.slane %v57, 5
    %v1824 = vsel %vm1726, %v1822, %v1823
    %v1825 = vrot.slane %v58, 5
    %v1826 = vrot.slane %v1825, 4
    %v1827 = vrot.slane %v59, 5
    %v1828 = vsel %vm1726, %v1826, %v1827
    %v1829 = vrot.slane %v1827, 4
    %v1830 = vrot.slane %v60, 5
    %v1831 = vsel %vm1726, %v1829, %v1830
    %v1832 = vrot.slane %v61, 5
    %v1833 = vrot.slane %v1832, 4
    %v1834 = vrot.slane %v62, 5
    %v1835 = vsel %vm1726, %v1833, %v1834
    %v1836 = vrot.slane %v1834, 4
    %v1837 = vrot.slane %v63, 5
    %v1838 = vsel %vm1726, %v1836, %v1837
    %v1839 = vrot.slane %v70, 5
    %v1840 = vrot.slane %v1839, 4
    %v1841 = vrot.slane %v71, 5
    %v1842 = vsel %vm1726, %v1840, %v1841
    %v1843 = vrot.slane %v1841, 4
    %v1844 = vrot.slane %v72, 5
    %v1845 = vsel %vm1726, %v1843, %v1844
    %v1846 = vrot.slane %v73, 5
    %v1847 = vrot.slane %v1846, 4
    %v1848 = vrot.slane %v74, 5
    %v1849 = vsel %vm1726, %v1847, %v1848
    %v1850 = vrot.slane %v1848, 4
    %v1851 = vrot.slane %v75, 5
    %v1852 = vsel %vm1726, %v1850, %v1851
    %v1853 = vrot.slane %v76, 5
    %v1854 = vrot.slane %v1853, 4
    %v1855 = vrot.slane %v77, 5
    %v1856 = vsel %vm1726, %v1854, %v1855
    %v1857 = vrot.slane %v1855, 4
    %v1858 = vrot.slane %v78, 5
    %v1859 = vsel %vm1726, %v1857, %v1858
    %v1860 = vrot.slane %v79, 5
    %v1861 = vrot.slane %v1860, 4
    %v1862 = vrot.slane %v80, 5
    %v1863 = vsel %vm1726, %v1861, %v1862
    %v1864 = vrot.slane %v1862, 4
    %v1865 = vrot.slane %v81, 5
    %v1866 = vsel %vm1726, %v1864, %v1865
    %v1867 = vrot.slane %v82, 5
    %v1868 = vrot.slane %v1867, 4
    %v1869 = vrot.slane %v83, 5
    %v1870 = vsel %vm1726, %v1868, %v1869
    %v1871 = vrot.slane %v1869, 4
    %v1872 = vrot.slane %v84, 5
    %v1873 = vsel %vm1726, %v1871, %v1872
    %v1874 = vrot.slane %v85, 5
    %v1875 = vrot.slane %v1874, 4
    %v1876 = vrot.slane %v86, 5
    %v1877 = vsel %vm1726, %v1875, %v1876
    %v1878 = vrot.slane %v1876, 4
    %v1879 = vrot.slane %v87, 5
    %v1880 = vsel %vm1726, %v1878, %v1879
    %v1881 = vrot.slane %v88, 5
    %v1882 = vrot.slane %v1881, 4
    %v1883 = vrot.slane %v89, 5
    %v1884 = vsel %vm1726, %v1882, %v1883
    %v1885 = vrot.slane %v1883, 4
    %v1886 = vrot.slane %v90, 5
    %v1887 = vsel %vm1726, %v1885, %v1886
    %v1888 = vrot.slane %v91, 5
    %v1889 = vrot.slane %v1888, 4
    %v1890 = vrot.slane %v92, 5
    %v1891 = vsel %vm1726, %v1889, %v1890
    %v1892 = vrot.slane %v1890, 4
    %v1893 = vrot.slane %v93, 5
    %v1894 = vsel %vm1726, %v1892, %v1893
    %v1895 = vrot.slane %v94, 5
    %v1896 = vrot.slane %v1895, 4
    %v1897 = vrot.slane %v95, 5
    %v1898 = vsel %vm1726, %v1896, %v1897
    %v1899 = vrot.slane %v1897, 4
    %v1900 = vrot.slane %v96, 5
    %v1901 = vsel %vm1726, %v1899, %v1900
    %v1902 = vrot.slane %v97, 5
    %v1903 = vrot.slane %v1902, 4
    %v1904 = vrot.slane %v98, 5
    %v1905 = vsel %vm1726, %v1903, %v1904
    %v1906 = vrot.slane %v1904, 4
    %v1907 = vrot.slane %v99, 5
    %v1908 = vsel %vm1726, %v1906, %v1907
    %v1909 = vrot.slane %v100, 5
    %v1910 = vrot.slane %v1909, 4
    %v1911 = vrot.slane %v101, 5
    %v1912 = vsel %vm1726, %v1910, %v1911
    %v1913 = vrot.slane %v1911, 4
    %v1914 = vrot.slane %v102, 5
    %v1915 = vsel %vm1726, %v1913, %v1914
    %v1916 = vrot.slane %v103, 5
    %v1917 = vrot.slane %v1916, 4
    %v1918 = vrot.slane %v104, 5
    %v1919 = vsel %vm1726, %v1917, %v1918
    %v1920 = vrot.slane %v1918, 4
    %v1921 = vrot.slane %v105, 5
    %v1922 = vsel %vm1726, %v1920, %v1921
    %v1923 = vrot.slane %v106, 5
    %v1924 = vrot.slane %v1923, 4
    %v1925 = vrot.slane %v107, 5
    %v1926 = vsel %vm1726, %v1924, %v1925
    %v1927 = vrot.slane %v1925, 4
    %v1928 = vrot.slane %v108, 5
    %v1929 = vsel %vm1726, %v1927, %v1928
    %v1930 = vrot.slane %v109, 5
    %v1931 = vrot.slane %v1930, 4
    %v1932 = vrot.slane %v110, 5
    %v1933 = vsel %vm1726, %v1931, %v1932
    %v1934 = vrot.slane %v1932, 4
    %v1935 = vrot.slane %v111, 5
    %v1936 = vsel %vm1726, %v1934, %v1935
    %v1937 = vrot.slane %v112, 5
    %v1938 = vrot.slane %v1937, 4
    %v1939 = vrot.slane %v113, 5
    %v1940 = vsel %vm1726, %v1938, %v1939
    %v1941 = vrot.slane %v1939, 4
    %v1942 = vrot.slane %v114, 5
    %v1943 = vsel %vm1726, %v1941, %v1942
    %v1944 = vrot.slane %v115, 5
    %v1945 = vrot.slane %v1944, 4
    %v1946 = vrot.slane %v116, 5
    %v1947 = vsel %vm1726, %v1945, %v1946
    %v1948 = vrot.slane %v1946, 4
    %v1949 = vrot.slane %v117, 5
    %v1950 = vsel %vm1726, %v1948, %v1949
    %s1951 = scalar_lea.vmem %s1, 4
    %v1952 = vld [vmem:[%s1951] sm:$0x3]
    %v1953 = vunpack.c.l.b16 %v1730
    %v1954 = vunpack.c.l.b16 %v1733
    %v1955 = vunpack.c.l.b16 %v1737
    %v1956 = vunpack.c.l.b16 %v1740
    %v1957 = vunpack.c.l.b16 %v1744
    %v1958 = vunpack.c.l.b16 %v1747
    %v1959 = vunpack.c.l.b16 %v1751
    %v1960 = vunpack.c.l.b16 %v1754
    %v1961 = vunpack.c.l.b16 %v1758
    %v1962 = vunpack.c.l.b16 %v1761
    %v1963 = vunpack.c.l.b16 %v1765
    %v1964 = vunpack.c.l.b16 %v1768
    %v1965 = vunpack.c.l.b16 %v1772
    %v1966 = vunpack.c.l.b16 %v1775
    %v1967 = vunpack.c.l.b16 %v1779
    %v1968 = vunpack.c.l.b16 %v1782
    %v1969 = vunpack.c.l.b16 %v1786
    %v1970 = vunpack.c.l.b16 %v1789
    %v1971 = vunpack.c.l.b16 %v1793
    %v1972 = vunpack.c.l.b16 %v1796
    %v1973 = vunpack.c.l.b16 %v1800
    %v1974 = vunpack.c.l.b16 %v1803
    %v1975 = vunpack.c.l.b16 %v1807
    %v1976 = vunpack.c.l.b16 %v1810
    %v1977 = vunpack.c.l.b16 %v1814
    %v1978 = vunpack.c.l.b16 %v1817
    %v1979 = vunpack.c.l.b16 %v1821
    %v1980 = vunpack.c.l.b16 %v1824
    %v1981 = vunpack.c.l.b16 %v1828
    %v1982 = vunpack.c.l.b16 %v1831
    %v1983 = vunpack.c.l.b16 %v1835
    %v1984 = vunpack.c.l.b16 %v1838
    %v1985 = vunpack.c.l.b16 %v1842
    %v1986 = vunpack.c.l.b16 %v1845
    %v1987 = vunpack.c.l.b16 %v1849
    %v1988 = vunpack.c.l.b16 %v1852
    %v1989 = vunpack.c.l.b16 %v1856
    %v1990 = vunpack.c.l.b16 %v1859
    %v1991 = vunpack.c.l.b16 %v1863
    %v1992 = vunpack.c.l.b16 %v1866
    %v1993 = vunpack.c.l.b16 %v1870
    %v1994 = vunpack.c.l.b16 %v1873
    %v1995 = vunpack.c.l.b16 %v1877
    %v1996 = vunpack.c.l.b16 %v1880
    %v1997 = vunpack.c.l.b16 %v1884
    %v1998 = vunpack.c.l.b16 %v1887
    %v1999 = vunpack.c.l.b16 %v1891
    %v2000 = vunpack.c.l.b16 %v1894
    %v2001 = vunpack.c.l.b16 %v1898
    %v2002 = vunpack.c.l.b16 %v1901
    %v2003 = vunpack.c.l.b16 %v1905
    %v2004 = vunpack.c.l.b16 %v1908
    %v2005 = vunpack.c.l.b16 %v1912
    %v2006 = vunpack.c.l.b16 %v1915
    %v2007 = vunpack.c.l.b16 %v1919
    %v2008 = vunpack.c.l.b16 %v1922
    %v2009 = vunpack.c.l.b16 %v1926
    %v2010 = vunpack.c.l.b16 %v1929
    %v2011 = vunpack.c.l.b16 %v1933
    %v2012 = vunpack.c.l.b16 %v1936
    %v2013 = vunpack.c.l.b16 %v1940
    %v2014 = vunpack.c.l.b16 %v1943
    %v2015 = vunpack.c.l.b16 %v1947
    %v2016 = vunpack.c.l.b16 %v1950
    %v2017 = vpack.c.b16 %v1954, %v1953
    %v2018 = vpack.c.b16 %v1956, %v1955
    %v2019 = vpack.c.b16 %v1958, %v1957
    %v2020 = vpack.c.b16 %v1960, %v1959
    %v2021 = vpack.c.b16 %v1962, %v1961
    %v2022 = vpack.c.b16 %v1964, %v1963
    %v2023 = vpack.c.b16 %v1966, %v1965
    %v2024 = vpack.c.b16 %v1968, %v1967
    %v2025 = vpack.c.b16 %v1970, %v1969
    %v2026 = vpack.c.b16 %v1972, %v1971
    %v2027 = vpack.c.b16 %v1974, %v1973
    %v2028 = vpack.c.b16 %v1976, %v1975
    %v2029 = vpack.c.b16 %v1978, %v1977
    %v2030 = vpack.c.b16 %v1980, %v1979
    %v2031 = vpack.c.b16 %v1982, %v1981
    %v2032 = vpack.c.b16 %v1984, %v1983
    %v2033 = vpack.c.b16 %v1986, %v1985
    %v2034 = vpack.c.b16 %v1988, %v1987
    %v2035 = vpack.c.b16 %v1990, %v1989
    %v2036 = vpack.c.b16 %v1992, %v1991
    %v2037 = vpack.c.b16 %v1994, %v1993
    %v2038 = vpack.c.b16 %v1996, %v1995
    %v2039 = vpack.c.b16 %v1998, %v1997
    %v2040 = vpack.c.b16 %v2000, %v1999
    %v2041 = vpack.c.b16 %v2002, %v2001
    %v2042 = vpack.c.b16 %v2004, %v2003
    %v2043 = vpack.c.b16 %v2006, %v2005
    %v2044 = vpack.c.b16 %v2008, %v2007
    %v2045 = vpack.c.b16 %v2010, %v2009
    %v2046 = vpack.c.b16 %v2012, %v2011
    %v2047 = vpack.c.b16 %v2014, %v2013
    %v2048 = vpack.c.b16 %v2016, %v2015
    %v2050 = vsel %vm994, %v2017, 0
    %v2053 = vsel %vm994, %v2018, 0
    %v2056 = vsel %vm994, %v2019, 0
    %v2059 = vsel %vm994, %v2020, 0
    %v2062 = vsel %vm994, %v2021, 0
    %v2065 = vsel %vm994, %v2022, 0
    %v2068 = vsel %vm994, %v2023, 0
    %v2071 = vsel %vm994, %v2024, 0
    %v2074 = vsel %vm994, %v2025, 0
    %v2077 = vsel %vm994, %v2026, 0
    %v2080 = vsel %vm994, %v2027, 0
    %v2083 = vsel %vm994, %v2028, 0
    %v2086 = vsel %vm994, %v2029, 0
    %v2089 = vsel %vm994, %v2030, 0
    %v2092 = vsel %vm994, %v2031, 0
    %v2095 = vsel %vm994, %v2032, 0
    %v2098 = vsel %vm994, %v2033, 0
    %v2101 = vsel %vm994, %v2034, 0
    %v2104 = vsel %vm994, %v2035, 0
    %v2107 = vsel %vm994, %v2036, 0
    %v2110 = vsel %vm994, %v2037, 0
    %v2113 = vsel %vm994, %v2038, 0
    %v2116 = vsel %vm994, %v2039, 0
    %v2119 = vsel %vm994, %v2040, 0
    %v2122 = vsel %vm994, %v2041, 0
    %v2125 = vsel %vm994, %v2042, 0
    %v2128 = vsel %vm994, %v2043, 0
    %v2131 = vsel %vm994, %v2044, 0
    %v2134 = vsel %vm994, %v2045, 0
    %v2137 = vsel %vm994, %v2046, 0
    %v2140 = vsel %vm994, %v2047, 0
    %v2143 = vsel %vm994, %v2048, 0
    %v2146 = vsel %vm1091, %v1952, 0
    %2148 = vmatpush.bf16.msra.mxu0 0
    %2149 = vmatpush.bf16.msra.mxu0 0
    %2150 = vmatpush.bf16.msra.mxu0 0
    %2151 = vmatpush.bf16.msra.mxu0 0
    %2152 = vmatpush.bf16.msra.mxu0 0
    %2153 = vmatpush.bf16.msra.mxu0 0
    %2154 = vmatpush.bf16.msra.mxu0 0
    %2155 = vmatpush.bf16.msra.mxu0 %v2146
    %2156 = vmatmul.bf16.gmra.mxu0 %v2050
    %v2157 = vpop.f32.mrf.mxu0
    %v2158 = vadd.f32 0.0, %v2157
    %v2159 = vpop.f32.mrf.mxu0
    %v2160 = vadd.f32 0.0, %v2159
    %2161 = vmatmul.bf16.gmra.mxu0 %v2053
    %v2162 = vpop.f32.mrf.mxu0
    %v2163 = vadd.f32 0.0, %v2162
    %v2164 = vpop.f32.mrf.mxu0
    %v2165 = vadd.f32 0.0, %v2164
    %2166 = vmatmul.bf16.gmra.mxu0 %v2056
    %v2167 = vpop.f32.mrf.mxu0
    %v2168 = vadd.f32 0.0, %v2167
    %v2169 = vpop.f32.mrf.mxu0
    %v2170 = vadd.f32 0.0, %v2169
    %2171 = vmatmul.bf16.gmra.mxu0 %v2059
    %v2172 = vpop.f32.mrf.mxu0
    %v2173 = vadd.f32 0.0, %v2172
    %v2174 = vpop.f32.mrf.mxu0
    %v2175 = vadd.f32 0.0, %v2174
    %2176 = vmatmul.bf16.gmra.mxu0 %v2062
    %v2177 = vpop.f32.mrf.mxu0
    %v2178 = vadd.f32 0.0, %v2177
    %v2179 = vpop.f32.mrf.mxu0
    %v2180 = vadd.f32 0.0, %v2179
    %2181 = vmatmul.bf16.gmra.mxu0 %v2065
    %v2182 = vpop.f32.mrf.mxu0
    %v2183 = vadd.f32 0.0, %v2182
    %v2184 = vpop.f32.mrf.mxu0
    %v2185 = vadd.f32 0.0, %v2184
    %2186 = vmatmul.bf16.gmra.mxu0 %v2068
    %v2187 = vpop.f32.mrf.mxu0
    %v2188 = vadd.f32 0.0, %v2187
    %v2189 = vpop.f32.mrf.mxu0
    %v2190 = vadd.f32 0.0, %v2189
    %2191 = vmatmul.bf16.gmra.mxu0 %v2071
    %v2192 = vpop.f32.mrf.mxu0
    %v2193 = vadd.f32 0.0, %v2192
    %v2194 = vpop.f32.mrf.mxu0
    %v2195 = vadd.f32 0.0, %v2194
    %2196 = vmatmul.bf16.gmra.mxu0 %v2074
    %v2197 = vpop.f32.mrf.mxu0
    %v2198 = vadd.f32 0.0, %v2197
    %v2199 = vpop.f32.mrf.mxu0
    %v2200 = vadd.f32 0.0, %v2199
    %2201 = vmatmul.bf16.gmra.mxu0 %v2077
    %v2202 = vpop.f32.mrf.mxu0
    %v2203 = vadd.f32 0.0, %v2202
    %v2204 = vpop.f32.mrf.mxu0
    %v2205 = vadd.f32 0.0, %v2204
    %2206 = vmatmul.bf16.gmra.mxu0 %v2080
    %v2207 = vpop.f32.mrf.mxu0
    %v2208 = vadd.f32 0.0, %v2207
    %v2209 = vpop.f32.mrf.mxu0
    %v2210 = vadd.f32 0.0, %v2209
    %2211 = vmatmul.bf16.gmra.mxu0 %v2083
    %v2212 = vpop.f32.mrf.mxu0
    %v2213 = vadd.f32 0.0, %v2212
    %v2214 = vpop.f32.mrf.mxu0
    %v2215 = vadd.f32 0.0, %v2214
    %2216 = vmatmul.bf16.gmra.mxu0 %v2086
    %v2217 = vpop.f32.mrf.mxu0
    %v2218 = vadd.f32 0.0, %v2217
    %v2219 = vpop.f32.mrf.mxu0
    %v2220 = vadd.f32 0.0, %v2219
    %2221 = vmatmul.bf16.gmra.mxu0 %v2089
    %v2222 = vpop.f32.mrf.mxu0
    %v2223 = vadd.f32 0.0, %v2222
    %v2224 = vpop.f32.mrf.mxu0
    %v2225 = vadd.f32 0.0, %v2224
    %2226 = vmatmul.bf16.gmra.mxu0 %v2092
    %v2227 = vpop.f32.mrf.mxu0
    %v2228 = vadd.f32 0.0, %v2227
    %v2229 = vpop.f32.mrf.mxu0
    %v2230 = vadd.f32 0.0, %v2229
    %2231 = vmatmul.bf16.gmra.mxu0 %v2095
    %v2232 = vpop.f32.mrf.mxu0
    %v2233 = vadd.f32 0.0, %v2232
    %v2234 = vpop.f32.mrf.mxu0
    %v2235 = vadd.f32 0.0, %v2234
    %2236 = vmatmul.bf16.gmra.mxu0 %v2098
    %v2237 = vpop.f32.mrf.mxu0
    %v2238 = vadd.f32 0.0, %v2237
    %v2239 = vpop.f32.mrf.mxu0
    %v2240 = vadd.f32 0.0, %v2239
    %2241 = vmatmul.bf16.gmra.mxu0 %v2101
    %v2242 = vpop.f32.mrf.mxu0
    %v2243 = vadd.f32 0.0, %v2242
    %v2244 = vpop.f32.mrf.mxu0
    %v2245 = vadd.f32 0.0, %v2244
    %2246 = vmatmul.bf16.gmra.mxu0 %v2104
    %v2247 = vpop.f32.mrf.mxu0
    %v2248 = vadd.f32 0.0, %v2247
    %v2249 = vpop.f32.mrf.mxu0
    %v2250 = vadd.f32 0.0, %v2249
    %2251 = vmatmul.bf16.gmra.mxu0 %v2107
    %v2252 = vpop.f32.mrf.mxu0
    %v2253 = vadd.f32 0.0, %v2252
    %v2254 = vpop.f32.mrf.mxu0
    %v2255 = vadd.f32 0.0, %v2254
    %2256 = vmatmul.bf16.gmra.mxu0 %v2110
    %v2257 = vpop.f32.mrf.mxu0
    %v2258 = vadd.f32 0.0, %v2257
    %v2259 = vpop.f32.mrf.mxu0
    %v2260 = vadd.f32 0.0, %v2259
    %2261 = vmatmul.bf16.gmra.mxu0 %v2113
    %v2262 = vpop.f32.mrf.mxu0
    %v2263 = vadd.f32 0.0, %v2262
    %v2264 = vpop.f32.mrf.mxu0
    %v2265 = vadd.f32 0.0, %v2264
    %2266 = vmatmul.bf16.gmra.mxu0 %v2116
    %v2267 = vpop.f32.mrf.mxu0
    %v2268 = vadd.f32 0.0, %v2267
    %v2269 = vpop.f32.mrf.mxu0
    %v2270 = vadd.f32 0.0, %v2269
    %2271 = vmatmul.bf16.gmra.mxu0 %v2119
    %v2272 = vpop.f32.mrf.mxu0
    %v2273 = vadd.f32 0.0, %v2272
    %v2274 = vpop.f32.mrf.mxu0
    %v2275 = vadd.f32 0.0, %v2274
    %2276 = vmatmul.bf16.gmra.mxu0 %v2122
    %v2277 = vpop.f32.mrf.mxu0
    %v2278 = vadd.f32 0.0, %v2277
    %v2279 = vpop.f32.mrf.mxu0
    %v2280 = vadd.f32 0.0, %v2279
    %2281 = vmatmul.bf16.gmra.mxu0 %v2125
    %v2282 = vpop.f32.mrf.mxu0
    %v2283 = vadd.f32 0.0, %v2282
    %v2284 = vpop.f32.mrf.mxu0
    %v2285 = vadd.f32 0.0, %v2284
    %2286 = vmatmul.bf16.gmra.mxu0 %v2128
    %v2287 = vpop.f32.mrf.mxu0
    %v2288 = vadd.f32 0.0, %v2287
    %v2289 = vpop.f32.mrf.mxu0
    %v2290 = vadd.f32 0.0, %v2289
    %2291 = vmatmul.bf16.gmra.mxu0 %v2131
    %v2292 = vpop.f32.mrf.mxu0
    %v2293 = vadd.f32 0.0, %v2292
    %v2294 = vpop.f32.mrf.mxu0
    %v2295 = vadd.f32 0.0, %v2294
    %2296 = vmatmul.bf16.gmra.mxu0 %v2134
    %v2297 = vpop.f32.mrf.mxu0
    %v2298 = vadd.f32 0.0, %v2297
    %v2299 = vpop.f32.mrf.mxu0
    %v2300 = vadd.f32 0.0, %v2299
    %2301 = vmatmul.bf16.gmra.mxu0 %v2137
    %v2302 = vpop.f32.mrf.mxu0
    %v2303 = vadd.f32 0.0, %v2302
    %v2304 = vpop.f32.mrf.mxu0
    %v2305 = vadd.f32 0.0, %v2304
    %2306 = vmatmul.bf16.gmra.mxu0 %v2140
    %v2307 = vpop.f32.mrf.mxu0
    %v2308 = vadd.f32 0.0, %v2307
    %v2309 = vpop.f32.mrf.mxu0
    %v2310 = vadd.f32 0.0, %v2309
    %2311 = vmatmul.bf16.gmra.mxu0 %v2143
    %v2312 = vpop.f32.mrf.mxu0
    %v2313 = vadd.f32 0.0, %v2312
    %v2314 = vpop.f32.mrf.mxu0
    %v2315 = vadd.f32 0.0, %v2314
    %2316 = vdwg.mxu0
    %v2317 = vadd.f32 %v1533, %v2158
    %v2318 = vadd.f32 %v1535, %v2160
    %v2319 = vadd.f32 %v1538, %v2163
    %v2320 = vadd.f32 %v1540, %v2165
    %v2321 = vadd.f32 %v1543, %v2168
    %v2322 = vadd.f32 %v1545, %v2170
    %v2323 = vadd.f32 %v1548, %v2173
    %v2324 = vadd.f32 %v1550, %v2175
    %v2325 = vadd.f32 %v1553, %v2178
    %v2326 = vadd.f32 %v1555, %v2180
    %v2327 = vadd.f32 %v1558, %v2183
    %v2328 = vadd.f32 %v1560, %v2185
    %v2329 = vadd.f32 %v1563, %v2188
    %v2330 = vadd.f32 %v1565, %v2190
    %v2331 = vadd.f32 %v1568, %v2193
    %v2332 = vadd.f32 %v1570, %v2195
    %v2333 = vadd.f32 %v1573, %v2198
    %v2334 = vadd.f32 %v1575, %v2200
    %v2335 = vadd.f32 %v1578, %v2203
    %v2336 = vadd.f32 %v1580, %v2205
    %v2337 = vadd.f32 %v1583, %v2208
    %v2338 = vadd.f32 %v1585, %v2210
    %v2339 = vadd.f32 %v1588, %v2213
    %v2340 = vadd.f32 %v1590, %v2215
    %v2341 = vadd.f32 %v1593, %v2218
    %v2342 = vadd.f32 %v1595, %v2220
    %v2343 = vadd.f32 %v1598, %v2223
    %v2344 = vadd.f32 %v1600, %v2225
    %v2345 = vadd.f32 %v1603, %v2228
    %v2346 = vadd.f32 %v1605, %v2230
    %v2347 = vadd.f32 %v1608, %v2233
    %v2348 = vadd.f32 %v1610, %v2235
    %v2349 = vadd.f32 %v1613, %v2238
    %v2350 = vadd.f32 %v1615, %v2240
    %v2351 = vadd.f32 %v1618, %v2243
    %v2352 = vadd.f32 %v1620, %v2245
    %v2353 = vadd.f32 %v1623, %v2248
    %v2354 = vadd.f32 %v1625, %v2250
    %v2355 = vadd.f32 %v1628, %v2253
    %v2356 = vadd.f32 %v1630, %v2255
    %v2357 = vadd.f32 %v1633, %v2258
    %v2358 = vadd.f32 %v1635, %v2260
    %v2359 = vadd.f32 %v1638, %v2263
    %v2360 = vadd.f32 %v1640, %v2265
    %v2361 = vadd.f32 %v1643, %v2268
    %v2362 = vadd.f32 %v1645, %v2270
    %v2363 = vadd.f32 %v1648, %v2273
    %v2364 = vadd.f32 %v1650, %v2275
    %v2365 = vadd.f32 %v1653, %v2278
    %v2366 = vadd.f32 %v1655, %v2280
    %v2367 = vadd.f32 %v1658, %v2283
    %v2368 = vadd.f32 %v1660, %v2285
    %v2369 = vadd.f32 %v1663, %v2288
    %v2370 = vadd.f32 %v1665, %v2290
    %v2371 = vadd.f32 %v1668, %v2293
    %v2372 = vadd.f32 %v1670, %v2295
    %v2373 = vadd.f32 %v1673, %v2298
    %v2374 = vadd.f32 %v1675, %v2300
    %v2375 = vadd.f32 %v1678, %v2303
    %v2376 = vadd.f32 %v1680, %v2305
    %v2377 = vadd.f32 %v1683, %v2308
    %v2378 = vadd.f32 %v1685, %v2310
    %v2379 = vadd.f32 %v1688, %v2313
    %v2380 = vadd.f32 %v1690, %v2315
    %s2381 = scalar_lea.vmem %s1, 6
    %v2382 = vld [vmem:[%s2381] sm:$0x3]
    %v2387 = vunpack.c.l.b16 %v64
    %v2388 = vunpack.c.l.b16 %v65
    %v2389 = vunpack.c.l.b16 %v118
    %v2390 = vunpack.c.l.b16 %v119
    %v2391 = vpack.c.b16 %v2388, %v2387
    %v2392 = vpack.c.b16 %v2390, %v2389
    %v2394 = vsel %vm994, %v2391, 0
    %v2397 = vsel %vm994, %v2392, 0
    %v2400 = vsel %vm1091, %v2382, 0
    %2402 = vmatpush.bf16.msra.mxu0 0
    %2403 = vmatpush.bf16.msra.mxu0 0
    %2404 = vmatpush.bf16.msra.mxu0 0
    %2405 = vmatpush.bf16.msra.mxu0 0
    %2406 = vmatpush.bf16.msra.mxu0 0
    %2407 = vmatpush.bf16.msra.mxu0 0
    %2408 = vmatpush.bf16.msra.mxu0 0
    %2409 = vmatpush.bf16.msra.mxu0 %v2400
    %2410 = vmatmul.bf16.gmra.mxu0 %v1428
    %v2411 = vpop.f32.mrf.mxu0
    %v2412 = vadd.f32 0.0, %v2411
    %v2413 = vpop.f32.mrf.mxu0
    %v2414 = vadd.f32 0.0, %v2413
    %2415 = vmatmul.bf16.gmra.mxu0 %v1431
    %v2416 = vpop.f32.mrf.mxu0
    %v2417 = vadd.f32 0.0, %v2416
    %v2418 = vpop.f32.mrf.mxu0
    %v2419 = vadd.f32 0.0, %v2418
    %2420 = vmatmul.bf16.gmra.mxu0 %v1434
    %v2421 = vpop.f32.mrf.mxu0
    %v2422 = vadd.f32 0.0, %v2421
    %v2423 = vpop.f32.mrf.mxu0
    %v2424 = vadd.f32 0.0, %v2423
    %2425 = vmatmul.bf16.gmra.mxu0 %v1437
    %v2426 = vpop.f32.mrf.mxu0
    %v2427 = vadd.f32 0.0, %v2426
    %v2428 = vpop.f32.mrf.mxu0
    %v2429 = vadd.f32 0.0, %v2428
    %2430 = vmatmul.bf16.gmra.mxu0 %v1440
    %v2431 = vpop.f32.mrf.mxu0
    %v2432 = vadd.f32 0.0, %v2431
    %v2433 = vpop.f32.mrf.mxu0
    %v2434 = vadd.f32 0.0, %v2433
    %2435 = vmatmul.bf16.gmra.mxu0 %v1443
    %v2436 = vpop.f32.mrf.mxu0
    %v2437 = vadd.f32 0.0, %v2436
    %v2438 = vpop.f32.mrf.mxu0
    %v2439 = vadd.f32 0.0, %v2438
    %2440 = vmatmul.bf16.gmra.mxu0 %v1446
    %v2441 = vpop.f32.mrf.mxu0
    %v2442 = vadd.f32 0.0, %v2441
    %v2443 = vpop.f32.mrf.mxu0
    %v2444 = vadd.f32 0.0, %v2443
    %2445 = vmatmul.bf16.gmra.mxu0 %v1449
    %v2446 = vpop.f32.mrf.mxu0
    %v2447 = vadd.f32 0.0, %v2446
    %v2448 = vpop.f32.mrf.mxu0
    %v2449 = vadd.f32 0.0, %v2448
    %2450 = vmatmul.bf16.gmra.mxu0 %v1452
    %v2451 = vpop.f32.mrf.mxu0
    %v2452 = vadd.f32 0.0, %v2451
    %v2453 = vpop.f32.mrf.mxu0
    %v2454 = vadd.f32 0.0, %v2453
    %2455 = vmatmul.bf16.gmra.mxu0 %v1455
    %v2456 = vpop.f32.mrf.mxu0
    %v2457 = vadd.f32 0.0, %v2456
    %v2458 = vpop.f32.mrf.mxu0
    %v2459 = vadd.f32 0.0, %v2458
    %2460 = vmatmul.bf16.gmra.mxu0 %v1458
    %v2461 = vpop.f32.mrf.mxu0
    %v2462 = vadd.f32 0.0, %v2461
    %v2463 = vpop.f32.mrf.mxu0
    %v2464 = vadd.f32 0.0, %v2463
    %2465 = vmatmul.bf16.gmra.mxu0 %v1461
    %v2466 = vpop.f32.mrf.mxu0
    %v2467 = vadd.f32 0.0, %v2466
    %v2468 = vpop.f32.mrf.mxu0
    %v2469 = vadd.f32 0.0, %v2468
    %2470 = vmatmul.bf16.gmra.mxu0 %v1464
    %v2471 = vpop.f32.mrf.mxu0
    %v2472 = vadd.f32 0.0, %v2471
    %v2473 = vpop.f32.mrf.mxu0
    %v2474 = vadd.f32 0.0, %v2473
    %2475 = vmatmul.bf16.gmra.mxu0 %v1467
    %v2476 = vpop.f32.mrf.mxu0
    %v2477 = vadd.f32 0.0, %v2476
    %v2478 = vpop.f32.mrf.mxu0
    %v2479 = vadd.f32 0.0, %v2478
    %2480 = vmatmul.bf16.gmra.mxu0 %v1470
    %v2481 = vpop.f32.mrf.mxu0
    %v2482 = vadd.f32 0.0, %v2481
    %v2483 = vpop.f32.mrf.mxu0
    %v2484 = vadd.f32 0.0, %v2483
    %2485 = vmatmul.bf16.gmra.mxu0 %v2394
    %v2486 = vpop.f32.mrf.mxu0
    %v2487 = vadd.f32 0.0, %v2486
    %v2488 = vpop.f32.mrf.mxu0
    %v2489 = vadd.f32 0.0, %v2488
    %2490 = vmatmul.bf16.gmra.mxu0 %v1476
    %v2491 = vpop.f32.mrf.mxu0
    %v2492 = vadd.f32 0.0, %v2491
    %v2493 = vpop.f32.mrf.mxu0
    %v2494 = vadd.f32 0.0, %v2493
    %2495 = vmatmul.bf16.gmra.mxu0 %v1479
    %v2496 = vpop.f32.mrf.mxu0
    %v2497 = vadd.f32 0.0, %v2496
    %v2498 = vpop.f32.mrf.mxu0
    %v2499 = vadd.f32 0.0, %v2498
    %2500 = vmatmul.bf16.gmra.mxu0 %v1482
    %v2501 = vpop.f32.mrf.mxu0
    %v2502 = vadd.f32 0.0, %v2501
    %v2503 = vpop.f32.mrf.mxu0
    %v2504 = vadd.f32 0.0, %v2503
    %2505 = vmatmul.bf16.gmra.mxu0 %v1485
    %v2506 = vpop.f32.mrf.mxu0
    %v2507 = vadd.f32 0.0, %v2506
    %v2508 = vpop.f32.mrf.mxu0
    %v2509 = vadd.f32 0.0, %v2508
    %2510 = vmatmul.bf16.gmra.mxu0 %v1488
    %v2511 = vpop.f32.mrf.mxu0
    %v2512 = vadd.f32 0.0, %v2511
    %v2513 = vpop.f32.mrf.mxu0
    %v2514 = vadd.f32 0.0, %v2513
    %2515 = vmatmul.bf16.gmra.mxu0 %v1491
    %v2516 = vpop.f32.mrf.mxu0
    %v2517 = vadd.f32 0.0, %v2516
    %v2518 = vpop.f32.mrf.mxu0
    %v2519 = vadd.f32 0.0, %v2518
    %2520 = vmatmul.bf16.gmra.mxu0 %v1494
    %v2521 = vpop.f32.mrf.mxu0
    %v2522 = vadd.f32 0.0, %v2521
    %v2523 = vpop.f32.mrf.mxu0
    %v2524 = vadd.f32 0.0, %v2523
    %2525 = vmatmul.bf16.gmra.mxu0 %v1497
    %v2526 = vpop.f32.mrf.mxu0
    %v2527 = vadd.f32 0.0, %v2526
    %v2528 = vpop.f32.mrf.mxu0
    %v2529 = vadd.f32 0.0, %v2528
    %2530 = vmatmul.bf16.gmra.mxu0 %v1500
    %v2531 = vpop.f32.mrf.mxu0
    %v2532 = vadd.f32 0.0, %v2531
    %v2533 = vpop.f32.mrf.mxu0
    %v2534 = vadd.f32 0.0, %v2533
    %2535 = vmatmul.bf16.gmra.mxu0 %v1503
    %v2536 = vpop.f32.mrf.mxu0
    %v2537 = vadd.f32 0.0, %v2536
    %v2538 = vpop.f32.mrf.mxu0
    %v2539 = vadd.f32 0.0, %v2538
    %2540 = vmatmul.bf16.gmra.mxu0 %v1506
    %v2541 = vpop.f32.mrf.mxu0
    %v2542 = vadd.f32 0.0, %v2541
    %v2543 = vpop.f32.mrf.mxu0
    %v2544 = vadd.f32 0.0, %v2543
    %2545 = vmatmul.bf16.gmra.mxu0 %v1509
    %v2546 = vpop.f32.mrf.mxu0
    %v2547 = vadd.f32 0.0, %v2546
    %v2548 = vpop.f32.mrf.mxu0
    %v2549 = vadd.f32 0.0, %v2548
    %2550 = vmatmul.bf16.gmra.mxu0 %v1512
    %v2551 = vpop.f32.mrf.mxu0
    %v2552 = vadd.f32 0.0, %v2551
    %v2553 = vpop.f32.mrf.mxu0
    %v2554 = vadd.f32 0.0, %v2553
    %2555 = vmatmul.bf16.gmra.mxu0 %v1515
    %v2556 = vpop.f32.mrf.mxu0
    %v2557 = vadd.f32 0.0, %v2556
    %v2558 = vpop.f32.mrf.mxu0
    %v2559 = vadd.f32 0.0, %v2558
    %2560 = vmatmul.bf16.gmra.mxu0 %v1518
    %v2561 = vpop.f32.mrf.mxu0
    %v2562 = vadd.f32 0.0, %v2561
    %v2563 = vpop.f32.mrf.mxu0
    %v2564 = vadd.f32 0.0, %v2563
    %2565 = vmatmul.bf16.gmra.mxu0 %v2397
    %v2566 = vpop.f32.mrf.mxu0
    %v2567 = vadd.f32 0.0, %v2566
    %v2568 = vpop.f32.mrf.mxu0
    %v2569 = vadd.f32 0.0, %v2568
    %2570 = vdwg.mxu0
    %v2571 = vadd.f32 %v2317, %v2412
    %v2572 = vadd.f32 %v2318, %v2414
    %v2573 = vadd.f32 %v2319, %v2417
    %v2574 = vadd.f32 %v2320, %v2419
    %v2575 = vadd.f32 %v2321, %v2422
    %v2576 = vadd.f32 %v2322, %v2424
    %v2577 = vadd.f32 %v2323, %v2427
    %v2578 = vadd.f32 %v2324, %v2429
    %v2579 = vadd.f32 %v2325, %v2432
    %v2580 = vadd.f32 %v2326, %v2434
    %v2581 = vadd.f32 %v2327, %v2437
    %v2582 = vadd.f32 %v2328, %v2439
    %v2583 = vadd.f32 %v2329, %v2442
    %v2584 = vadd.f32 %v2330, %v2444
    %v2585 = vadd.f32 %v2331, %v2447
    %v2586 = vadd.f32 %v2332, %v2449
    %v2587 = vadd.f32 %v2333, %v2452
    %v2588 = vadd.f32 %v2334, %v2454
    %v2589 = vadd.f32 %v2335, %v2457
    %v2590 = vadd.f32 %v2336, %v2459
    %v2591 = vadd.f32 %v2337, %v2462
    %v2592 = vadd.f32 %v2338, %v2464
    %v2593 = vadd.f32 %v2339, %v2467
    %v2594 = vadd.f32 %v2340, %v2469
    %v2595 = vadd.f32 %v2341, %v2472
    %v2596 = vadd.f32 %v2342, %v2474
    %v2597 = vadd.f32 %v2343, %v2477
    %v2598 = vadd.f32 %v2344, %v2479
    %v2599 = vadd.f32 %v2345, %v2482
    %v2600 = vadd.f32 %v2346, %v2484
    %v2601 = vadd.f32 %v2347, %v2487
    %v2602 = vadd.f32 %v2348, %v2489
    %v2603 = vadd.f32 %v2349, %v2492
    %v2604 = vadd.f32 %v2350, %v2494
    %v2605 = vadd.f32 %v2351, %v2497
    %v2606 = vadd.f32 %v2352, %v2499
    %v2607 = vadd.f32 %v2353, %v2502
    %v2608 = vadd.f32 %v2354, %v2504
    %v2609 = vadd.f32 %v2355, %v2507
    %v2610 = vadd.f32 %v2356, %v2509
    %v2611 = vadd.f32 %v2357, %v2512
    %v2612 = vadd.f32 %v2358, %v2514
    %v2613 = vadd.f32 %v2359, %v2517
    %v2614 = vadd.f32 %v2360, %v2519
    %v2615 = vadd.f32 %v2361, %v2522
    %v2616 = vadd.f32 %v2362, %v2524
    %v2617 = vadd.f32 %v2363, %v2527
    %v2618 = vadd.f32 %v2364, %v2529
    %v2619 = vadd.f32 %v2365, %v2532
    %v2620 = vadd.f32 %v2366, %v2534
    %v2621 = vadd.f32 %v2367, %v2537
    %v2622 = vadd.f32 %v2368, %v2539
    %v2623 = vadd.f32 %v2369, %v2542
    %v2624 = vadd.f32 %v2370, %v2544
    %v2625 = vadd.f32 %v2371, %v2547
    %v2626 = vadd.f32 %v2372, %v2549
    %v2627 = vadd.f32 %v2373, %v2552
    %v2628 = vadd.f32 %v2374, %v2554
    %v2629 = vadd.f32 %v2375, %v2557
    %v2630 = vadd.f32 %v2376, %v2559
    %v2631 = vadd.f32 %v2377, %v2562
    %v2632 = vadd.f32 %v2378, %v2564
    %v2633 = vadd.f32 %v2379, %v2567
    %v2634 = vadd.f32 %v2380, %v2569
    %v2636 = vshrl.u32 %v64, 16
    %v2638 = vrot.slane %v2636, 4
    %v2639 = vshll.u32 %v64, 16
    %v2641 = vrot.slane %v2639, 5
    %v2642 = vor.u32 %v2638, %v2641
    %v2643 = vrot.slane %v2642, 4
    %v2645 = vshll.u32 %v65, 16
    %v2647 = vrot.slane %v2645, 5
    %v2648 = vsel %vm127, %v2643, %v2647
    %v2649 = vshrl.u32 %v65, 16
    %v2651 = vrot.slane %v2649, 4
    %v2652 = vor.u32 %v2651, %v2647
    %v2653 = vrot.slane %v2652, 4
    %v2655 = vshll.u32 %v66, 16
    %v2657 = vrot.slane %v2655, 5
    %v2658 = vsel %vm127, %v2653, %v2657
    %v2660 = vshrl.u32 %v118, 16
    %v2662 = vrot.slane %v2660, 4
    %v2663 = vshll.u32 %v118, 16
    %v2665 = vrot.slane %v2663, 5
    %v2666 = vor.u32 %v2662, %v2665
    %v2667 = vrot.slane %v2666, 4
    %v2669 = vshll.u32 %v119, 16
    %v2671 = vrot.slane %v2669, 5
    %v2672 = vsel %vm127, %v2667, %v2671
    %v2673 = vshrl.u32 %v119, 16
    %v2675 = vrot.slane %v2673, 4
    %v2676 = vor.u32 %v2675, %v2671
    %v2677 = vrot.slane %v2676, 4
    %v2679 = vshll.u32 %v120, 16
    %v2681 = vrot.slane %v2679, 5
    %v2682 = vsel %vm127, %v2677, %v2681
    %s2683 = scalar_lea.vmem %s1, 8
    %v2684 = vld [vmem:[%s2683] sm:$0x3]
    %v2685 = vunpack.c.l.b16 %v2648
    %v2686 = vunpack.c.l.b16 %v2658
    %v2687 = vunpack.c.l.b16 %v2672
    %v2688 = vunpack.c.l.b16 %v2682
    %v2689 = vpack.c.b16 %v2686, %v2685
    %v2690 = vpack.c.b16 %v2688, %v2687
    %v2692 = vsel %vm994, %v2689, 0
    %v2695 = vsel %vm994, %v2690, 0
    %v2698 = vsel %vm1091, %v2684, 0
    %2700 = vmatpush.bf16.msra.mxu0 0
    %2701 = vmatpush.bf16.msra.mxu0 0
    %2702 = vmatpush.bf16.msra.mxu0 0
    %2703 = vmatpush.bf16.msra.mxu0 0
    %2704 = vmatpush.bf16.msra.mxu0 0
    %2705 = vmatpush.bf16.msra.mxu0 0
    %2706 = vmatpush.bf16.msra.mxu0 0
    %2707 = vmatpush.bf16.msra.mxu0 %v2698
    %2708 = vmatmul.bf16.gmra.mxu0 %v999
    %v2709 = vpop.f32.mrf.mxu0
    %v2710 = vadd.f32 0.0, %v2709
    %v2711 = vpop.f32.mrf.mxu0
    %v2712 = vadd.f32 0.0, %v2711
    %2713 = vmatmul.bf16.gmra.mxu0 %v1002
    %v2714 = vpop.f32.mrf.mxu0
    %v2715 = vadd.f32 0.0, %v2714
    %v2716 = vpop.f32.mrf.mxu0
    %v2717 = vadd.f32 0.0, %v2716
    %2718 = vmatmul.bf16.gmra.mxu0 %v1005
    %v2719 = vpop.f32.mrf.mxu0
    %v2720 = vadd.f32 0.0, %v2719
    %v2721 = vpop.f32.mrf.mxu0
    %v2722 = vadd.f32 0.0, %v2721
    %2723 = vmatmul.bf16.gmra.mxu0 %v1008
    %v2724 = vpop.f32.mrf.mxu0
    %v2725 = vadd.f32 0.0, %v2724
    %v2726 = vpop.f32.mrf.mxu0
    %v2727 = vadd.f32 0.0, %v2726
    %2728 = vmatmul.bf16.gmra.mxu0 %v1011
    %v2729 = vpop.f32.mrf.mxu0
    %v2730 = vadd.f32 0.0, %v2729
    %v2731 = vpop.f32.mrf.mxu0
    %v2732 = vadd.f32 0.0, %v2731
    %2733 = vmatmul.bf16.gmra.mxu0 %v1014
    %v2734 = vpop.f32.mrf.mxu0
    %v2735 = vadd.f32 0.0, %v2734
    %v2736 = vpop.f32.mrf.mxu0
    %v2737 = vadd.f32 0.0, %v2736
    %2738 = vmatmul.bf16.gmra.mxu0 %v1017
    %v2739 = vpop.f32.mrf.mxu0
    %v2740 = vadd.f32 0.0, %v2739
    %v2741 = vpop.f32.mrf.mxu0
    %v2742 = vadd.f32 0.0, %v2741
    %2743 = vmatmul.bf16.gmra.mxu0 %v1020
    %v2744 = vpop.f32.mrf.mxu0
    %v2745 = vadd.f32 0.0, %v2744
    %v2746 = vpop.f32.mrf.mxu0
    %v2747 = vadd.f32 0.0, %v2746
    %2748 = vmatmul.bf16.gmra.mxu0 %v1023
    %v2749 = vpop.f32.mrf.mxu0
    %v2750 = vadd.f32 0.0, %v2749
    %v2751 = vpop.f32.mrf.mxu0
    %v2752 = vadd.f32 0.0, %v2751
    %2753 = vmatmul.bf16.gmra.mxu0 %v1026
    %v2754 = vpop.f32.mrf.mxu0
    %v2755 = vadd.f32 0.0, %v2754
    %v2756 = vpop.f32.mrf.mxu0
    %v2757 = vadd.f32 0.0, %v2756
    %2758 = vmatmul.bf16.gmra.mxu0 %v1029
    %v2759 = vpop.f32.mrf.mxu0
    %v2760 = vadd.f32 0.0, %v2759
    %v2761 = vpop.f32.mrf.mxu0
    %v2762 = vadd.f32 0.0, %v2761
    %2763 = vmatmul.bf16.gmra.mxu0 %v1032
    %v2764 = vpop.f32.mrf.mxu0
    %v2765 = vadd.f32 0.0, %v2764
    %v2766 = vpop.f32.mrf.mxu0
    %v2767 = vadd.f32 0.0, %v2766
    %2768 = vmatmul.bf16.gmra.mxu0 %v1035
    %v2769 = vpop.f32.mrf.mxu0
    %v2770 = vadd.f32 0.0, %v2769
    %v2771 = vpop.f32.mrf.mxu0
    %v2772 = vadd.f32 0.0, %v2771
    %2773 = vmatmul.bf16.gmra.mxu0 %v1038
    %v2774 = vpop.f32.mrf.mxu0
    %v2775 = vadd.f32 0.0, %v2774
    %v2776 = vpop.f32.mrf.mxu0
    %v2777 = vadd.f32 0.0, %v2776
    %2778 = vmatmul.bf16.gmra.mxu0 %v1041
    %v2779 = vpop.f32.mrf.mxu0
    %v2780 = vadd.f32 0.0, %v2779
    %v2781 = vpop.f32.mrf.mxu0
    %v2782 = vadd.f32 0.0, %v2781
    %2783 = vmatmul.bf16.gmra.mxu0 %v2692
    %v2784 = vpop.f32.mrf.mxu0
    %v2785 = vadd.f32 0.0, %v2784
    %v2786 = vpop.f32.mrf.mxu0
    %v2787 = vadd.f32 0.0, %v2786
    %2788 = vmatmul.bf16.gmra.mxu0 %v1047
    %v2789 = vpop.f32.mrf.mxu0
    %v2790 = vadd.f32 0.0, %v2789
    %v2791 = vpop.f32.mrf.mxu0
    %v2792 = vadd.f32 0.0, %v2791
    %2793 = vmatmul.bf16.gmra.mxu0 %v1050
    %v2794 = vpop.f32.mrf.mxu0
    %v2795 = vadd.f32 0.0, %v2794
    %v2796 = vpop.f32.mrf.mxu0
    %v2797 = vadd.f32 0.0, %v2796
    %2798 = vmatmul.bf16.gmra.mxu0 %v1053
    %v2799 = vpop.f32.mrf.mxu0
    %v2800 = vadd.f32 0.0, %v2799
    %v2801 = vpop.f32.mrf.mxu0
    %v2802 = vadd.f32 0.0, %v2801
    %2803 = vmatmul.bf16.gmra.mxu0 %v1056
    %v2804 = vpop.f32.mrf.mxu0
    %v2805 = vadd.f32 0.0, %v2804
    %v2806 = vpop.f32.mrf.mxu0
    %v2807 = vadd.f32 0.0, %v2806
    %2808 = vmatmul.bf16.gmra.mxu0 %v1059
    %v2809 = vpop.f32.mrf.mxu0
    %v2810 = vadd.f32 0.0, %v2809
    %v2811 = vpop.f32.mrf.mxu0
    %v2812 = vadd.f32 0.0, %v2811
    %2813 = vmatmul.bf16.gmra.mxu0 %v1062
    %v2814 = vpop.f32.mrf.mxu0
    %v2815 = vadd.f32 0.0, %v2814
    %v2816 = vpop.f32.mrf.mxu0
    %v2817 = vadd.f32 0.0, %v2816
    %2818 = vmatmul.bf16.gmra.mxu0 %v1065
    %v2819 = vpop.f32.mrf.mxu0
    %v2820 = vadd.f32 0.0, %v2819
    %v2821 = vpop.f32.mrf.mxu0
    %v2822 = vadd.f32 0.0, %v2821
    %2823 = vmatmul.bf16.gmra.mxu0 %v1068
    %v2824 = vpop.f32.mrf.mxu0
    %v2825 = vadd.f32 0.0, %v2824
    %v2826 = vpop.f32.mrf.mxu0
    %v2827 = vadd.f32 0.0, %v2826
    %2828 = vmatmul.bf16.gmra.mxu0 %v1071
    %v2829 = vpop.f32.mrf.mxu0
    %v2830 = vadd.f32 0.0, %v2829
    %v2831 = vpop.f32.mrf.mxu0
    %v2832 = vadd.f32 0.0, %v2831
    %2833 = vmatmul.bf16.gmra.mxu0 %v1074
    %v2834 = vpop.f32.mrf.mxu0
    %v2835 = vadd.f32 0.0, %v2834
    %v2836 = vpop.f32.mrf.mxu0
    %v2837 = vadd.f32 0.0, %v2836
    %2838 = vmatmul.bf16.gmra.mxu0 %v1077
    %v2839 = vpop.f32.mrf.mxu0
    %v2840 = vadd.f32 0.0, %v2839
    %v2841 = vpop.f32.mrf.mxu0
    %v2842 = vadd.f32 0.0, %v2841
    %2843 = vmatmul.bf16.gmra.mxu0 %v1080
    %v2844 = vpop.f32.mrf.mxu0
    %v2845 = vadd.f32 0.0, %v2844
    %v2846 = vpop.f32.mrf.mxu0
    %v2847 = vadd.f32 0.0, %v2846
    %2848 = vmatmul.bf16.gmra.mxu0 %v1083
    %v2849 = vpop.f32.mrf.mxu0
    %v2850 = vadd.f32 0.0, %v2849
    %v2851 = vpop.f32.mrf.mxu0
    %v2852 = vadd.f32 0.0, %v2851
    %2853 = vmatmul.bf16.gmra.mxu0 %v1086
    %v2854 = vpop.f32.mrf.mxu0
    %v2855 = vadd.f32 0.0, %v2854
    %v2856 = vpop.f32.mrf.mxu0
    %v2857 = vadd.f32 0.0, %v2856
    %2858 = vmatmul.bf16.gmra.mxu0 %v1089
    %v2859 = vpop.f32.mrf.mxu0
    %v2860 = vadd.f32 0.0, %v2859
    %v2861 = vpop.f32.mrf.mxu0
    %v2862 = vadd.f32 0.0, %v2861
    %2863 = vmatmul.bf16.gmra.mxu0 %v2695
    %v2864 = vpop.f32.mrf.mxu0
    %v2865 = vadd.f32 0.0, %v2864
    %v2866 = vpop.f32.mrf.mxu0
    %v2867 = vadd.f32 0.0, %v2866
    %2868 = vdwg.mxu0
    %v2869 = vadd.f32 %v2571, %v2710
    %v2870 = vadd.f32 %v2572, %v2712
    %v2871 = vadd.f32 %v2573, %v2715
    %v2872 = vadd.f32 %v2574, %v2717
    %v2873 = vadd.f32 %v2575, %v2720
    %v2874 = vadd.f32 %v2576, %v2722
    %v2875 = vadd.f32 %v2577, %v2725
    %v2876 = vadd.f32 %v2578, %v2727
    %v2877 = vadd.f32 %v2579, %v2730
    %v2878 = vadd.f32 %v2580, %v2732
    %v2879 = vadd.f32 %v2581, %v2735
    %v2880 = vadd.f32 %v2582, %v2737
    %v2881 = vadd.f32 %v2583, %v2740
    %v2882 = vadd.f32 %v2584, %v2742
    %v2883 = vadd.f32 %v2585, %v2745
    %v2884 = vadd.f32 %v2586, %v2747
    %v2885 = vadd.f32 %v2587, %v2750
    %v2886 = vadd.f32 %v2588, %v2752
    %v2887 = vadd.f32 %v2589, %v2755
    %v2888 = vadd.f32 %v2590, %v2757
    %v2889 = vadd.f32 %v2591, %v2760
    %v2890 = vadd.f32 %v2592, %v2762
    %v2891 = vadd.f32 %v2593, %v2765
    %v2892 = vadd.f32 %v2594, %v2767
    %v2893 = vadd.f32 %v2595, %v2770
    %v2894 = vadd.f32 %v2596, %v2772
    %v2895 = vadd.f32 %v2597, %v2775
    %v2896 = vadd.f32 %v2598, %v2777
    %v2897 = vadd.f32 %v2599, %v2780
    %v2898 = vadd.f32 %v2600, %v2782
    %v2899 = vadd.f32 %v2601, %v2785
    %v2900 = vadd.f32 %v2602, %v2787
    %v2901 = vadd.f32 %v2603, %v2790
    %v2902 = vadd.f32 %v2604, %v2792
    %v2903 = vadd.f32 %v2605, %v2795
    %v2904 = vadd.f32 %v2606, %v2797
    %v2905 = vadd.f32 %v2607, %v2800
    %v2906 = vadd.f32 %v2608, %v2802
    %v2907 = vadd.f32 %v2609, %v2805
    %v2908 = vadd.f32 %v2610, %v2807
    %v2909 = vadd.f32 %v2611, %v2810
    %v2910 = vadd.f32 %v2612, %v2812
    %v2911 = vadd.f32 %v2613, %v2815
    %v2912 = vadd.f32 %v2614, %v2817
    %v2913 = vadd.f32 %v2615, %v2820
    %v2914 = vadd.f32 %v2616, %v2822
    %v2915 = vadd.f32 %v2617, %v2825
    %v2916 = vadd.f32 %v2618, %v2827
    %v2917 = vadd.f32 %v2619, %v2830
    %v2918 = vadd.f32 %v2620, %v2832
    %v2919 = vadd.f32 %v2621, %v2835
    %v2920 = vadd.f32 %v2622, %v2837
    %v2921 = vadd.f32 %v2623, %v2840
    %v2922 = vadd.f32 %v2624, %v2842
    %v2923 = vadd.f32 %v2625, %v2845
    %v2924 = vadd.f32 %v2626, %v2847
    %v2925 = vadd.f32 %v2627, %v2850
    %v2926 = vadd.f32 %v2628, %v2852
    %v2927 = vadd.f32 %v2629, %v2855
    %v2928 = vadd.f32 %v2630, %v2857
    %v2929 = vadd.f32 %v2631, %v2860
    %v2930 = vadd.f32 %v2632, %v2862
    %v2931 = vadd.f32 %v2633, %v2865
    %v2932 = vadd.f32 %v2634, %v2867
    %v2935 = vrot.slane %v64, 5
    %v2936 = vrot.slane %v2935, 4
    %v2937 = vrot.slane %v65, 5
    %v2938 = vsel %vm1726, %v2936, %v2937
    %v2939 = vrot.slane %v2937, 4
    %v2940 = vrot.slane %v66, 5
    %v2941 = vsel %vm1726, %v2939, %v2940
    %v2942 = vrot.slane %v118, 5
    %v2943 = vrot.slane %v2942, 4
    %v2944 = vrot.slane %v119, 5
    %v2945 = vsel %vm1726, %v2943, %v2944
    %v2946 = vrot.slane %v2944, 4
    %v2947 = vrot.slane %v120, 5
    %v2948 = vsel %vm1726, %v2946, %v2947
    %s2949 = scalar_lea.vmem %s1, 10
    %v2950 = vld [vmem:[%s2949] sm:$0x3]
    %v2951 = vunpack.c.l.b16 %v2938
    %v2952 = vunpack.c.l.b16 %v2941
    %v2953 = vunpack.c.l.b16 %v2945
    %v2954 = vunpack.c.l.b16 %v2948
    %v2955 = vpack.c.b16 %v2952, %v2951
    %v2956 = vpack.c.b16 %v2954, %v2953
    %v2958 = vsel %vm994, %v2955, 0
    %v2961 = vsel %vm994, %v2956, 0
    %v2964 = vsel %vm1091, %v2950, 0
    %2966 = vmatpush.bf16.msra.mxu0 0
    %2967 = vmatpush.bf16.msra.mxu0 0
    %2968 = vmatpush.bf16.msra.mxu0 0
    %2969 = vmatpush.bf16.msra.mxu0 0
    %2970 = vmatpush.bf16.msra.mxu0 0
    %2971 = vmatpush.bf16.msra.mxu0 0
    %2972 = vmatpush.bf16.msra.mxu0 0
    %2973 = vmatpush.bf16.msra.mxu0 %v2964
    %2974 = vmatmul.bf16.gmra.mxu0 %v2053
    %v2975 = vpop.f32.mrf.mxu0
    %v2976 = vadd.f32 0.0, %v2975
    %v2977 = vpop.f32.mrf.mxu0
    %v2978 = vadd.f32 0.0, %v2977
    %2979 = vmatmul.bf16.gmra.mxu0 %v2056
    %v2980 = vpop.f32.mrf.mxu0
    %v2981 = vadd.f32 0.0, %v2980
    %v2982 = vpop.f32.mrf.mxu0
    %v2983 = vadd.f32 0.0, %v2982
    %2984 = vmatmul.bf16.gmra.mxu0 %v2059
    %v2985 = vpop.f32.mrf.mxu0
    %v2986 = vadd.f32 0.0, %v2985
    %v2987 = vpop.f32.mrf.mxu0
    %v2988 = vadd.f32 0.0, %v2987
    %2989 = vmatmul.bf16.gmra.mxu0 %v2062
    %v2990 = vpop.f32.mrf.mxu0
    %v2991 = vadd.f32 0.0, %v2990
    %v2992 = vpop.f32.mrf.mxu0
    %v2993 = vadd.f32 0.0, %v2992
    %2994 = vmatmul.bf16.gmra.mxu0 %v2065
    %v2995 = vpop.f32.mrf.mxu0
    %v2996 = vadd.f32 0.0, %v2995
    %v2997 = vpop.f32.mrf.mxu0
    %v2998 = vadd.f32 0.0, %v2997
    %2999 = vmatmul.bf16.gmra.mxu0 %v2068
    %v3000 = vpop.f32.mrf.mxu0
    %v3001 = vadd.f32 0.0, %v3000
    %v3002 = vpop.f32.mrf.mxu0
    %v3003 = vadd.f32 0.0, %v3002
    %3004 = vmatmul.bf16.gmra.mxu0 %v2071
    %v3005 = vpop.f32.mrf.mxu0
    %v3006 = vadd.f32 0.0, %v3005
    %v3007 = vpop.f32.mrf.mxu0
    %v3008 = vadd.f32 0.0, %v3007
    %3009 = vmatmul.bf16.gmra.mxu0 %v2074
    %v3010 = vpop.f32.mrf.mxu0
    %v3011 = vadd.f32 0.0, %v3010
    %v3012 = vpop.f32.mrf.mxu0
    %v3013 = vadd.f32 0.0, %v3012
    %3014 = vmatmul.bf16.gmra.mxu0 %v2077
    %v3015 = vpop.f32.mrf.mxu0
    %v3016 = vadd.f32 0.0, %v3015
    %v3017 = vpop.f32.mrf.mxu0
    %v3018 = vadd.f32 0.0, %v3017
    %3019 = vmatmul.bf16.gmra.mxu0 %v2080
    %v3020 = vpop.f32.mrf.mxu0
    %v3021 = vadd.f32 0.0, %v3020
    %v3022 = vpop.f32.mrf.mxu0
    %v3023 = vadd.f32 0.0, %v3022
    %3024 = vmatmul.bf16.gmra.mxu0 %v2083
    %v3025 = vpop.f32.mrf.mxu0
    %v3026 = vadd.f32 0.0, %v3025
    %v3027 = vpop.f32.mrf.mxu0
    %v3028 = vadd.f32 0.0, %v3027
    %3029 = vmatmul.bf16.gmra.mxu0 %v2086
    %v3030 = vpop.f32.mrf.mxu0
    %v3031 = vadd.f32 0.0, %v3030
    %v3032 = vpop.f32.mrf.mxu0
    %v3033 = vadd.f32 0.0, %v3032
    %3034 = vmatmul.bf16.gmra.mxu0 %v2089
    %v3035 = vpop.f32.mrf.mxu0
    %v3036 = vadd.f32 0.0, %v3035
    %v3037 = vpop.f32.mrf.mxu0
    %v3038 = vadd.f32 0.0, %v3037
    %3039 = vmatmul.bf16.gmra.mxu0 %v2092
    %v3040 = vpop.f32.mrf.mxu0
    %v3041 = vadd.f32 0.0, %v3040
    %v3042 = vpop.f32.mrf.mxu0
    %v3043 = vadd.f32 0.0, %v3042
    %3044 = vmatmul.bf16.gmra.mxu0 %v2095
    %v3045 = vpop.f32.mrf.mxu0
    %v3046 = vadd.f32 0.0, %v3045
    %v3047 = vpop.f32.mrf.mxu0
    %v3048 = vadd.f32 0.0, %v3047
    %3049 = vmatmul.bf16.gmra.mxu0 %v2958
    %v3050 = vpop.f32.mrf.mxu0
    %v3051 = vadd.f32 0.0, %v3050
    %v3052 = vpop.f32.mrf.mxu0
    %v3053 = vadd.f32 0.0, %v3052
    %3054 = vmatmul.bf16.gmra.mxu0 %v2101
    %v3055 = vpop.f32.mrf.mxu0
    %v3056 = vadd.f32 0.0, %v3055
    %v3057 = vpop.f32.mrf.mxu0
    %v3058 = vadd.f32 0.0, %v3057
    %3059 = vmatmul.bf16.gmra.mxu0 %v2104
    %v3060 = vpop.f32.mrf.mxu0
    %v3061 = vadd.f32 0.0, %v3060
    %v3062 = vpop.f32.mrf.mxu0
    %v3063 = vadd.f32 0.0, %v3062
    %3064 = vmatmul.bf16.gmra.mxu0 %v2107
    %v3065 = vpop.f32.mrf.mxu0
    %v3066 = vadd.f32 0.0, %v3065
    %v3067 = vpop.f32.mrf.mxu0
    %v3068 = vadd.f32 0.0, %v3067
    %3069 = vmatmul.bf16.gmra.mxu0 %v2110
    %v3070 = vpop.f32.mrf.mxu0
    %v3071 = vadd.f32 0.0, %v3070
    %v3072 = vpop.f32.mrf.mxu0
    %v3073 = vadd.f32 0.0, %v3072
    %3074 = vmatmul.bf16.gmra.mxu0 %v2113
    %v3075 = vpop.f32.mrf.mxu0
    %v3076 = vadd.f32 0.0, %v3075
    %v3077 = vpop.f32.mrf.mxu0
    %v3078 = vadd.f32 0.0, %v3077
    %3079 = vmatmul.bf16.gmra.mxu0 %v2116
    %v3080 = vpop.f32.mrf.mxu0
    %v3081 = vadd.f32 0.0, %v3080
    %v3082 = vpop.f32.mrf.mxu0
    %v3083 = vadd.f32 0.0, %v3082
    %3084 = vmatmul.bf16.gmra.mxu0 %v2119
    %v3085 = vpop.f32.mrf.mxu0
    %v3086 = vadd.f32 0.0, %v3085
    %v3087 = vpop.f32.mrf.mxu0
    %v3088 = vadd.f32 0.0, %v3087
    %3089 = vmatmul.bf16.gmra.mxu0 %v2122
    %v3090 = vpop.f32.mrf.mxu0
    %v3091 = vadd.f32 0.0, %v3090
    %v3092 = vpop.f32.mrf.mxu0
    %v3093 = vadd.f32 0.0, %v3092
    %3094 = vmatmul.bf16.gmra.mxu0 %v2125
    %v3095 = vpop.f32.mrf.mxu0
    %v3096 = vadd.f32 0.0, %v3095
    %v3097 = vpop.f32.mrf.mxu0
    %v3098 = vadd.f32 0.0, %v3097
    %3099 = vmatmul.bf16.gmra.mxu0 %v2128
    %v3100 = vpop.f32.mrf.mxu0
    %v3101 = vadd.f32 0.0, %v3100
    %v3102 = vpop.f32.mrf.mxu0
    %v3103 = vadd.f32 0.0, %v3102
    %3104 = vmatmul.bf16.gmra.mxu0 %v2131
    %v3105 = vpop.f32.mrf.mxu0
    %v3106 = vadd.f32 0.0, %v3105
    %v3107 = vpop.f32.mrf.mxu0
    %v3108 = vadd.f32 0.0, %v3107
    %3109 = vmatmul.bf16.gmra.mxu0 %v2134
    %v3110 = vpop.f32.mrf.mxu0
    %v3111 = vadd.f32 0.0, %v3110
    %v3112 = vpop.f32.mrf.mxu0
    %v3113 = vadd.f32 0.0, %v3112
    %3114 = vmatmul.bf16.gmra.mxu0 %v2137
    %v3115 = vpop.f32.mrf.mxu0
    %v3116 = vadd.f32 0.0, %v3115
    %v3117 = vpop.f32.mrf.mxu0
    %v3118 = vadd.f32 0.0, %v3117
    %3119 = vmatmul.bf16.gmra.mxu0 %v2140
    %v3120 = vpop.f32.mrf.mxu0
    %v3121 = vadd.f32 0.0, %v3120
    %v3122 = vpop.f32.mrf.mxu0
    %v3123 = vadd.f32 0.0, %v3122
    %3124 = vmatmul.bf16.gmra.mxu0 %v2143
    %v3125 = vpop.f32.mrf.mxu0
    %v3126 = vadd.f32 0.0, %v3125
    %v3127 = vpop.f32.mrf.mxu0
    %v3128 = vadd.f32 0.0, %v3127
    %3129 = vmatmul.bf16.gmra.mxu0 %v2961
    %v3130 = vpop.f32.mrf.mxu0
    %v3131 = vadd.f32 0.0, %v3130
    %v3132 = vpop.f32.mrf.mxu0
    %v3133 = vadd.f32 0.0, %v3132
    %3134 = vdwg.mxu0
    %v3135 = vadd.f32 %v2869, %v2976
    %v3136 = vadd.f32 %v2870, %v2978
    %v3137 = vadd.f32 %v2871, %v2981
    %v3138 = vadd.f32 %v2872, %v2983
    %v3139 = vadd.f32 %v2873, %v2986
    %v3140 = vadd.f32 %v2874, %v2988
    %v3141 = vadd.f32 %v2875, %v2991
    %v3142 = vadd.f32 %v2876, %v2993
    %v3143 = vadd.f32 %v2877, %v2996
    %v3144 = vadd.f32 %v2878, %v2998
    %v3145 = vadd.f32 %v2879, %v3001
    %v3146 = vadd.f32 %v2880, %v3003
    %v3147 = vadd.f32 %v2881, %v3006
    %v3148 = vadd.f32 %v2882, %v3008
    %v3149 = vadd.f32 %v2883, %v3011
    %v3150 = vadd.f32 %v2884, %v3013
    %v3151 = vadd.f32 %v2885, %v3016
    %v3152 = vadd.f32 %v2886, %v3018
    %v3153 = vadd.f32 %v2887, %v3021
    %v3154 = vadd.f32 %v2888, %v3023
    %v3155 = vadd.f32 %v2889, %v3026
    %v3156 = vadd.f32 %v2890, %v3028
    %v3157 = vadd.f32 %v2891, %v3031
    %v3158 = vadd.f32 %v2892, %v3033
    %v3159 = vadd.f32 %v2893, %v3036
    %v3160 = vadd.f32 %v2894, %v3038
    %v3161 = vadd.f32 %v2895, %v3041
    %v3162 = vadd.f32 %v2896, %v3043
    %v3163 = vadd.f32 %v2897, %v3046
    %v3164 = vadd.f32 %v2898, %v3048
    %v3165 = vadd.f32 %v2899, %v3051
    %v3166 = vadd.f32 %v2900, %v3053
    %v3167 = vadd.f32 %v2901, %v3056
    %v3168 = vadd.f32 %v2902, %v3058
    %v3169 = vadd.f32 %v2903, %v3061
    %v3170 = vadd.f32 %v2904, %v3063
    %v3171 = vadd.f32 %v2905, %v3066
    %v3172 = vadd.f32 %v2906, %v3068
    %v3173 = vadd.f32 %v2907, %v3071
    %v3174 = vadd.f32 %v2908, %v3073
    %v3175 = vadd.f32 %v2909, %v3076
    %v3176 = vadd.f32 %v2910, %v3078
    %v3177 = vadd.f32 %v2911, %v3081
    %v3178 = vadd.f32 %v2912, %v3083
    %v3179 = vadd.f32 %v2913, %v3086
    %v3180 = vadd.f32 %v2914, %v3088
    %v3181 = vadd.f32 %v2915, %v3091
    %v3182 = vadd.f32 %v2916, %v3093
    %v3183 = vadd.f32 %v2917, %v3096
    %v3184 = vadd.f32 %v2918, %v3098
    %v3185 = vadd.f32 %v2919, %v3101
    %v3186 = vadd.f32 %v2920, %v3103
    %v3187 = vadd.f32 %v2921, %v3106
    %v3188 = vadd.f32 %v2922, %v3108
    %v3189 = vadd.f32 %v2923, %v3111
    %v3190 = vadd.f32 %v2924, %v3113
    %v3191 = vadd.f32 %v2925, %v3116
    %v3192 = vadd.f32 %v2926, %v3118
    %v3193 = vadd.f32 %v2927, %v3121
    %v3194 = vadd.f32 %v2928, %v3123
    %v3195 = vadd.f32 %v2929, %v3126
    %v3196 = vadd.f32 %v2930, %v3128
    %v3197 = vadd.f32 %v2931, %v3131
    %v3198 = vadd.f32 %v2932, %v3133
    %s3199 = scalar_lea.vmem %s1, 12
    %v3200 = vld [vmem:[%s3199] sm:$0x3]
    %v3205 = vunpack.c.l.b16 %v67
    %v3206 = vunpack.c.l.b16 %v68
    %v3207 = vunpack.c.l.b16 %v121
    %v3208 = vunpack.c.l.b16 %v122
    %v3209 = vpack.c.b16 %v3206, %v3205
    %v3210 = vpack.c.b16 %v3208, %v3207
    %v3212 = vsel %vm994, %v3209, 0
    %v3215 = vsel %vm994, %v3210, 0
    %v3218 = vsel %vm1091, %v3200, 0
    %3220 = vmatpush.bf16.msra.mxu0 0
    %3221 = vmatpush.bf16.msra.mxu0 0
    %3222 = vmatpush.bf16.msra.mxu0 0
    %3223 = vmatpush.bf16.msra.mxu0 0
    %3224 = vmatpush.bf16.msra.mxu0 0
    %3225 = vmatpush.bf16.msra.mxu0 0
    %3226 = vmatpush.bf16.msra.mxu0 0
    %3227 = vmatpush.bf16.msra.mxu0 %v3218
    %3228 = vmatmul.bf16.gmra.mxu0 %v1431
    %v3229 = vpop.f32.mrf.mxu0
    %v3230 = vadd.f32 0.0, %v3229
    %v3231 = vpop.f32.mrf.mxu0
    %v3232 = vadd.f32 0.0, %v3231
    %3233 = vmatmul.bf16.gmra.mxu0 %v1434
    %v3234 = vpop.f32.mrf.mxu0
    %v3235 = vadd.f32 0.0, %v3234
    %v3236 = vpop.f32.mrf.mxu0
    %v3237 = vadd.f32 0.0, %v3236
    %3238 = vmatmul.bf16.gmra.mxu0 %v1437
    %v3239 = vpop.f32.mrf.mxu0
    %v3240 = vadd.f32 0.0, %v3239
    %v3241 = vpop.f32.mrf.mxu0
    %v3242 = vadd.f32 0.0, %v3241
    %3243 = vmatmul.bf16.gmra.mxu0 %v1440
    %v3244 = vpop.f32.mrf.mxu0
    %v3245 = vadd.f32 0.0, %v3244
    %v3246 = vpop.f32.mrf.mxu0
    %v3247 = vadd.f32 0.0, %v3246
    %3248 = vmatmul.bf16.gmra.mxu0 %v1443
    %v3249 = vpop.f32.mrf.mxu0
    %v3250 = vadd.f32 0.0, %v3249
    %v3251 = vpop.f32.mrf.mxu0
    %v3252 = vadd.f32 0.0, %v3251
    %3253 = vmatmul.bf16.gmra.mxu0 %v1446
    %v3254 = vpop.f32.mrf.mxu0
    %v3255 = vadd.f32 0.0, %v3254
    %v3256 = vpop.f32.mrf.mxu0
    %v3257 = vadd.f32 0.0, %v3256
    %3258 = vmatmul.bf16.gmra.mxu0 %v1449
    %v3259 = vpop.f32.mrf.mxu0
    %v3260 = vadd.f32 0.0, %v3259
    %v3261 = vpop.f32.mrf.mxu0
    %v3262 = vadd.f32 0.0, %v3261
    %3263 = vmatmul.bf16.gmra.mxu0 %v1452
    %v3264 = vpop.f32.mrf.mxu0
    %v3265 = vadd.f32 0.0, %v3264
    %v3266 = vpop.f32.mrf.mxu0
    %v3267 = vadd.f32 0.0, %v3266
    %3268 = vmatmul.bf16.gmra.mxu0 %v1455
    %v3269 = vpop.f32.mrf.mxu0
    %v3270 = vadd.f32 0.0, %v3269
    %v3271 = vpop.f32.mrf.mxu0
    %v3272 = vadd.f32 0.0, %v3271
    %3273 = vmatmul.bf16.gmra.mxu0 %v1458
    %v3274 = vpop.f32.mrf.mxu0
    %v3275 = vadd.f32 0.0, %v3274
    %v3276 = vpop.f32.mrf.mxu0
    %v3277 = vadd.f32 0.0, %v3276
    %3278 = vmatmul.bf16.gmra.mxu0 %v1461
    %v3279 = vpop.f32.mrf.mxu0
    %v3280 = vadd.f32 0.0, %v3279
    %v3281 = vpop.f32.mrf.mxu0
    %v3282 = vadd.f32 0.0, %v3281
    %3283 = vmatmul.bf16.gmra.mxu0 %v1464
    %v3284 = vpop.f32.mrf.mxu0
    %v3285 = vadd.f32 0.0, %v3284
    %v3286 = vpop.f32.mrf.mxu0
    %v3287 = vadd.f32 0.0, %v3286
    %3288 = vmatmul.bf16.gmra.mxu0 %v1467
    %v3289 = vpop.f32.mrf.mxu0
    %v3290 = vadd.f32 0.0, %v3289
    %v3291 = vpop.f32.mrf.mxu0
    %v3292 = vadd.f32 0.0, %v3291
    %3293 = vmatmul.bf16.gmra.mxu0 %v1470
    %v3294 = vpop.f32.mrf.mxu0
    %v3295 = vadd.f32 0.0, %v3294
    %v3296 = vpop.f32.mrf.mxu0
    %v3297 = vadd.f32 0.0, %v3296
    %3298 = vmatmul.bf16.gmra.mxu0 %v2394
    %v3299 = vpop.f32.mrf.mxu0
    %v3300 = vadd.f32 0.0, %v3299
    %v3301 = vpop.f32.mrf.mxu0
    %v3302 = vadd.f32 0.0, %v3301
    %3303 = vmatmul.bf16.gmra.mxu0 %v3212
    %v3304 = vpop.f32.mrf.mxu0
    %v3305 = vadd.f32 0.0, %v3304
    %v3306 = vpop.f32.mrf.mxu0
    %v3307 = vadd.f32 0.0, %v3306
    %3308 = vmatmul.bf16.gmra.mxu0 %v1479
    %v3309 = vpop.f32.mrf.mxu0
    %v3310 = vadd.f32 0.0, %v3309
    %v3311 = vpop.f32.mrf.mxu0
    %v3312 = vadd.f32 0.0, %v3311
    %3313 = vmatmul.bf16.gmra.mxu0 %v1482
    %v3314 = vpop.f32.mrf.mxu0
    %v3315 = vadd.f32 0.0, %v3314
    %v3316 = vpop.f32.mrf.mxu0
    %v3317 = vadd.f32 0.0, %v3316
    %3318 = vmatmul.bf16.gmra.mxu0 %v1485
    %v3319 = vpop.f32.mrf.mxu0
    %v3320 = vadd.f32 0.0, %v3319
    %v3321 = vpop.f32.mrf.mxu0
    %v3322 = vadd.f32 0.0, %v3321
    %3323 = vmatmul.bf16.gmra.mxu0 %v1488
    %v3324 = vpop.f32.mrf.mxu0
    %v3325 = vadd.f32 0.0, %v3324
    %v3326 = vpop.f32.mrf.mxu0
    %v3327 = vadd.f32 0.0, %v3326
    %3328 = vmatmul.bf16.gmra.mxu0 %v1491
    %v3329 = vpop.f32.mrf.mxu0
    %v3330 = vadd.f32 0.0, %v3329
    %v3331 = vpop.f32.mrf.mxu0
    %v3332 = vadd.f32 0.0, %v3331
    %3333 = vmatmul.bf16.gmra.mxu0 %v1494
    %v3334 = vpop.f32.mrf.mxu0
    %v3335 = vadd.f32 0.0, %v3334
    %v3336 = vpop.f32.mrf.mxu0
    %v3337 = vadd.f32 0.0, %v3336
    %3338 = vmatmul.bf16.gmra.mxu0 %v1497
    %v3339 = vpop.f32.mrf.mxu0
    %v3340 = vadd.f32 0.0, %v3339
    %v3341 = vpop.f32.mrf.mxu0
    %v3342 = vadd.f32 0.0, %v3341
    %3343 = vmatmul.bf16.gmra.mxu0 %v1500
    %v3344 = vpop.f32.mrf.mxu0
    %v3345 = vadd.f32 0.0, %v3344
    %v3346 = vpop.f32.mrf.mxu0
    %v3347 = vadd.f32 0.0, %v3346
    %3348 = vmatmul.bf16.gmra.mxu0 %v1503
    %v3349 = vpop.f32.mrf.mxu0
    %v3350 = vadd.f32 0.0, %v3349
    %v3351 = vpop.f32.mrf.mxu0
    %v3352 = vadd.f32 0.0, %v3351
    %3353 = vmatmul.bf16.gmra.mxu0 %v1506
    %v3354 = vpop.f32.mrf.mxu0
    %v3355 = vadd.f32 0.0, %v3354
    %v3356 = vpop.f32.mrf.mxu0
    %v3357 = vadd.f32 0.0, %v3356
    %3358 = vmatmul.bf16.gmra.mxu0 %v1509
    %v3359 = vpop.f32.mrf.mxu0
    %v3360 = vadd.f32 0.0, %v3359
    %v3361 = vpop.f32.mrf.mxu0
    %v3362 = vadd.f32 0.0, %v3361
    %3363 = vmatmul.bf16.gmra.mxu0 %v1512
    %v3364 = vpop.f32.mrf.mxu0
    %v3365 = vadd.f32 0.0, %v3364
    %v3366 = vpop.f32.mrf.mxu0
    %v3367 = vadd.f32 0.0, %v3366
    %3368 = vmatmul.bf16.gmra.mxu0 %v1515
    %v3369 = vpop.f32.mrf.mxu0
    %v3370 = vadd.f32 0.0, %v3369
    %v3371 = vpop.f32.mrf.mxu0
    %v3372 = vadd.f32 0.0, %v3371
    %3373 = vmatmul.bf16.gmra.mxu0 %v1518
    %v3374 = vpop.f32.mrf.mxu0
    %v3375 = vadd.f32 0.0, %v3374
    %v3376 = vpop.f32.mrf.mxu0
    %v3377 = vadd.f32 0.0, %v3376
    %3378 = vmatmul.bf16.gmra.mxu0 %v2397
    %v3379 = vpop.f32.mrf.mxu0
    %v3380 = vadd.f32 0.0, %v3379
    %v3381 = vpop.f32.mrf.mxu0
    %v3382 = vadd.f32 0.0, %v3381
    %3383 = vmatmul.bf16.gmra.mxu0 %v3215
    %v3384 = vpop.f32.mrf.mxu0
    %v3385 = vadd.f32 0.0, %v3384
    %v3386 = vpop.f32.mrf.mxu0
    %v3387 = vadd.f32 0.0, %v3386
    %3388 = vdwg.mxu0
    %v3389 = vadd.f32 %v3135, %v3230
    %v3390 = vadd.f32 %v3136, %v3232
    %v3391 = vadd.f32 %v3137, %v3235
    %v3392 = vadd.f32 %v3138, %v3237
    %v3393 = vadd.f32 %v3139, %v3240
    %v3394 = vadd.f32 %v3140, %v3242
    %v3395 = vadd.f32 %v3141, %v3245
    %v3396 = vadd.f32 %v3142, %v3247
    %v3397 = vadd.f32 %v3143, %v3250
    %v3398 = vadd.f32 %v3144, %v3252
    %v3399 = vadd.f32 %v3145, %v3255
    %v3400 = vadd.f32 %v3146, %v3257
    %v3401 = vadd.f32 %v3147, %v3260
    %v3402 = vadd.f32 %v3148, %v3262
    %v3403 = vadd.f32 %v3149, %v3265
    %v3404 = vadd.f32 %v3150, %v3267
    %v3405 = vadd.f32 %v3151, %v3270
    %v3406 = vadd.f32 %v3152, %v3272
    %v3407 = vadd.f32 %v3153, %v3275
    %v3408 = vadd.f32 %v3154, %v3277
    %v3409 = vadd.f32 %v3155, %v3280
    %v3410 = vadd.f32 %v3156, %v3282
    %v3411 = vadd.f32 %v3157, %v3285
    %v3412 = vadd.f32 %v3158, %v3287
    %v3413 = vadd.f32 %v3159, %v3290
    %v3414 = vadd.f32 %v3160, %v3292
    %v3415 = vadd.f32 %v3161, %v3295
    %v3416 = vadd.f32 %v3162, %v3297
    %v3417 = vadd.f32 %v3163, %v3300
    %v3418 = vadd.f32 %v3164, %v3302
    %v3419 = vadd.f32 %v3165, %v3305
    %v3420 = vadd.f32 %v3166, %v3307
    %v3421 = vadd.f32 %v3167, %v3310
    %v3422 = vadd.f32 %v3168, %v3312
    %v3423 = vadd.f32 %v3169, %v3315
    %v3424 = vadd.f32 %v3170, %v3317
    %v3425 = vadd.f32 %v3171, %v3320
    %v3426 = vadd.f32 %v3172, %v3322
    %v3427 = vadd.f32 %v3173, %v3325
    %v3428 = vadd.f32 %v3174, %v3327
    %v3429 = vadd.f32 %v3175, %v3330
    %v3430 = vadd.f32 %v3176, %v3332
    %v3431 = vadd.f32 %v3177, %v3335
    %v3432 = vadd.f32 %v3178, %v3337
    %v3433 = vadd.f32 %v3179, %v3340
    %v3434 = vadd.f32 %v3180, %v3342
    %v3435 = vadd.f32 %v3181, %v3345
    %v3436 = vadd.f32 %v3182, %v3347
    %v3437 = vadd.f32 %v3183, %v3350
    %v3438 = vadd.f32 %v3184, %v3352
    %v3439 = vadd.f32 %v3185, %v3355
    %v3440 = vadd.f32 %v3186, %v3357
    %v3441 = vadd.f32 %v3187, %v3360
    %v3442 = vadd.f32 %v3188, %v3362
    %v3443 = vadd.f32 %v3189, %v3365
    %v3444 = vadd.f32 %v3190, %v3367
    %v3445 = vadd.f32 %v3191, %v3370
    %v3446 = vadd.f32 %v3192, %v3372
    %v3447 = vadd.f32 %v3193, %v3375
    %v3448 = vadd.f32 %v3194, %v3377
    %v3449 = vadd.f32 %v3195, %v3380
    %v3450 = vadd.f32 %v3196, %v3382
    %v3451 = vadd.f32 %v3197, %v3385
    %v3452 = vadd.f32 %v3198, %v3387
    %v3454 = vshrl.u32 %v67, 16
    %v3456 = vrot.slane %v3454, 4
    %v3457 = vshll.u32 %v67, 16
    %v3459 = vrot.slane %v3457, 5
    %v3460 = vor.u32 %v3456, %v3459
    %v3461 = vrot.slane %v3460, 4
    %v3463 = vshll.u32 %v68, 16
    %v3465 = vrot.slane %v3463, 5
    %v3466 = vsel %vm127, %v3461, %v3465
    %v3467 = vshrl.u32 %v68, 16
    %v3469 = vrot.slane %v3467, 4
    %v3470 = vor.u32 %v3469, %v3465
    %v3471 = vrot.slane %v3470, 4
    %v3473 = vshll.u32 %v69, 16
    %v3475 = vrot.slane %v3473, 5
    %v3476 = vsel %vm127, %v3471, %v3475
    %v3478 = vshrl.u32 %v121, 16
    %v3480 = vrot.slane %v3478, 4
    %v3481 = vshll.u32 %v121, 16
    %v3483 = vrot.slane %v3481, 5
    %v3484 = vor.u32 %v3480, %v3483
    %v3485 = vrot.slane %v3484, 4
    %v3487 = vshll.u32 %v122, 16
    %v3489 = vrot.slane %v3487, 5
    %v3490 = vsel %vm127, %v3485, %v3489
    %v3491 = vshrl.u32 %v122, 16
    %v3493 = vrot.slane %v3491, 4
    %v3494 = vor.u32 %v3493, %v3489
    %v3495 = vrot.slane %v3494, 4
    %v3497 = vshll.u32 %v123, 16
    %v3499 = vrot.slane %v3497, 5
    %v3500 = vsel %vm127, %v3495, %v3499
    %s3501 = scalar_lea.vmem %s1, 14
    %v3502 = vld [vmem:[%s3501] sm:$0x3]
    %v3503 = vunpack.c.l.b16 %v3466
    %v3504 = vunpack.c.l.b16 %v3476
    %v3505 = vunpack.c.l.b16 %v3490
    %v3506 = vunpack.c.l.b16 %v3500
    %v3507 = vpack.c.b16 %v3504, %v3503
    %v3508 = vpack.c.b16 %v3506, %v3505
    %v3510 = vsel %vm994, %v3507, 0
    %v3513 = vsel %vm994, %v3508, 0
    %v3516 = vsel %vm1091, %v3502, 0
    %3518 = vmatpush.bf16.msra.mxu0 0
    %3519 = vmatpush.bf16.msra.mxu0 0
    %3520 = vmatpush.bf16.msra.mxu0 0
    %3521 = vmatpush.bf16.msra.mxu0 0
    %3522 = vmatpush.bf16.msra.mxu0 0
    %3523 = vmatpush.bf16.msra.mxu0 0
    %3524 = vmatpush.bf16.msra.mxu0 0
    %3525 = vmatpush.bf16.msra.mxu0 %v3516
    %3526 = vmatmul.bf16.gmra.mxu0 %v1002
    %v3527 = vpop.f32.mrf.mxu0
    %v3528 = vadd.f32 0.0, %v3527
    %v3529 = vpop.f32.mrf.mxu0
    %v3530 = vadd.f32 0.0, %v3529
    %3531 = vmatmul.bf16.gmra.mxu0 %v1005
    %v3532 = vpop.f32.mrf.mxu0
    %v3533 = vadd.f32 0.0, %v3532
    %v3534 = vpop.f32.mrf.mxu0
    %v3535 = vadd.f32 0.0, %v3534
    %3536 = vmatmul.bf16.gmra.mxu0 %v1008
    %v3537 = vpop.f32.mrf.mxu0
    %v3538 = vadd.f32 0.0, %v3537
    %v3539 = vpop.f32.mrf.mxu0
    %v3540 = vadd.f32 0.0, %v3539
    %3541 = vmatmul.bf16.gmra.mxu0 %v1011
    %v3542 = vpop.f32.mrf.mxu0
    %v3543 = vadd.f32 0.0, %v3542
    %v3544 = vpop.f32.mrf.mxu0
    %v3545 = vadd.f32 0.0, %v3544
    %3546 = vmatmul.bf16.gmra.mxu0 %v1014
    %v3547 = vpop.f32.mrf.mxu0
    %v3548 = vadd.f32 0.0, %v3547
    %v3549 = vpop.f32.mrf.mxu0
    %v3550 = vadd.f32 0.0, %v3549
    %3551 = vmatmul.bf16.gmra.mxu0 %v1017
    %v3552 = vpop.f32.mrf.mxu0
    %v3553 = vadd.f32 0.0, %v3552
    %v3554 = vpop.f32.mrf.mxu0
    %v3555 = vadd.f32 0.0, %v3554
    %3556 = vmatmul.bf16.gmra.mxu0 %v1020
    %v3557 = vpop.f32.mrf.mxu0
    %v3558 = vadd.f32 0.0, %v3557
    %v3559 = vpop.f32.mrf.mxu0
    %v3560 = vadd.f32 0.0, %v3559
    %3561 = vmatmul.bf16.gmra.mxu0 %v1023
    %v3562 = vpop.f32.mrf.mxu0
    %v3563 = vadd.f32 0.0, %v3562
    %v3564 = vpop.f32.mrf.mxu0
    %v3565 = vadd.f32 0.0, %v3564
    %3566 = vmatmul.bf16.gmra.mxu0 %v1026
    %v3567 = vpop.f32.mrf.mxu0
    %v3568 = vadd.f32 0.0, %v3567
    %v3569 = vpop.f32.mrf.mxu0
    %v3570 = vadd.f32 0.0, %v3569
    %3571 = vmatmul.bf16.gmra.mxu0 %v1029
    %v3572 = vpop.f32.mrf.mxu0
    %v3573 = vadd.f32 0.0, %v3572
    %v3574 = vpop.f32.mrf.mxu0
    %v3575 = vadd.f32 0.0, %v3574
    %3576 = vmatmul.bf16.gmra.mxu0 %v1032
    %v3577 = vpop.f32.mrf.mxu0
    %v3578 = vadd.f32 0.0, %v3577
    %v3579 = vpop.f32.mrf.mxu0
    %v3580 = vadd.f32 0.0, %v3579
    %3581 = vmatmul.bf16.gmra.mxu0 %v1035
    %v3582 = vpop.f32.mrf.mxu0
    %v3583 = vadd.f32 0.0, %v3582
    %v3584 = vpop.f32.mrf.mxu0
    %v3585 = vadd.f32 0.0, %v3584
    %3586 = vmatmul.bf16.gmra.mxu0 %v1038
    %v3587 = vpop.f32.mrf.mxu0
    %v3588 = vadd.f32 0.0, %v3587
    %v3589 = vpop.f32.mrf.mxu0
    %v3590 = vadd.f32 0.0, %v3589
    %3591 = vmatmul.bf16.gmra.mxu0 %v1041
    %v3592 = vpop.f32.mrf.mxu0
    %v3593 = vadd.f32 0.0, %v3592
    %v3594 = vpop.f32.mrf.mxu0
    %v3595 = vadd.f32 0.0, %v3594
    %3596 = vmatmul.bf16.gmra.mxu0 %v2692
    %v3597 = vpop.f32.mrf.mxu0
    %v3598 = vadd.f32 0.0, %v3597
    %v3599 = vpop.f32.mrf.mxu0
    %v3600 = vadd.f32 0.0, %v3599
    %3601 = vmatmul.bf16.gmra.mxu0 %v3510
    %v3602 = vpop.f32.mrf.mxu0
    %v3603 = vadd.f32 0.0, %v3602
    %v3604 = vpop.f32.mrf.mxu0
    %v3605 = vadd.f32 0.0, %v3604
    %3606 = vmatmul.bf16.gmra.mxu0 %v1050
    %v3607 = vpop.f32.mrf.mxu0
    %v3608 = vadd.f32 0.0, %v3607
    %v3609 = vpop.f32.mrf.mxu0
    %v3610 = vadd.f32 0.0, %v3609
    %3611 = vmatmul.bf16.gmra.mxu0 %v1053
    %v3612 = vpop.f32.mrf.mxu0
    %v3613 = vadd.f32 0.0, %v3612
    %v3614 = vpop.f32.mrf.mxu0
    %v3615 = vadd.f32 0.0, %v3614
    %3616 = vmatmul.bf16.gmra.mxu0 %v1056
    %v3617 = vpop.f32.mrf.mxu0
    %v3618 = vadd.f32 0.0, %v3617
    %v3619 = vpop.f32.mrf.mxu0
    %v3620 = vadd.f32 0.0, %v3619
    %3621 = vmatmul.bf16.gmra.mxu0 %v1059
    %v3622 = vpop.f32.mrf.mxu0
    %v3623 = vadd.f32 0.0, %v3622
    %v3624 = vpop.f32.mrf.mxu0
    %v3625 = vadd.f32 0.0, %v3624
    %3626 = vmatmul.bf16.gmra.mxu0 %v1062
    %v3627 = vpop.f32.mrf.mxu0
    %v3628 = vadd.f32 0.0, %v3627
    %v3629 = vpop.f32.mrf.mxu0
    %v3630 = vadd.f32 0.0, %v3629
    %3631 = vmatmul.bf16.gmra.mxu0 %v1065
    %v3632 = vpop.f32.mrf.mxu0
    %v3633 = vadd.f32 0.0, %v3632
    %v3634 = vpop.f32.mrf.mxu0
    %v3635 = vadd.f32 0.0, %v3634
    %3636 = vmatmul.bf16.gmra.mxu0 %v1068
    %v3637 = vpop.f32.mrf.mxu0
    %v3638 = vadd.f32 0.0, %v3637
    %v3639 = vpop.f32.mrf.mxu0
    %v3640 = vadd.f32 0.0, %v3639
    %3641 = vmatmul.bf16.gmra.mxu0 %v1071
    %v3642 = vpop.f32.mrf.mxu0
    %v3643 = vadd.f32 0.0, %v3642
    %v3644 = vpop.f32.mrf.mxu0
    %v3645 = vadd.f32 0.0, %v3644
    %3646 = vmatmul.bf16.gmra.mxu0 %v1074
    %v3647 = vpop.f32.mrf.mxu0
    %v3648 = vadd.f32 0.0, %v3647
    %v3649 = vpop.f32.mrf.mxu0
    %v3650 = vadd.f32 0.0, %v3649
    %3651 = vmatmul.bf16.gmra.mxu0 %v1077
    %v3652 = vpop.f32.mrf.mxu0
    %v3653 = vadd.f32 0.0, %v3652
    %v3654 = vpop.f32.mrf.mxu0
    %v3655 = vadd.f32 0.0, %v3654
    %3656 = vmatmul.bf16.gmra.mxu0 %v1080
    %v3657 = vpop.f32.mrf.mxu0
    %v3658 = vadd.f32 0.0, %v3657
    %v3659 = vpop.f32.mrf.mxu0
    %v3660 = vadd.f32 0.0, %v3659
    %3661 = vmatmul.bf16.gmra.mxu0 %v1083
    %v3662 = vpop.f32.mrf.mxu0
    %v3663 = vadd.f32 0.0, %v3662
    %v3664 = vpop.f32.mrf.mxu0
    %v3665 = vadd.f32 0.0, %v3664
    %3666 = vmatmul.bf16.gmra.mxu0 %v1086
    %v3667 = vpop.f32.mrf.mxu0
    %v3668 = vadd.f32 0.0, %v3667
    %v3669 = vpop.f32.mrf.mxu0
    %v3670 = vadd.f32 0.0, %v3669
    %3671 = vmatmul.bf16.gmra.mxu0 %v1089
    %v3672 = vpop.f32.mrf.mxu0
    %v3673 = vadd.f32 0.0, %v3672
    %v3674 = vpop.f32.mrf.mxu0
    %v3675 = vadd.f32 0.0, %v3674
    %3676 = vmatmul.bf16.gmra.mxu0 %v2695
    %v3677 = vpop.f32.mrf.mxu0
    %v3678 = vadd.f32 0.0, %v3677
    %v3679 = vpop.f32.mrf.mxu0
    %v3680 = vadd.f32 0.0, %v3679
    %3681 = vmatmul.bf16.gmra.mxu0 %v3513
    %v3682 = vpop.f32.mrf.mxu0
    %v3683 = vadd.f32 0.0, %v3682
    %v3684 = vpop.f32.mrf.mxu0
    %v3685 = vadd.f32 0.0, %v3684
    %3686 = vdwg.mxu0
    %v3687 = vadd.f32 %v3389, %v3528
    %v3688 = vadd.f32 %v3390, %v3530
    %v3689 = vadd.f32 %v3391, %v3533
    %v3690 = vadd.f32 %v3392, %v3535
    %v3691 = vadd.f32 %v3393, %v3538
    %v3692 = vadd.f32 %v3394, %v3540
    %v3693 = vadd.f32 %v3395, %v3543
    %v3694 = vadd.f32 %v3396, %v3545
    %v3695 = vadd.f32 %v3397, %v3548
    %v3696 = vadd.f32 %v3398, %v3550
    %v3697 = vadd.f32 %v3399, %v3553
    %v3698 = vadd.f32 %v3400, %v3555
    %v3699 = vadd.f32 %v3401, %v3558
    %v3700 = vadd.f32 %v3402, %v3560
    %v3701 = vadd.f32 %v3403, %v3563
    %v3702 = vadd.f32 %v3404, %v3565
    %v3703 = vadd.f32 %v3405, %v3568
    %v3704 = vadd.f32 %v3406, %v3570
    %v3705 = vadd.f32 %v3407, %v3573
    %v3706 = vadd.f32 %v3408, %v3575
    %v3707 = vadd.f32 %v3409, %v3578
    %v3708 = vadd.f32 %v3410, %v3580
    %v3709 = vadd.f32 %v3411, %v3583
    %v3710 = vadd.f32 %v3412, %v3585
    %v3711 = vadd.f32 %v3413, %v3588
    %v3712 = vadd.f32 %v3414, %v3590
    %v3713 = vadd.f32 %v3415, %v3593
    %v3714 = vadd.f32 %v3416, %v3595
    %v3715 = vadd.f32 %v3417, %v3598
    %v3716 = vadd.f32 %v3418, %v3600
    %v3717 = vadd.f32 %v3419, %v3603
    %v3718 = vadd.f32 %v3420, %v3605
    %v3719 = vadd.f32 %v3421, %v3608
    %v3720 = vadd.f32 %v3422, %v3610
    %v3721 = vadd.f32 %v3423, %v3613
    %v3722 = vadd.f32 %v3424, %v3615
    %v3723 = vadd.f32 %v3425, %v3618
    %v3724 = vadd.f32 %v3426, %v3620
    %v3725 = vadd.f32 %v3427, %v3623
    %v3726 = vadd.f32 %v3428, %v3625
    %v3727 = vadd.f32 %v3429, %v3628
    %v3728 = vadd.f32 %v3430, %v3630
    %v3729 = vadd.f32 %v3431, %v3633
    %v3730 = vadd.f32 %v3432, %v3635
    %v3731 = vadd.f32 %v3433, %v3638
    %v3732 = vadd.f32 %v3434, %v3640
    %v3733 = vadd.f32 %v3435, %v3643
    %v3734 = vadd.f32 %v3436, %v3645
    %v3735 = vadd.f32 %v3437, %v3648
    %v3736 = vadd.f32 %v3438, %v3650
    %v3737 = vadd.f32 %v3439, %v3653
    %v3738 = vadd.f32 %v3440, %v3655
    %v3739 = vadd.f32 %v3441, %v3658
    %v3740 = vadd.f32 %v3442, %v3660
    %v3741 = vadd.f32 %v3443, %v3663
    %v3742 = vadd.f32 %v3444, %v3665
    %v3743 = vadd.f32 %v3445, %v3668
    %v3744 = vadd.f32 %v3446, %v3670
    %v3745 = vadd.f32 %v3447, %v3673
    %v3746 = vadd.f32 %v3448, %v3675
    %v3747 = vadd.f32 %v3449, %v3678
    %v3748 = vadd.f32 %v3450, %v3680
    %v3749 = vadd.f32 %v3451, %v3683
    %v3750 = vadd.f32 %v3452, %v3685
    %v3753 = vrot.slane %v67, 5
    %v3754 = vrot.slane %v3753, 4
    %v3755 = vrot.slane %v68, 5
    %v3756 = vsel %vm1726, %v3754, %v3755
    %v3757 = vrot.slane %v3755, 4
    %v3758 = vrot.slane %v69, 5
    %v3759 = vsel %vm1726, %v3757, %v3758
    %v3760 = vrot.slane %v121, 5
    %v3761 = vrot.slane %v3760, 4
    %v3762 = vrot.slane %v122, 5
    %v3763 = vsel %vm1726, %v3761, %v3762
    %v3764 = vrot.slane %v3762, 4
    %v3765 = vrot.slane %v123, 5
    %v3766 = vsel %vm1726, %v3764, %v3765
    %s3767 = scalar_lea.vmem %s1, 16
    %v3768 = vld [vmem:[%s3767] sm:$0x3]
    %v3769 = vunpack.c.l.b16 %v3756
    %v3770 = vunpack.c.l.b16 %v3759
    %v3771 = vunpack.c.l.b16 %v3763
    %v3772 = vunpack.c.l.b16 %v3766
    %v3773 = vpack.c.b16 %v3770, %v3769
    %v3774 = vpack.c.b16 %v3772, %v3771
    %v3776 = vsel %vm994, %v3773, 0
    %v3779 = vsel %vm994, %v3774, 0
    %v3782 = vsel %vm1091, %v3768, 0
    %3784 = vmatpush.bf16.msra.mxu0 0
    %3785 = vmatpush.bf16.msra.mxu0 0
    %3786 = vmatpush.bf16.msra.mxu0 0
    %3787 = vmatpush.bf16.msra.mxu0 0
    %3788 = vmatpush.bf16.msra.mxu0 0
    %3789 = vmatpush.bf16.msra.mxu0 0
    %3790 = vmatpush.bf16.msra.mxu0 0
    %3791 = vmatpush.bf16.msra.mxu0 %v3782
    %3792 = vmatmul.bf16.gmra.mxu0 %v2056
    %v3793 = vpop.f32.mrf.mxu0
    %v3794 = vadd.f32 0.0, %v3793
    %v3795 = vpop.f32.mrf.mxu0
    %v3796 = vadd.f32 0.0, %v3795
    %3797 = vmatmul.bf16.gmra.mxu0 %v2059
    %v3798 = vpop.f32.mrf.mxu0
    %v3799 = vadd.f32 0.0, %v3798
    %v3800 = vpop.f32.mrf.mxu0
    %v3801 = vadd.f32 0.0, %v3800
    %3802 = vmatmul.bf16.gmra.mxu0 %v2062
    %v3803 = vpop.f32.mrf.mxu0
    %v3804 = vadd.f32 0.0, %v3803
    %v3805 = vpop.f32.mrf.mxu0
    %v3806 = vadd.f32 0.0, %v3805
    %3807 = vmatmul.bf16.gmra.mxu0 %v2065
    %v3808 = vpop.f32.mrf.mxu0
    %v3809 = vadd.f32 0.0, %v3808
    %v3810 = vpop.f32.mrf.mxu0
    %v3811 = vadd.f32 0.0, %v3810
    %3812 = vmatmul.bf16.gmra.mxu0 %v2068
    %v3813 = vpop.f32.mrf.mxu0
    %v3814 = vadd.f32 0.0, %v3813
    %v3815 = vpop.f32.mrf.mxu0
    %v3816 = vadd.f32 0.0, %v3815
    %3817 = vmatmul.bf16.gmra.mxu0 %v2071
    %v3818 = vpop.f32.mrf.mxu0
    %v3819 = vadd.f32 0.0, %v3818
    %v3820 = vpop.f32.mrf.mxu0
    %v3821 = vadd.f32 0.0, %v3820
    %3822 = vmatmul.bf16.gmra.mxu0 %v2074
    %v3823 = vpop.f32.mrf.mxu0
    %v3824 = vadd.f32 0.0, %v3823
    %v3825 = vpop.f32.mrf.mxu0
    %v3826 = vadd.f32 0.0, %v3825
    %3827 = vmatmul.bf16.gmra.mxu0 %v2077
    %v3828 = vpop.f32.mrf.mxu0
    %v3829 = vadd.f32 0.0, %v3828
    %v3830 = vpop.f32.mrf.mxu0
    %v3831 = vadd.f32 0.0, %v3830
    %3832 = vmatmul.bf16.gmra.mxu0 %v2080
    %v3833 = vpop.f32.mrf.mxu0
    %v3834 = vadd.f32 0.0, %v3833
    %v3835 = vpop.f32.mrf.mxu0
    %v3836 = vadd.f32 0.0, %v3835
    %3837 = vmatmul.bf16.gmra.mxu0 %v2083
    %v3838 = vpop.f32.mrf.mxu0
    %v3839 = vadd.f32 0.0, %v3838
    %v3840 = vpop.f32.mrf.mxu0
    %v3841 = vadd.f32 0.0, %v3840
    %3842 = vmatmul.bf16.gmra.mxu0 %v2086
    %v3843 = vpop.f32.mrf.mxu0
    %v3844 = vadd.f32 0.0, %v3843
    %v3845 = vpop.f32.mrf.mxu0
    %v3846 = vadd.f32 0.0, %v3845
    %3847 = vmatmul.bf16.gmra.mxu0 %v2089
    %v3848 = vpop.f32.mrf.mxu0
    %v3849 = vadd.f32 0.0, %v3848
    %v3850 = vpop.f32.mrf.mxu0
    %v3851 = vadd.f32 0.0, %v3850
    %3852 = vmatmul.bf16.gmra.mxu0 %v2092
    %v3853 = vpop.f32.mrf.mxu0
    %v3854 = vadd.f32 0.0, %v3853
    %v3855 = vpop.f32.mrf.mxu0
    %v3856 = vadd.f32 0.0, %v3855
    %3857 = vmatmul.bf16.gmra.mxu0 %v2095
    %v3858 = vpop.f32.mrf.mxu0
    %v3859 = vadd.f32 0.0, %v3858
    %v3860 = vpop.f32.mrf.mxu0
    %v3861 = vadd.f32 0.0, %v3860
    %3862 = vmatmul.bf16.gmra.mxu0 %v2958
    %v3863 = vpop.f32.mrf.mxu0
    %v3864 = vadd.f32 0.0, %v3863
    %v3865 = vpop.f32.mrf.mxu0
    %v3866 = vadd.f32 0.0, %v3865
    %3867 = vmatmul.bf16.gmra.mxu0 %v3776
    %v3868 = vpop.f32.mrf.mxu0
    %v3869 = vadd.f32 0.0, %v3868
    %v3870 = vpop.f32.mrf.mxu0
    %v3871 = vadd.f32 0.0, %v3870
    %3872 = vmatmul.bf16.gmra.mxu0 %v2104
    %v3873 = vpop.f32.mrf.mxu0
    %v3874 = vadd.f32 0.0, %v3873
    %v3875 = vpop.f32.mrf.mxu0
    %v3876 = vadd.f32 0.0, %v3875
    %3877 = vmatmul.bf16.gmra.mxu0 %v2107
    %v3878 = vpop.f32.mrf.mxu0
    %v3879 = vadd.f32 0.0, %v3878
    %v3880 = vpop.f32.mrf.mxu0
    %v3881 = vadd.f32 0.0, %v3880
    %3882 = vmatmul.bf16.gmra.mxu0 %v2110
    %v3883 = vpop.f32.mrf.mxu0
    %v3884 = vadd.f32 0.0, %v3883
    %v3885 = vpop.f32.mrf.mxu0
    %v3886 = vadd.f32 0.0, %v3885
    %3887 = vmatmul.bf16.gmra.mxu0 %v2113
    %v3888 = vpop.f32.mrf.mxu0
    %v3889 = vadd.f32 0.0, %v3888
    %v3890 = vpop.f32.mrf.mxu0
    %v3891 = vadd.f32 0.0, %v3890
    %3892 = vmatmul.bf16.gmra.mxu0 %v2116
    %v3893 = vpop.f32.mrf.mxu0
    %v3894 = vadd.f32 0.0, %v3893
    %v3895 = vpop.f32.mrf.mxu0
    %v3896 = vadd.f32 0.0, %v3895
    %3897 = vmatmul.bf16.gmra.mxu0 %v2119
    %v3898 = vpop.f32.mrf.mxu0
    %v3899 = vadd.f32 0.0, %v3898
    %v3900 = vpop.f32.mrf.mxu0
    %v3901 = vadd.f32 0.0, %v3900
    %3902 = vmatmul.bf16.gmra.mxu0 %v2122
    %v3903 = vpop.f32.mrf.mxu0
    %v3904 = vadd.f32 0.0, %v3903
    %v3905 = vpop.f32.mrf.mxu0
    %v3906 = vadd.f32 0.0, %v3905
    %3907 = vmatmul.bf16.gmra.mxu0 %v2125
    %v3908 = vpop.f32.mrf.mxu0
    %v3909 = vadd.f32 0.0, %v3908
    %v3910 = vpop.f32.mrf.mxu0
    %v3911 = vadd.f32 0.0, %v3910
    %3912 = vmatmul.bf16.gmra.mxu0 %v2128
    %v3913 = vpop.f32.mrf.mxu0
    %v3914 = vadd.f32 0.0, %v3913
    %v3915 = vpop.f32.mrf.mxu0
    %v3916 = vadd.f32 0.0, %v3915
    %3917 = vmatmul.bf16.gmra.mxu0 %v2131
    %v3918 = vpop.f32.mrf.mxu0
    %v3919 = vadd.f32 0.0, %v3918
    %v3920 = vpop.f32.mrf.mxu0
    %v3921 = vadd.f32 0.0, %v3920
    %3922 = vmatmul.bf16.gmra.mxu0 %v2134
    %v3923 = vpop.f32.mrf.mxu0
    %v3924 = vadd.f32 0.0, %v3923
    %v3925 = vpop.f32.mrf.mxu0
    %v3926 = vadd.f32 0.0, %v3925
    %3927 = vmatmul.bf16.gmra.mxu0 %v2137
    %v3928 = vpop.f32.mrf.mxu0
    %v3929 = vadd.f32 0.0, %v3928
    %v3930 = vpop.f32.mrf.mxu0
    %v3931 = vadd.f32 0.0, %v3930
    %3932 = vmatmul.bf16.gmra.mxu0 %v2140
    %v3933 = vpop.f32.mrf.mxu0
    %v3934 = vadd.f32 0.0, %v3933
    %v3935 = vpop.f32.mrf.mxu0
    %v3936 = vadd.f32 0.0, %v3935
    %3937 = vmatmul.bf16.gmra.mxu0 %v2143
    %v3938 = vpop.f32.mrf.mxu0
    %v3939 = vadd.f32 0.0, %v3938
    %v3940 = vpop.f32.mrf.mxu0
    %v3941 = vadd.f32 0.0, %v3940
    %3942 = vmatmul.bf16.gmra.mxu0 %v2961
    %v3943 = vpop.f32.mrf.mxu0
    %v3944 = vadd.f32 0.0, %v3943
    %v3945 = vpop.f32.mrf.mxu0
    %v3946 = vadd.f32 0.0, %v3945
    %3947 = vmatmul.bf16.gmra.mxu0 %v3779
    %v3948 = vpop.f32.mrf.mxu0
    %v3949 = vadd.f32 0.0, %v3948
    %v3950 = vpop.f32.mrf.mxu0
    %v3951 = vadd.f32 0.0, %v3950
    %3952 = vdwg.mxu0
    %v3953 = vadd.f32 %v3687, %v3794
    %v3954 = vadd.f32 %v3688, %v3796
    %v3955 = vadd.f32 %v3689, %v3799
    %v3956 = vadd.f32 %v3690, %v3801
    %v3957 = vadd.f32 %v3691, %v3804
    %v3958 = vadd.f32 %v3692, %v3806
    %v3959 = vadd.f32 %v3693, %v3809
    %v3960 = vadd.f32 %v3694, %v3811
    %v3961 = vadd.f32 %v3695, %v3814
    %v3962 = vadd.f32 %v3696, %v3816
    %v3963 = vadd.f32 %v3697, %v3819
    %v3964 = vadd.f32 %v3698, %v3821
    %v3965 = vadd.f32 %v3699, %v3824
    %v3966 = vadd.f32 %v3700, %v3826
    %v3967 = vadd.f32 %v3701, %v3829
    %v3968 = vadd.f32 %v3702, %v3831
    %v3969 = vadd.f32 %v3703, %v3834
    %v3970 = vadd.f32 %v3704, %v3836
    %v3971 = vadd.f32 %v3705, %v3839
    %v3972 = vadd.f32 %v3706, %v3841
    %v3973 = vadd.f32 %v3707, %v3844
    %v3974 = vadd.f32 %v3708, %v3846
    %v3975 = vadd.f32 %v3709, %v3849
    %v3976 = vadd.f32 %v3710, %v3851
    %v3977 = vadd.f32 %v3711, %v3854
    %v3978 = vadd.f32 %v3712, %v3856
    %v3979 = vadd.f32 %v3713, %v3859
    %v3980 = vadd.f32 %v3714, %v3861
    %v3981 = vadd.f32 %v3715, %v3864
    %v3982 = vadd.f32 %v3716, %v3866
    %v3983 = vadd.f32 %v3717, %v3869
    %v3984 = vadd.f32 %v3718, %v3871
    %v3985 = vadd.f32 %v3719, %v3874
    %v3986 = vadd.f32 %v3720, %v3876
    %v3987 = vadd.f32 %v3721, %v3879
    %v3988 = vadd.f32 %v3722, %v3881
    %v3989 = vadd.f32 %v3723, %v3884
    %v3990 = vadd.f32 %v3724, %v3886
    %v3991 = vadd.f32 %v3725, %v3889
    %v3992 = vadd.f32 %v3726, %v3891
    %v3993 = vadd.f32 %v3727, %v3894
    %v3994 = vadd.f32 %v3728, %v3896
    %v3995 = vadd.f32 %v3729, %v3899
    %v3996 = vadd.f32 %v3730, %v3901
    %v3997 = vadd.f32 %v3731, %v3904
    %v3998 = vadd.f32 %v3732, %v3906
    %v3999 = vadd.f32 %v3733, %v3909
    %v4000 = vadd.f32 %v3734, %v3911
    %v4001 = vadd.f32 %v3735, %v3914
    %v4002 = vadd.f32 %v3736, %v3916
    %v4003 = vadd.f32 %v3737, %v3919
    %v4004 = vadd.f32 %v3738, %v3921
    %v4005 = vadd.f32 %v3739, %v3924
    %v4006 = vadd.f32 %v3740, %v3926
    %v4007 = vadd.f32 %v3741, %v3929
    %v4008 = vadd.f32 %v3742, %v3931
    %v4009 = vadd.f32 %v3743, %v3934
    %v4010 = vadd.f32 %v3744, %v3936
    %v4011 = vadd.f32 %v3745, %v3939
    %v4012 = vadd.f32 %v3746, %v3941
    %v4013 = vadd.f32 %v3747, %v3944
    %v4014 = vadd.f32 %v3748, %v3946
    %v4015 = vadd.f32 %v3749, %v3949
    %v4016 = vadd.f32 %v3750, %v3951
    %v4017 = vld [vmem:[%s2] sm:$0x1]
    %v4019 = vperm.slane %v4017, 0
    %v4021 = vadd.f32 %v3953, %v4019
    %v4022 = vadd.f32 %v3954, %v4019
    %v4023 = vadd.f32 %v3955, %v4019
    %v4024 = vadd.f32 %v3956, %v4019
    %v4025 = vadd.f32 %v3957, %v4019
    %v4026 = vadd.f32 %v3958, %v4019
    %v4027 = vadd.f32 %v3959, %v4019
    %v4028 = vadd.f32 %v3960, %v4019
    %v4029 = vadd.f32 %v3961, %v4019
    %v4030 = vadd.f32 %v3962, %v4019
    %v4031 = vadd.f32 %v3963, %v4019
    %v4032 = vadd.f32 %v3964, %v4019
    %v4033 = vadd.f32 %v3965, %v4019
    %v4034 = vadd.f32 %v3966, %v4019
    %v4035 = vadd.f32 %v3967, %v4019
    %v4036 = vadd.f32 %v3968, %v4019
    %v4037 = vadd.f32 %v3969, %v4019
    %v4038 = vadd.f32 %v3970, %v4019
    %v4039 = vadd.f32 %v3971, %v4019
    %v4040 = vadd.f32 %v3972, %v4019
    %v4041 = vadd.f32 %v3973, %v4019
    %v4042 = vadd.f32 %v3974, %v4019
    %v4043 = vadd.f32 %v3975, %v4019
    %v4044 = vadd.f32 %v3976, %v4019
    %v4045 = vadd.f32 %v3977, %v4019
    %v4046 = vadd.f32 %v3978, %v4019
    %v4047 = vadd.f32 %v3979, %v4019
    %v4048 = vadd.f32 %v3980, %v4019
    %v4049 = vadd.f32 %v3981, %v4019
    %v4050 = vadd.f32 %v3982, %v4019
    %v4051 = vadd.f32 %v3983, %v4019
    %v4052 = vadd.f32 %v3984, %v4019
    %v4053 = vadd.f32 %v3985, %v4019
    %v4054 = vadd.f32 %v3986, %v4019
    %v4055 = vadd.f32 %v3987, %v4019
    %v4056 = vadd.f32 %v3988, %v4019
    %v4057 = vadd.f32 %v3989, %v4019
    %v4058 = vadd.f32 %v3990, %v4019
    %v4059 = vadd.f32 %v3991, %v4019
    %v4060 = vadd.f32 %v3992, %v4019
    %v4061 = vadd.f32 %v3993, %v4019
    %v4062 = vadd.f32 %v3994, %v4019
    %v4063 = vadd.f32 %v3995, %v4019
    %v4064 = vadd.f32 %v3996, %v4019
    %v4065 = vadd.f32 %v3997, %v4019
    %v4066 = vadd.f32 %v3998, %v4019
    %v4067 = vadd.f32 %v3999, %v4019
    %v4068 = vadd.f32 %v4000, %v4019
    %v4069 = vadd.f32 %v4001, %v4019
    %v4070 = vadd.f32 %v4002, %v4019
    %v4071 = vadd.f32 %v4003, %v4019
    %v4072 = vadd.f32 %v4004, %v4019
    %v4073 = vadd.f32 %v4005, %v4019
    %v4074 = vadd.f32 %v4006, %v4019
    %v4075 = vadd.f32 %v4007, %v4019
    %v4076 = vadd.f32 %v4008, %v4019
    %v4077 = vadd.f32 %v4009, %v4019
    %v4078 = vadd.f32 %v4010, %v4019
    %v4079 = vadd.f32 %v4011, %v4019
    %v4080 = vadd.f32 %v4012, %v4019
    %v4081 = vadd.f32 %v4013, %v4019
    %v4082 = vadd.f32 %v4014, %v4019
    %v4083 = vadd.f32 %v4015, %v4019
    %v4084 = vadd.f32 %v4016, %v4019
    %4085 = vst [vmem:[#allocation2] sm:$0xff] %v4021
    %4086 = vst [vmem:[#allocation2 + $0x8] sm:$0xff] %v4022
    %4087 = vst [vmem:[#allocation2 + $0x10] sm:$0xff] %v4023
    %4088 = vst [vmem:[#allocation2 + $0x18] sm:$0xff] %v4024
    %4089 = vst [vmem:[#allocation2 + $0x20] sm:$0xff] %v4025
    %4090 = vst [vmem:[#allocation2 + $0x28] sm:$0xff] %v4026
    %4091 = vst [vmem:[#allocation2 + $0x30] sm:$0xff] %v4027
    %4092 = vst [vmem:[#allocation2 + $0x38] sm:$0xff] %v4028
    %4093 = vst [vmem:[#allocation2 + $0x40] sm:$0xff] %v4029
    %4094 = vst [vmem:[#allocation2 + $0x48] sm:$0xff] %v4030
    %4095 = vst [vmem:[#allocation2 + $0x50] sm:$0xff] %v4031
    %4096 = vst [vmem:[#allocation2 + $0x58] sm:$0xff] %v4032
    %4097 = vst [vmem:[#allocation2 + $0x60] sm:$0xff] %v4033
    %4098 = vst [vmem:[#allocation2 + $0x68] sm:$0xff] %v4034
    %4099 = vst [vmem:[#allocation2 + $0x70] sm:$0xff] %v4035
    %4100 = vst [vmem:[#allocation2 + $0x78] sm:$0xff] %v4036
    %4101 = vst [vmem:[#allocation2 + $0x80] sm:$0xff] %v4037
    %4102 = vst [vmem:[#allocation2 + $0x88] sm:$0xff] %v4038
    %4103 = vst [vmem:[#allocation2 + $0x90] sm:$0xff] %v4039
    %4104 = vst [vmem:[#allocation2 + $0x98] sm:$0xff] %v4040
    %4105 = vst [vmem:[#allocation2 + $0xa0] sm:$0xff] %v4041
    %4106 = vst [vmem:[#allocation2 + $0xa8] sm:$0xff] %v4042
    %4107 = vst [vmem:[#allocation2 + $0xb0] sm:$0xff] %v4043
    %4108 = vst [vmem:[#allocation2 + $0xb8] sm:$0xff] %v4044
    %4109 = vst [vmem:[#allocation2 + $0xc0] sm:$0xff] %v4045
    %4110 = vst [vmem:[#allocation2 + $0xc8] sm:$0xff] %v4046
    %4111 = vst [vmem:[#allocation2 + $0xd0] sm:$0xff] %v4047
    %4112 = vst [vmem:[#allocation2 + $0xd8] sm:$0xff] %v4048
    %4113 = vst [vmem:[#allocation2 + $0xe0] sm:$0xff] %v4049
    %4114 = vst [vmem:[#allocation2 + $0xe8] sm:$0xff] %v4050
    %4115 = vst [vmem:[#allocation2 + $0xf0] sm:$0xff] %v4051
    %4116 = vst [vmem:[#allocation2 + $0xf8] sm:$0xff] %v4052
    %4117 = vst [vmem:[#allocation2 + $0x100] sm:$0xff] %v4053
    %4118 = vst [vmem:[#allocation2 + $0x108] sm:$0xff] %v4054
    %4119 = vst [vmem:[#allocation2 + $0x110] sm:$0xff] %v4055
    %4120 = vst [vmem:[#allocation2 + $0x118] sm:$0xff] %v4056
    %4121 = vst [vmem:[#allocation2 + $0x120] sm:$0xff] %v4057
    %4122 = vst [vmem:[#allocation2 + $0x128] sm:$0xff] %v4058
    %4123 = vst [vmem:[#allocation2 + $0x130] sm:$0xff] %v4059
    %4124 = vst [vmem:[#allocation2 + $0x138] sm:$0xff] %v4060
    %4125 = vst [vmem:[#allocation2 + $0x140] sm:$0xff] %v4061
    %4126 = vst [vmem:[#allocation2 + $0x148] sm:$0xff] %v4062
    %4127 = vst [vmem:[#allocation2 + $0x150] sm:$0xff] %v4063
    %4128 = vst [vmem:[#allocation2 + $0x158] sm:$0xff] %v4064
    %4129 = vst [vmem:[#allocation2 + $0x160] sm:$0xff] %v4065
    %4130 = vst [vmem:[#allocation2 + $0x168] sm:$0xff] %v4066
    %4131 = vst [vmem:[#allocation2 + $0x170] sm:$0xff] %v4067
    %4132 = vst [vmem:[#allocation2 + $0x178] sm:$0xff] %v4068
    %4133 = vst [vmem:[#allocation2 + $0x180] sm:$0xff] %v4069
    %4134 = vst [vmem:[#allocation2 + $0x188] sm:$0xff] %v4070
    %4135 = vst [vmem:[#allocation2 + $0x190] sm:$0xff] %v4071
    %4136 = vst [vmem:[#allocation2 + $0x198] sm:$0xff] %v4072
    %4137 = vst [vmem:[#allocation2 + $0x1a0] sm:$0xff] %v4073
    %4138 = vst [vmem:[#allocation2 + $0x1a8] sm:$0xff] %v4074
    %4139 = vst [vmem:[#allocation2 + $0x1b0] sm:$0xff] %v4075
    %4140 = vst [vmem:[#allocation2 + $0x1b8] sm:$0xff] %v4076
    %4141 = vst [vmem:[#allocation2 + $0x1c0] sm:$0xff] %v4077
    %4142 = vst [vmem:[#allocation2 + $0x1c8] sm:$0xff] %v4078
    %4143 = vst [vmem:[#allocation2 + $0x1d0] sm:$0xff] %v4079
    %4144 = vst [vmem:[#allocation2 + $0x1d8] sm:$0xff] %v4080
    %4145 = vst [vmem:[#allocation2 + $0x1e0] sm:$0xff] %v4081
    %4146 = vst [vmem:[#allocation2 + $0x1e8] sm:$0xff] %v4082
    %4147 = vst [vmem:[#allocation2 + $0x1f0] sm:$0xff] %v4083
    %4148 = vst [vmem:[#allocation2 + $0x1f8] sm:$0xff] %v4084
    // Predicated region
    $region14: #{tpu_custom_call.1} parent=1 // pred_check
      _
    $region15: #{tpu_custom_call.1} parent=1 // pred_check_branch
      %4150 = sbr.rel (0) target = $region17
    $region16: #{tpu_custom_call.1} parent=1 // pred_region
      %4152 = vsyncadd [#allocation3], 0
      %s4153 = sshll.u32 [#allocation2], 4
      %s4154 = int_to_ptr.vmem [resolvable:$true] %s4153
      %s4155 = sshll.u32 %s3, 4
      %s4156 = int_to_ptr.hbm [resolvable:$true] %s4155
      %4161 = dma.vmem_to_hbm [thread:$0]  %s4154, 8192, %s4156, [#allocation3], 128, 128, 8
    $region17: #{tpu_custom_call.1} parent=1 // pred_fallthru
      _
    // Predicated region
    $region18: #{tpu_custom_call.1} parent=1 // pred_check
      _
    $region19: #{tpu_custom_call.1} parent=1 // pred_check_branch
      %4163 = sbr.rel (0) target = $region21
    $region20: #{tpu_custom_call.1} parent=1 // pred_region
      %4165 = dma.done [#allocation3], 8192
    $region21: #{tpu_custom_call.1} parent=1 // pred_fallthru
      _
    %4166 = vsyncpa [#allocation3], 1

</llo_original>
